<compile_context>
chip_gen: v5e
topology: v5e:2x2
jax: 0.10.0
libtpu: 0.0.40
codegen_flags: <defaults>
</compile_context>

<pallas_src>
import numpy as np
import jax
import jax.numpy as jnp
from jax.experimental import pallas as pl
from jax.experimental.pallas import tpu as pltpu

EPS = 1e-5          # nn.BatchNorm2d default eps
NEG_SLOPE = 0.2     # nn.LeakyReLU(0.2)
PAD_L = 8           # left zero margin in the padded scratch (sublane-aligned store)


def pool_windows(in_size: int, out_size: int):
    """Static adaptive-avg-pool windows along one axis (PyTorch semantics)."""
    wins = []
    for i in range(out_size):
        s = (i * in_size) // out_size
        e = -(-((i + 1) * in_size) // out_size)  # ceil
        wins.append((s, e))
    return wins


def adaptive_pool_matrix(in_size: int, out_size: int) -> np.ndarray:
    """Row-stochastic pooling matrix (used only by the pure-JAX reference)."""
    m = np.zeros((out_size, in_size), np.float32)
    for i, (s, e) in enumerate(pool_windows(in_size, out_size)):
        m[i, s:e] = 1.0 / (e - s)
    return m


def make_cnn_block_kernel(H, W, Cin, Cout, outH, outW, apply_input_act):
    """Builds the per-block kernel.  Grid is (N,), one sample per step.

    Refs:
      x_ref      : (1, H, W, Cin) f32  raw (pre-BN) pooled output of prev block
      sc_ref     : (2, Cin)       f32  prev block's BN [scale; shift] (unused
                                       for the first block)
      w_ref      : (9, Cin, Cout) bf16 conv taps, t = 3*dy + dx
      pooled_ref : (1, outH, outW, Cout) f32  pooled RAW conv output (pre-BN)
      s1_ref     : (1, 1, Cout)   f32  per-channel sum of conv output
      s2_ref     : (1, 1, Cout)   f32  per-channel sum of squares
      xpad_ref   : VMEM scratch, zero-padded input
      wbuf_ref   : VMEM scratch, W-pooled intermediate
    """
    h_win = pool_windows(H, outH)
    w_win = pool_windows(W, outW)

    def kernel(x_ref, sc_ref, w_ref, pooled_ref, s1_ref, s2_ref,
               xpad_ref, wbuf_ref):
        # ---- fold previous block's BatchNorm affine + LeakyReLU into the input
        x = x_ref[...]
        if apply_input_act:
            sc = sc_ref[...]                                    # (2, Cin)
            scale = sc[0:1, :].reshape(1, 1, 1, Cin)
            shift = sc[1:2, :].reshape(1, 1, 1, Cin)
            x = x * scale + shift
            x = jnp.where(x > 0.0, x, NEG_SLOPE * x)

        # ---- zero-pad (pad=1) into a VMEM scratch; interior store is aligned
        xpad_ref[...] = jnp.zeros_like(xpad_ref)
        xpad_ref[:, 1:H + 1, PAD_L:PAD_L + W, :] = x

        # ---- Conv2d 3x3: 3 dx column bands (sublane-offset loads), 3 cheap dy
        #      row slices each; bf16 operands, f32 accumulation on the MXU.
        #      Conv bias omitted: BN's batch-mean subtraction cancels it.
        acc = jnp.zeros((H * W, Cout), jnp.float32)
        for dx in range(3):
            c0 = PAD_L - 1 + dx
            band = xpad_ref[:, :, c0:c0 + W, :].astype(jnp.bfloat16)  # (1,H+2,W,Cin)
            for dy in range(3):
                xs = band[:, dy:dy + H, :, :].reshape(H * W, Cin)
                acc = acc + jnp.dot(xs, w_ref[3 * dy + dx],
                                    preferred_element_type=jnp.float32)

        # ---- fused BatchNorm batch statistics (per-channel sum, sum of squares)
        s1_ref[...] = jnp.sum(acc, axis=0, keepdims=True).reshape(1, 1, Cout)
        s2_ref[...] = jnp.sum(acc * acc, axis=0, keepdims=True).reshape(1, 1, Cout)

        # ---- separable AdaptiveAvgPool2d: windowed means over W, then over H.
        #      BN affine is per-channel and pooling is row-stochastic, so the
        #      affine (+LeakyReLU) is applied after pooling, downstream.
        y4 = acc.reshape(1, H, W, Cout)
        for ow in range(outW):
            ws, we = w_win[ow]
            wbuf_ref[ow:ow + 1, :, :] = (
                jnp.sum(y4[:, :, ws:we, :], axis=2) * (1.0 / (we - ws)))
        for oh in range(outH):
            hs, he = h_win[oh]
            v = jnp.sum(wbuf_ref[:, hs:he, :], axis=1) * (1.0 / (he - hs))
            pooled_ref[:, oh:oh + 1, :, :] = v.reshape(1, 1, outW, Cout)

    return kernel


def run_cnn_block(x, p, pool_size, in_scale, in_shift, first):
    """x: (N, H, W, Cin) NHWC f32 (raw pre-BN pooled output of previous block).

    Returns (pooled_raw, scale, shift): pooled_raw is this block's pooled conv
    output pre-BN; scale/shift are this block's BN affine, to be applied
    (together with LeakyReLU) by the next block's kernel / the final glue.
    """
    N, H, W, Cin = x.shape
    Cout = p["w"].shape[-1]
    outH, outW = pool_size

    w = p["w"].astype(jnp.bfloat16)                            # (9, Cin, Cout)
    if first:
        sc = jnp.zeros((2, Cin), jnp.float32)                  # unused
    else:
        sc = jnp.stack([in_scale, in_shift], axis=0).astype(jnp.float32)

    kernel = make_cnn_block_kernel(H, W, Cin, Cout, outH, outW,
                                   apply_input_act=not first)

    pooled, s1, s2 = pl.pallas_call(
        kernel,
        out_shape=(
            jax.ShapeDtypeStruct((N, outH, outW, Cout), jnp.float32),
            jax.ShapeDtypeStruct((N, 1, Cout), jnp.float32),
            jax.ShapeDtypeStruct((N, 1, Cout), jnp.float32),
        ),
        grid=(N,),
        in_specs=[
            pl.BlockSpec((1, H, W, Cin), lambda n: (n, 0, 0, 0)),
            pl.BlockSpec((2, Cin), lambda n: (0, 0)),
            pl.BlockSpec((9, Cin, Cout), lambda n: (0, 0, 0)),
        ],
        out_specs=(
            pl.BlockSpec((1, outH, outW, Cout), lambda n: (n, 0, 0, 0)),
            pl.BlockSpec((1, 1, Cout), lambda n: (n, 0, 0)),
            pl.BlockSpec((1, 1, Cout), lambda n: (n, 0, 0)),
        ),
        scratch_shapes=[
            pltpu.VMEM((1, H + 2, W + 2 * PAD_L, Cin), jnp.float32),  # padded in
            pltpu.VMEM((outW, H, Cout), jnp.float32),                 # W-pooled
        ],
        compiler_params=pltpu.CompilerParams(
            dimension_semantics=("parallel",)),
    )(x, sc, w)

    # Tiny cross-batch BN statistics reduction + affine precompute (plain JAX,
    # O(Cout) work).
    count = float(N * H * W)
    mean = jnp.sum(s1, axis=0).reshape(Cout) / count
    var = jnp.sum(s2, axis=0).reshape(Cout) / count - mean * mean
    scale = p["gamma"] * jax.lax.rsqrt(var + EPS)
    shift = p["beta"] - mean * scale
    return pooled, scale, shift


def vanilla_cnn_forward(x_nchw, params, pool_size):
    """PyTorch-layout entry point: NCHW in, NCHW out."""
    x = jnp.transpose(x_nchw, (0, 2, 3, 1)).astype(jnp.float32)   # NCHW -> NHWC
    scale = shift = None
    for bi, p in enumerate(params):
        x, scale, shift = run_cnn_block(x, p, pool_size, scale, shift,
                                        first=(bi == 0))
    # Final block's BN affine + LeakyReLU on the (tiny) pooled output.
    y = x * scale + shift
    y = jnp.where(y > 0, y, NEG_SLOPE * y)
    return jnp.transpose(y, (0, 3, 1, 2))                          # NHWC -> NCHW


# ------------------- pure-JAX reference (for the correctness check) -------------------
def ref_cnn_block(x, w9, b, gamma, beta, ph, pw):
    cin, cout = w9.shape[1], w9.shape[2]
    k = w9.reshape(3, 3, cin, cout)
    # Same bf16 operand rounding as the kernel (f32 accumulation on the MXU).
    conv = jax.lax.conv_general_dilated(
        x.astype(jnp.bfloat16), k.astype(jnp.bfloat16),
        window_strides=(1, 1), padding="SAME",
        dimension_numbers=("NHWC", "HWIO", "NHWC"),
        preferred_element_type=jnp.float32) + b
    mean = conv.mean(axis=(0, 1, 2), keepdims=True)
    var = ((conv - mean) ** 2).mean(axis=(0, 1, 2), keepdims=True)
    y = (conv - mean) * jax.lax.rsqrt(var + EPS) * gamma + beta
    y = jnp.einsum("oh,nhwc->nowc", ph, y, precision=jax.lax.Precision.HIGHEST)
    y = jnp.einsum("qw,nowc->noqc", pw, y, precision=jax.lax.Precision.HIGHEST)
    return jnp.where(y > 0, y, NEG_SLOPE * y)


if __name__ == "__main__":
    # vanilla_cnn(in_channels=4, num_features=64, between_blocks=2) ->
    # channel chain 4 -> 64 -> 128 -> 128 -> 64 -> 1.
    N, Cin0, Hin, Win = 2, 4, 16, 16
    nf = 64
    pool_size = (8, 8)   # cnn_block pooling_size (default 1200x1200 kept small)
    channels = [(Cin0, nf), (nf, 2 * nf), (2 * nf, 2 * nf), (2 * nf, nf), (nf, 1)]

    key = jax.random.PRNGKey(0)
    params = []
    for (cin, cout) in channels:
        key, k1, k2, k3, k4 = jax.random.split(key, 5)
        params.append(dict(
            w=jax.random.normal(k1, (9, cin, cout), jnp.float32) / np.sqrt(9.0 * cin),
            b=0.1 * jax.random.normal(k2, (cout,), jnp.float32),   # cancelled by BN
            gamma=1.0 + 0.1 * jax.random.normal(k3, (cout,), jnp.float32),
            beta=0.1 * jax.random.normal(k4, (cout,), jnp.float32),
        ))
    key, kx = jax.random.split(key)
    x = jax.random.normal(kx, (N, Cin0, Hin, Win), jnp.float32)    # NCHW like PyTorch

    out = jax.block_until_ready(vanilla_cnn_forward(x, params, pool_size))
    assert out.shape == (N, 1, pool_size[0], pool_size[1]), out.shape

    # ---- reference check ----
    xr = jnp.transpose(x, (0, 2, 3, 1))
    for p in params:
        H, W = xr.shape[1], xr.shape[2]
        ph = jnp.asarray(adaptive_pool_matrix(H, pool_size[0]))
        pw = jnp.asarray(adaptive_pool_matrix(W, pool_size[1]))
        xr = ref_cnn_block(xr, p["w"], p["b"], p["gamma"], p["beta"], ph, pw)
    ref = jnp.transpose(xr, (0, 3, 1, 2))

    err = float(jnp.max(jnp.abs(out - ref)))
    assert jnp.allclose(out, ref, atol=1e-2, rtol=1e-2), f"max abs err {err}"
    print("KERNEL_OK")
</pallas_src>

<mosaic_0001>
module attributes {stable_mosaic.version = 11 : i64} {
  func.func @kernel(%arg0: i32, %arg1: memref<1x16x16x4xf32, #tpu.memory_space<vmem>>, %arg2: memref<2x4xf32, #tpu.memory_space<vmem>>, %arg3: memref<9x4x64xbf16, #tpu.memory_space<vmem>>, %arg4: memref<1x8x8x64xf32, #tpu.memory_space<vmem>>, %arg5: memref<1x1x64xf32, #tpu.memory_space<vmem>>, %arg6: memref<1x1x64xf32, #tpu.memory_space<vmem>>, %arg7: memref<1x18x32x4xf32, #tpu.memory_space<vmem>>, %arg8: memref<8x16x64xf32, #tpu.memory_space<vmem>>) attributes {dimension_semantics = [#tpu.dimension_semantics<parallel>], iteration_bounds = array<i64: 2>, scalar_prefetch = 0 : i64, scratch_operands = 2 : i64, tpu.core_type = #tpu.core_type<tc>, window_params = [{transform_indices = @transform_0, window_bounds = array<i64: 1, 16, 16, 4>}, {pipeline_mode = #tpu.pipeline_mode<synchronous>, transform_indices = @transform_1, window_bounds = array<i64: 2, 4>}, {pipeline_mode = #tpu.pipeline_mode<synchronous>, transform_indices = @transform_2, window_bounds = array<i64: 9, 4, 64>}, {transform_indices = @transform_3, window_bounds = array<i64: 1, 8, 8, 64>}, {transform_indices = @transform_4, window_bounds = array<i64: 1, 1, 64>}, {transform_indices = @transform_5, window_bounds = array<i64: 1, 1, 64>}]} {
    %c0 = arith.constant 0 : index
    %c0_0 = arith.constant 0 : index
    %c0_1 = arith.constant 0 : index
    %c0_2 = arith.constant 0 : index
    %0 = vector.load %arg1[%c0, %c0_0, %c0_1, %c0_2] : memref<1x16x16x4xf32, #tpu.memory_space<vmem>>, vector<1x16x16x4xf32>
    %cst = arith.constant 0.000000e+00 : f32
    %1 = vector.broadcast %cst : f32 to vector<1x18x32x4xf32>
    %c0_3 = arith.constant 0 : index
    %c0_4 = arith.constant 0 : index
    %c0_5 = arith.constant 0 : index
    %c0_6 = arith.constant 0 : index
    %2 = vector.load %arg7[%c0_3, %c0_4, %c0_5, %c0_6] : memref<1x18x32x4xf32, #tpu.memory_space<vmem>>, vector<1x18x32x4xf32>
    tpu.vector_store %arg7[%c0_3, %c0_4, %c0_5, %c0_6], %1 {strides = array<i32>} : memref<1x18x32x4xf32, #tpu.memory_space<vmem>>, vector<1x18x32x4xf32>,
    %c0_7 = arith.constant 0 : index
    %c1 = arith.constant 1 : index
    %c8 = arith.constant 8 : index
    %c0_8 = arith.constant 0 : index
    %3 = vector.load %arg7[%c0_7, %c1, %c8, %c0_8] : memref<1x18x32x4xf32, #tpu.memory_space<vmem>>, vector<1x16x16x4xf32>
    tpu.vector_store %arg7[%c0_7, %c1, %c8, %c0_8], %0 {strides = array<i32>} : memref<1x18x32x4xf32, #tpu.memory_space<vmem>>, vector<1x16x16x4xf32>,
    %cst_9 = arith.constant 0.000000e+00 : f32
    %4 = vector.broadcast %cst_9 : f32 to vector<256x64xf32>
    %c0_10 = arith.constant 0 : index
    %c0_11 = arith.constant 0 : index
    %c7 = arith.constant 7 : index
    %c0_12 = arith.constant 0 : index
    %5 = vector.load %arg7[%c0_10, %c0_11, %c7, %c0_12] : memref<1x18x32x4xf32, #tpu.memory_space<vmem>>, vector<1x18x16x4xf32>
    %6 = arith.truncf %5 : vector<1x18x16x4xf32> to vector<1x18x16x4xbf16>
    %7 = vector.extract_strided_slice %6 {offsets = [0, 0, 0, 0], sizes = [1, 16, 16, 4], strides = [1, 1, 1, 1]} : vector<1x18x16x4xbf16> to vector<1x16x16x4xbf16>
    %8 = vector.shape_cast %7 : vector<1x16x16x4xbf16> to vector<256x4xbf16>
    %c0_13 = arith.constant 0 : index
    %c0_14 = arith.constant 0 : index
    %c0_15 = arith.constant 0 : index
    %9 = vector.load %arg3[%c0_13, %c0_14, %c0_15] : memref<9x4x64xbf16, #tpu.memory_space<vmem>>, vector<1x4x64xbf16>
    %10 = vector.shape_cast %9 : vector<1x4x64xbf16> to vector<4x64xbf16>
    %cst_16 = arith.constant dense<0.000000e+00> : vector<256x64xf32>
    %11 = tpu.matmul %8, %10, %cst_16 {dimension_numbers = #tpu.dot_dimension_numbers<[1], [0], [0], [1], [0, 0, 1, 1], [], []>} : vector<256x4xbf16>, vector<4x64xbf16>, vector<256x64xf32> -> vector<256x64xf32>
    %12 = arith.addf %4, %11 : vector<256x64xf32>
    %13 = vector.extract_strided_slice %6 {offsets = [0, 1, 0, 0], sizes = [1, 16, 16, 4], strides = [1, 1, 1, 1]} : vector<1x18x16x4xbf16> to vector<1x16x16x4xbf16>
    %14 = vector.shape_cast %13 : vector<1x16x16x4xbf16> to vector<256x4xbf16>
    %c3 = arith.constant 3 : index
    %c0_17 = arith.constant 0 : index
    %c0_18 = arith.constant 0 : index
    %15 = vector.load %arg3[%c3, %c0_17, %c0_18] : memref<9x4x64xbf16, #tpu.memory_space<vmem>>, vector<1x4x64xbf16>
    %16 = vector.shape_cast %15 : vector<1x4x64xbf16> to vector<4x64xbf16>
    %cst_19 = arith.constant dense<0.000000e+00> : vector<256x64xf32>
    %17 = tpu.matmul %14, %16, %cst_19 {dimension_numbers = #tpu.dot_dimension_numbers<[1], [0], [0], [1], [0, 0, 1, 1], [], []>} : vector<256x4xbf16>, vector<4x64xbf16>, vector<256x64xf32> -> vector<256x64xf32>
    %18 = arith.addf %12, %17 : vector<256x64xf32>
    %19 = vector.extract_strided_slice %6 {offsets = [0, 2, 0, 0], sizes = [1, 16, 16, 4], strides = [1, 1, 1, 1]} : vector<1x18x16x4xbf16> to vector<1x16x16x4xbf16>
    %20 = vector.shape_cast %19 : vector<1x16x16x4xbf16> to vector<256x4xbf16>
    %c6 = arith.constant 6 : index
    %c0_20 = arith.constant 0 : index
    %c0_21 = arith.constant 0 : index
    %21 = vector.load %arg3[%c6, %c0_20, %c0_21] : memref<9x4x64xbf16, #tpu.memory_space<vmem>>, vector<1x4x64xbf16>
    %22 = vector.shape_cast %21 : vector<1x4x64xbf16> to vector<4x64xbf16>
    %cst_22 = arith.constant dense<0.000000e+00> : vector<256x64xf32>
    %23 = tpu.matmul %20, %22, %cst_22 {dimension_numbers = #tpu.dot_dimension_numbers<[1], [0], [0], [1], [0, 0, 1, 1], [], []>} : vector<256x4xbf16>, vector<4x64xbf16>, vector<256x64xf32> -> vector<256x64xf32>
    %24 = arith.addf %18, %23 : vector<256x64xf32>
    %c0_23 = arith.constant 0 : index
    %c0_24 = arith.constant 0 : index
    %c8_25 = arith.constant 8 : index
    %c0_26 = arith.constant 0 : index
    %25 = vector.load %arg7[%c0_23, %c0_24, %c8_25, %c0_26] : memref<1x18x32x4xf32, #tpu.memory_space<vmem>>, vector<1x18x16x4xf32>
    %26 = arith.truncf %25 : vector<1x18x16x4xf32> to vector<1x18x16x4xbf16>
    %27 = vector.extract_strided_slice %26 {offsets = [0, 0, 0, 0], sizes = [1, 16, 16, 4], strides = [1, 1, 1, 1]} : vector<1x18x16x4xbf16> to vector<1x16x16x4xbf16>
    %28 = vector.shape_cast %27 : vector<1x16x16x4xbf16> to vector<256x4xbf16>
    %c1_27 = arith.constant 1 : index
    %c0_28 = arith.constant 0 : index
    %c0_29 = arith.constant 0 : index
    %29 = vector.load %arg3[%c1_27, %c0_28, %c0_29] : memref<9x4x64xbf16, #tpu.memory_space<vmem>>, vector<1x4x64xbf16>
    %30 = vector.shape_cast %29 : vector<1x4x64xbf16> to vector<4x64xbf16>
    %cst_30 = arith.constant dense<0.000000e+00> : vector<256x64xf32>
    %31 = tpu.matmul %28, %30, %cst_30 {dimension_numbers = #tpu.dot_dimension_numbers<[1], [0], [0], [1], [0, 0, 1, 1], [], []>} : vector<256x4xbf16>, vector<4x64xbf16>, vector<256x64xf32> -> vector<256x64xf32>
    %32 = arith.addf %24, %31 : vector<256x64xf32>
    %33 = vector.extract_strided_slice %26 {offsets = [0, 1, 0, 0], sizes = [1, 16, 16, 4], strides = [1, 1, 1, 1]} : vector<1x18x16x4xbf16> to vector<1x16x16x4xbf16>
    %34 = vector.shape_cast %33 : vector<1x16x16x4xbf16> to vector<256x4xbf16>
    %c4 = arith.constant 4 : index
    %c0_31 = arith.constant 0 : index
    %c0_32 = arith.constant 0 : index
    %35 = vector.load %arg3[%c4, %c0_31, %c0_32] : memref<9x4x64xbf16, #tpu.memory_space<vmem>>, vector<1x4x64xbf16>
    %36 = vector.shape_cast %35 : vector<1x4x64xbf16> to vector<4x64xbf16>
    %cst_33 = arith.constant dense<0.000000e+00> : vector<256x64xf32>
    %37 = tpu.matmul %34, %36, %cst_33 {dimension_numbers = #tpu.dot_dimension_numbers<[1], [0], [0], [1], [0, 0, 1, 1], [], []>} : vector<256x4xbf16>, vector<4x64xbf16>, vector<256x64xf32> -> vector<256x64xf32>
    %38 = arith.addf %32, %37 : vector<256x64xf32>
    %39 = vector.extract_strided_slice %26 {offsets = [0, 2, 0, 0], sizes = [1, 16, 16, 4], strides = [1, 1, 1, 1]} : vector<1x18x16x4xbf16> to vector<1x16x16x4xbf16>
    %40 = vector.shape_cast %39 : vector<1x16x16x4xbf16> to vector<256x4xbf16>
    %c7_34 = arith.constant 7 : index
    %c0_35 = arith.constant 0 : index
    %c0_36 = arith.constant 0 : index
    %41 = vector.load %arg3[%c7_34, %c0_35, %c0_36] : memref<9x4x64xbf16, #tpu.memory_space<vmem>>, vector<1x4x64xbf16>
    %42 = vector.shape_cast %41 : vector<1x4x64xbf16> to vector<4x64xbf16>
    %cst_37 = arith.constant dense<0.000000e+00> : vector<256x64xf32>
    %43 = tpu.matmul %40, %42, %cst_37 {dimension_numbers = #tpu.dot_dimension_numbers<[1], [0], [0], [1], [0, 0, 1, 1], [], []>} : vector<256x4xbf16>, vector<4x64xbf16>, vector<256x64xf32> -> vector<256x64xf32>
    %44 = arith.addf %38, %43 : vector<256x64xf32>
    %c0_38 = arith.constant 0 : index
    %c0_39 = arith.constant 0 : index
    %c9 = arith.constant 9 : index
    %c0_40 = arith.constant 0 : index
    %45 = vector.load %arg7[%c0_38, %c0_39, %c9, %c0_40] : memref<1x18x32x4xf32, #tpu.memory_space<vmem>>, vector<1x18x16x4xf32>
    %46 = arith.truncf %45 : vector<1x18x16x4xf32> to vector<1x18x16x4xbf16>
    %47 = vector.extract_strided_slice %46 {offsets = [0, 0, 0, 0], sizes = [1, 16, 16, 4], strides = [1, 1, 1, 1]} : vector<1x18x16x4xbf16> to vector<1x16x16x4xbf16>
    %48 = vector.shape_cast %47 : vector<1x16x16x4xbf16> to vector<256x4xbf16>
    %c2 = arith.constant 2 : index
    %c0_41 = arith.constant 0 : index
    %c0_42 = arith.constant 0 : index
    %49 = vector.load %arg3[%c2, %c0_41, %c0_42] : memref<9x4x64xbf16, #tpu.memory_space<vmem>>, vector<1x4x64xbf16>
    %50 = vector.shape_cast %49 : vector<1x4x64xbf16> to vector<4x64xbf16>
    %cst_43 = arith.constant dense<0.000000e+00> : vector<256x64xf32>
    %51 = tpu.matmul %48, %50, %cst_43 {dimension_numbers = #tpu.dot_dimension_numbers<[1], [0], [0], [1], [0, 0, 1, 1], [], []>} : vector<256x4xbf16>, vector<4x64xbf16>, vector<256x64xf32> -> vector<256x64xf32>
    %52 = arith.addf %44, %51 : vector<256x64xf32>
    %53 = vector.extract_strided_slice %46 {offsets = [0, 1, 0, 0], sizes = [1, 16, 16, 4], strides = [1, 1, 1, 1]} : vector<1x18x16x4xbf16> to vector<1x16x16x4xbf16>
    %54 = vector.shape_cast %53 : vector<1x16x16x4xbf16> to vector<256x4xbf16>
    %c5 = arith.constant 5 : index
    %c0_44 = arith.constant 0 : index
    %c0_45 = arith.constant 0 : index
    %55 = vector.load %arg3[%c5, %c0_44, %c0_45] : memref<9x4x64xbf16, #tpu.memory_space<vmem>>, vector<1x4x64xbf16>
    %56 = vector.shape_cast %55 : vector<1x4x64xbf16> to vector<4x64xbf16>
    %cst_46 = arith.constant dense<0.000000e+00> : vector<256x64xf32>
    %57 = tpu.matmul %54, %56, %cst_46 {dimension_numbers = #tpu.dot_dimension_numbers<[1], [0], [0], [1], [0, 0, 1, 1], [], []>} : vector<256x4xbf16>, vector<4x64xbf16>, vector<256x64xf32> -> vector<256x64xf32>
    %58 = arith.addf %52, %57 : vector<256x64xf32>
    %59 = vector.extract_strided_slice %46 {offsets = [0, 2, 0, 0], sizes = [1, 16, 16, 4], strides = [1, 1, 1, 1]} : vector<1x18x16x4xbf16> to vector<1x16x16x4xbf16>
    %60 = vector.shape_cast %59 : vector<1x16x16x4xbf16> to vector<256x4xbf16>
    %c8_47 = arith.constant 8 : index
    %c0_48 = arith.constant 0 : index
    %c0_49 = arith.constant 0 : index
    %61 = vector.load %arg3[%c8_47, %c0_48, %c0_49] : memref<9x4x64xbf16, #tpu.memory_space<vmem>>, vector<1x4x64xbf16>
    %62 = vector.shape_cast %61 : vector<1x4x64xbf16> to vector<4x64xbf16>
    %cst_50 = arith.constant dense<0.000000e+00> : vector<256x64xf32>
    %63 = tpu.matmul %60, %62, %cst_50 {dimension_numbers = #tpu.dot_dimension_numbers<[1], [0], [0], [1], [0, 0, 1, 1], [], []>} : vector<256x4xbf16>, vector<4x64xbf16>, vector<256x64xf32> -> vector<256x64xf32>
    %64 = arith.addf %58, %63 : vector<256x64xf32>
    %cst_51 = arith.constant dense<0.000000e+00> : vector<64xf32>
    %65 = vector.multi_reduction <add>, %64, %cst_51 [0] : vector<256x64xf32> to vector<64xf32>
    %66 = vector.shape_cast %65 : vector<64xf32> to vector<1x64xf32>
    %67 = vector.shape_cast %66 : vector<1x64xf32> to vector<1x1x64xf32>
    %c0_52 = arith.constant 0 : index
    %c0_53 = arith.constant 0 : index
    %c0_54 = arith.constant 0 : index
    %68 = vector.load %arg5[%c0_52, %c0_53, %c0_54] : memref<1x1x64xf32, #tpu.memory_space<vmem>>, vector<1x1x64xf32>
    tpu.vector_store %arg5[%c0_52, %c0_53, %c0_54], %67 {strides = array<i32>} : memref<1x1x64xf32, #tpu.memory_space<vmem>>, vector<1x1x64xf32>,
    %69 = arith.mulf %64, %64 : vector<256x64xf32>
    %cst_55 = arith.constant dense<0.000000e+00> : vector<64xf32>
    %70 = vector.multi_reduction <add>, %69, %cst_55 [0] : vector<256x64xf32> to vector<64xf32>
    %71 = vector.shape_cast %70 : vector<64xf32> to vector<1x64xf32>
    %72 = vector.shape_cast %71 : vector<1x64xf32> to vector<1x1x64xf32>
    %c0_56 = arith.constant 0 : index
    %c0_57 = arith.constant 0 : index
    %c0_58 = arith.constant 0 : index
    %73 = vector.load %arg6[%c0_56, %c0_57, %c0_58] : memref<1x1x64xf32, #tpu.memory_space<vmem>>, vector<1x1x64xf32>
    tpu.vector_store %arg6[%c0_56, %c0_57, %c0_58], %72 {strides = array<i32>} : memref<1x1x64xf32, #tpu.memory_space<vmem>>, vector<1x1x64xf32>,
    %74 = vector.shape_cast %64 : vector<256x64xf32> to vector<1x16x16x64xf32>
    %75 = vector.extract_strided_slice %74 {offsets = [0, 0, 0, 0], sizes = [1, 16, 2, 64], strides = [1, 1, 1, 1]} : vector<1x16x16x64xf32> to vector<1x16x2x64xf32>
    %cst_59 = arith.constant dense<0.000000e+00> : vector<1x16x64xf32>
    %76 = vector.multi_reduction <add>, %75, %cst_59 [2] : vector<1x16x2x64xf32> to vector<1x16x64xf32>
    %cst_60 = arith.constant 5.000000e-01 : f32
    %77 = vector.broadcast %cst_60 : f32 to vector<1x16x64xf32>
    %78 = arith.mulf %76, %77 : vector<1x16x64xf32>
    %c0_61 = arith.constant 0 : index
    %c0_62 = arith.constant 0 : index
    %c0_63 = arith.constant 0 : index
    %79 = vector.load %arg8[%c0_61, %c0_62, %c0_63] : memref<8x16x64xf32, #tpu.memory_space<vmem>>, vector<1x16x64xf32>
    tpu.vector_store %arg8[%c0_61, %c0_62, %c0_63], %78 {strides = array<i32>} : memref<8x16x64xf32, #tpu.memory_space<vmem>>, vector<1x16x64xf32>,
    %80 = vector.extract_strided_slice %74 {offsets = [0, 0, 2, 0], sizes = [1, 16, 2, 64], strides = [1, 1, 1, 1]} : vector<1x16x16x64xf32> to vector<1x16x2x64xf32>
    %cst_64 = arith.constant dense<0.000000e+00> : vector<1x16x64xf32>
    %81 = vector.multi_reduction <add>, %80, %cst_64 [2] : vector<1x16x2x64xf32> to vector<1x16x64xf32>
    %cst_65 = arith.constant 5.000000e-01 : f32
    %82 = vector.broadcast %cst_65 : f32 to vector<1x16x64xf32>
    %83 = arith.mulf %81, %82 : vector<1x16x64xf32>
    %c1_66 = arith.constant 1 : index
    %c0_67 = arith.constant 0 : index
    %c0_68 = arith.constant 0 : index
    %84 = vector.load %arg8[%c1_66, %c0_67, %c0_68] : memref<8x16x64xf32, #tpu.memory_space<vmem>>, vector<1x16x64xf32>
    tpu.vector_store %arg8[%c1_66, %c0_67, %c0_68], %83 {strides = array<i32>} : memref<8x16x64xf32, #tpu.memory_space<vmem>>, vector<1x16x64xf32>,
    %85 = vector.extract_strided_slice %74 {offsets = [0, 0, 4, 0], sizes = [1, 16, 2, 64], strides = [1, 1, 1, 1]} : vector<1x16x16x64xf32> to vector<1x16x2x64xf32>
    %cst_69 = arith.constant dense<0.000000e+00> : vector<1x16x64xf32>
    %86 = vector.multi_reduction <add>, %85, %cst_69 [2] : vector<1x16x2x64xf32> to vector<1x16x64xf32>
    %cst_70 = arith.constant 5.000000e-01 : f32
    %87 = vector.broadcast %cst_70 : f32 to vector<1x16x64xf32>
    %88 = arith.mulf %86, %87 : vector<1x16x64xf32>
    %c2_71 = arith.constant 2 : index
    %c0_72 = arith.constant 0 : index
    %c0_73 = arith.constant 0 : index
    %89 = vector.load %arg8[%c2_71, %c0_72, %c0_73] : memref<8x16x64xf32, #tpu.memory_space<vmem>>, vector<1x16x64xf32>
    tpu.vector_store %arg8[%c2_71, %c0_72, %c0_73], %88 {strides = array<i32>} : memref<8x16x64xf32, #tpu.memory_space<vmem>>, vector<1x16x64xf32>,
    %90 = vector.extract_strided_slice %74 {offsets = [0, 0, 6, 0], sizes = [1, 16, 2, 64], strides = [1, 1, 1, 1]} : vector<1x16x16x64xf32> to vector<1x16x2x64xf32>
    %cst_74 = arith.constant dense<0.000000e+00> : vector<1x16x64xf32>
    %91 = vector.multi_reduction <add>, %90, %cst_74 [2] : vector<1x16x2x64xf32> to vector<1x16x64xf32>
    %cst_75 = arith.constant 5.000000e-01 : f32
    %92 = vector.broadcast %cst_75 : f32 to vector<1x16x64xf32>
    %93 = arith.mulf %91, %92 : vector<1x16x64xf32>
    %c3_76 = arith.constant 3 : index
    %c0_77 = arith.constant 0 : index
    %c0_78 = arith.constant 0 : index
    %94 = vector.load %arg8[%c3_76, %c0_77, %c0_78] : memref<8x16x64xf32, #tpu.memory_space<vmem>>, vector<1x16x64xf32>
    tpu.vector_store %arg8[%c3_76, %c0_77, %c0_78], %93 {strides = array<i32>} : memref<8x16x64xf32, #tpu.memory_space<vmem>>, vector<1x16x64xf32>,
    %95 = vector.extract_strided_slice %74 {offsets = [0, 0, 8, 0], sizes = [1, 16, 2, 64], strides = [1, 1, 1, 1]} : vector<1x16x16x64xf32> to vector<1x16x2x64xf32>
    %cst_79 = arith.constant dense<0.000000e+00> : vector<1x16x64xf32>
    %96 = vector.multi_reduction <add>, %95, %cst_79 [2] : vector<1x16x2x64xf32> to vector<1x16x64xf32>
    %cst_80 = arith.constant 5.000000e-01 : f32
    %97 = vector.broadcast %cst_80 : f32 to vector<1x16x64xf32>
    %98 = arith.mulf %96, %97 : vector<1x16x64xf32>
    %c4_81 = arith.constant 4 : index
    %c0_82 = arith.constant 0 : index
    %c0_83 = arith.constant 0 : index
    %99 = vector.load %arg8[%c4_81, %c0_82, %c0_83] : memref<8x16x64xf32, #tpu.memory_space<vmem>>, vector<1x16x64xf32>
    tpu.vector_store %arg8[%c4_81, %c0_82, %c0_83], %98 {strides = array<i32>} : memref<8x16x64xf32, #tpu.memory_space<vmem>>, vector<1x16x64xf32>,
    %100 = vector.extract_strided_slice %74 {offsets = [0, 0, 10, 0], sizes = [1, 16, 2, 64], strides = [1, 1, 1, 1]} : vector<1x16x16x64xf32> to vector<1x16x2x64xf32>
    %cst_84 = arith.constant dense<0.000000e+00> : vector<1x16x64xf32>
    %101 = vector.multi_reduction <add>, %100, %cst_84 [2] : vector<1x16x2x64xf32> to vector<1x16x64xf32>
    %cst_85 = arith.constant 5.000000e-01 : f32
    %102 = vector.broadcast %cst_85 : f32 to vector<1x16x64xf32>
    %103 = arith.mulf %101, %102 : vector<1x16x64xf32>
    %c5_86 = arith.constant 5 : index
    %c0_87 = arith.constant 0 : index
    %c0_88 = arith.constant 0 : index
    %104 = vector.load %arg8[%c5_86, %c0_87, %c0_88] : memref<8x16x64xf32, #tpu.memory_space<vmem>>, vector<1x16x64xf32>
    tpu.vector_store %arg8[%c5_86, %c0_87, %c0_88], %103 {strides = array<i32>} : memref<8x16x64xf32, #tpu.memory_space<vmem>>, vector<1x16x64xf32>,
    %105 = vector.extract_strided_slice %74 {offsets = [0, 0, 12, 0], sizes = [1, 16, 2, 64], strides = [1, 1, 1, 1]} : vector<1x16x16x64xf32> to vector<1x16x2x64xf32>
    %cst_89 = arith.constant dense<0.000000e+00> : vector<1x16x64xf32>
    %106 = vector.multi_reduction <add>, %105, %cst_89 [2] : vector<1x16x2x64xf32> to vector<1x16x64xf32>
    %cst_90 = arith.constant 5.000000e-01 : f32
    %107 = vector.broadcast %cst_90 : f32 to vector<1x16x64xf32>
    %108 = arith.mulf %106, %107 : vector<1x16x64xf32>
    %c6_91 = arith.constant 6 : index
    %c0_92 = arith.constant 0 : index
    %c0_93 = arith.constant 0 : index
    %109 = vector.load %arg8[%c6_91, %c0_92, %c0_93] : memref<8x16x64xf32, #tpu.memory_space<vmem>>, vector<1x16x64xf32>
    tpu.vector_store %arg8[%c6_91, %c0_92, %c0_93], %108 {strides = array<i32>} : memref<8x16x64xf32, #tpu.memory_space<vmem>>, vector<1x16x64xf32>,
    %110 = vector.extract_strided_slice %74 {offsets = [0, 0, 14, 0], sizes = [1, 16, 2, 64], strides = [1, 1, 1, 1]} : vector<1x16x16x64xf32> to vector<1x16x2x64xf32>
    %cst_94 = arith.constant dense<0.000000e+00> : vector<1x16x64xf32>
    %111 = vector.multi_reduction <add>, %110, %cst_94 [2] : vector<1x16x2x64xf32> to vector<1x16x64xf32>
    %cst_95 = arith.constant 5.000000e-01 : f32
    %112 = vector.broadcast %cst_95 : f32 to vector<1x16x64xf32>
    %113 = arith.mulf %111, %112 : vector<1x16x64xf32>
    %c7_96 = arith.constant 7 : index
    %c0_97 = arith.constant 0 : index
    %c0_98 = arith.constant 0 : index
    %114 = vector.load %arg8[%c7_96, %c0_97, %c0_98] : memref<8x16x64xf32, #tpu.memory_space<vmem>>, vector<1x16x64xf32>
    tpu.vector_store %arg8[%c7_96, %c0_97, %c0_98], %113 {strides = array<i32>} : memref<8x16x64xf32, #tpu.memory_space<vmem>>, vector<1x16x64xf32>,
    %c0_99 = arith.constant 0 : index
    %c0_100 = arith.constant 0 : index
    %c0_101 = arith.constant 0 : index
    %115 = vector.load %arg8[%c0_99, %c0_100, %c0_101] : memref<8x16x64xf32, #tpu.memory_space<vmem>>, vector<8x2x64xf32>
    %cst_102 = arith.constant dense<0.000000e+00> : vector<8x64xf32>
    %116 = vector.multi_reduction <add>, %115, %cst_102 [1] : vector<8x2x64xf32> to vector<8x64xf32>
    %cst_103 = arith.constant 5.000000e-01 : f32
    %117 = vector.broadcast %cst_103 : f32 to vector<8x64xf32>
    %118 = arith.mulf %116, %117 : vector<8x64xf32>
    %119 = vector.shape_cast %118 : vector<8x64xf32> to vector<1x1x8x64xf32>
    %c0_104 = arith.constant 0 : index
    %c0_105 = arith.constant 0 : index
    %c0_106 = arith.constant 0 : index
    %c0_107 = arith.constant 0 : index
    %120 = vector.load %arg4[%c0_104, %c0_105, %c0_106, %c0_107] : memref<1x8x8x64xf32, #tpu.memory_space<vmem>>, vector<1x1x8x64xf32>
    tpu.vector_store %arg4[%c0_104, %c0_105, %c0_106, %c0_107], %119 {strides = array<i32>} : memref<1x8x8x64xf32, #tpu.memory_space<vmem>>, vector<1x1x8x64xf32>,
    %c0_108 = arith.constant 0 : index
    %c2_109 = arith.constant 2 : index
    %c0_110 = arith.constant 0 : index
    %121 = vector.load %arg8[%c0_108, %c2_109, %c0_110] : memref<8x16x64xf32, #tpu.memory_space<vmem>>, vector<8x2x64xf32>
    %cst_111 = arith.constant dense<0.000000e+00> : vector<8x64xf32>
    %122 = vector.multi_reduction <add>, %121, %cst_111 [1] : vector<8x2x64xf32> to vector<8x64xf32>
    %cst_112 = arith.constant 5.000000e-01 : f32
    %123 = vector.broadcast %cst_112 : f32 to vector<8x64xf32>
    %124 = arith.mulf %122, %123 : vector<8x64xf32>
    %125 = vector.shape_cast %124 : vector<8x64xf32> to vector<1x1x8x64xf32>
    %c0_113 = arith.constant 0 : index
    %c1_114 = arith.constant 1 : index
    %c0_115 = arith.constant 0 : index
    %c0_116 = arith.constant 0 : index
    %126 = vector.load %arg4[%c0_113, %c1_114, %c0_115, %c0_116] : memref<1x8x8x64xf32, #tpu.memory_space<vmem>>, vector<1x1x8x64xf32>
    tpu.vector_store %arg4[%c0_113, %c1_114, %c0_115, %c0_116], %125 {strides = array<i32>} : memref<1x8x8x64xf32, #tpu.memory_space<vmem>>, vector<1x1x8x64xf32>,
    %c0_117 = arith.constant 0 : index
    %c4_118 = arith.constant 4 : index
    %c0_119 = arith.constant 0 : index
    %127 = vector.load %arg8[%c0_117, %c4_118, %c0_119] : memref<8x16x64xf32, #tpu.memory_space<vmem>>, vector<8x2x64xf32>
    %cst_120 = arith.constant dense<0.000000e+00> : vector<8x64xf32>
    %128 = vector.multi_reduction <add>, %127, %cst_120 [1] : vector<8x2x64xf32> to vector<8x64xf32>
    %cst_121 = arith.constant 5.000000e-01 : f32
    %129 = vector.broadcast %cst_121 : f32 to vector<8x64xf32>
    %130 = arith.mulf %128, %129 : vector<8x64xf32>
    %131 = vector.shape_cast %130 : vector<8x64xf32> to vector<1x1x8x64xf32>
    %c0_122 = arith.constant 0 : index
    %c2_123 = arith.constant 2 : index
    %c0_124 = arith.constant 0 : index
    %c0_125 = arith.constant 0 : index
    %132 = vector.load %arg4[%c0_122, %c2_123, %c0_124, %c0_125] : memref<1x8x8x64xf32, #tpu.memory_space<vmem>>, vector<1x1x8x64xf32>
    tpu.vector_store %arg4[%c0_122, %c2_123, %c0_124, %c0_125], %131 {strides = array<i32>} : memref<1x8x8x64xf32, #tpu.memory_space<vmem>>, vector<1x1x8x64xf32>,
    %c0_126 = arith.constant 0 : index
    %c6_127 = arith.constant 6 : index
    %c0_128 = arith.constant 0 : index
    %133 = vector.load %arg8[%c0_126, %c6_127, %c0_128] : memref<8x16x64xf32, #tpu.memory_space<vmem>>, vector<8x2x64xf32>
    %cst_129 = arith.constant dense<0.000000e+00> : vector<8x64xf32>
    %134 = vector.multi_reduction <add>, %133, %cst_129 [1] : vector<8x2x64xf32> to vector<8x64xf32>
    %cst_130 = arith.constant 5.000000e-01 : f32
    %135 = vector.broadcast %cst_130 : f32 to vector<8x64xf32>
    %136 = arith.mulf %134, %135 : vector<8x64xf32>
    %137 = vector.shape_cast %136 : vector<8x64xf32> to vector<1x1x8x64xf32>
    %c0_131 = arith.constant 0 : index
    %c3_132 = arith.constant 3 : index
    %c0_133 = arith.constant 0 : index
    %c0_134 = arith.constant 0 : index
    %138 = vector.load %arg4[%c0_131, %c3_132, %c0_133, %c0_134] : memref<1x8x8x64xf32, #tpu.memory_space<vmem>>, vector<1x1x8x64xf32>
    tpu.vector_store %arg4[%c0_131, %c3_132, %c0_133, %c0_134], %137 {strides = array<i32>} : memref<1x8x8x64xf32, #tpu.memory_space<vmem>>, vector<1x1x8x64xf32>,
    %c0_135 = arith.constant 0 : index
    %c8_136 = arith.constant 8 : index
    %c0_137 = arith.constant 0 : index
    %139 = vector.load %arg8[%c0_135, %c8_136, %c0_137] : memref<8x16x64xf32, #tpu.memory_space<vmem>>, vector<8x2x64xf32>
    %cst_138 = arith.constant dense<0.000000e+00> : vector<8x64xf32>
    %140 = vector.multi_reduction <add>, %139, %cst_138 [1] : vector<8x2x64xf32> to vector<8x64xf32>
    %cst_139 = arith.constant 5.000000e-01 : f32
    %141 = vector.broadcast %cst_139 : f32 to vector<8x64xf32>
    %142 = arith.mulf %140, %141 : vector<8x64xf32>
    %143 = vector.shape_cast %142 : vector<8x64xf32> to vector<1x1x8x64xf32>
    %c0_140 = arith.constant 0 : index
    %c4_141 = arith.constant 4 : index
    %c0_142 = arith.constant 0 : index
    %c0_143 = arith.constant 0 : index
    %144 = vector.load %arg4[%c0_140, %c4_141, %c0_142, %c0_143] : memref<1x8x8x64xf32, #tpu.memory_space<vmem>>, vector<1x1x8x64xf32>
    tpu.vector_store %arg4[%c0_140, %c4_141, %c0_142, %c0_143], %143 {strides = array<i32>} : memref<1x8x8x64xf32, #tpu.memory_space<vmem>>, vector<1x1x8x64xf32>,
    %c0_144 = arith.constant 0 : index
    %c10 = arith.constant 10 : index
    %c0_145 = arith.constant 0 : index
    %145 = vector.load %arg8[%c0_144, %c10, %c0_145] : memref<8x16x64xf32, #tpu.memory_space<vmem>>, vector<8x2x64xf32>
    %cst_146 = arith.constant dense<0.000000e+00> : vector<8x64xf32>
    %146 = vector.multi_reduction <add>, %145, %cst_146 [1] : vector<8x2x64xf32> to vector<8x64xf32>
    %cst_147 = arith.constant 5.000000e-01 : f32
    %147 = vector.broadcast %cst_147 : f32 to vector<8x64xf32>
    %148 = arith.mulf %146, %147 : vector<8x64xf32>
    %149 = vector.shape_cast %148 : vector<8x64xf32> to vector<1x1x8x64xf32>
    %c0_148 = arith.constant 0 : index
    %c5_149 = arith.constant 5 : index
    %c0_150 = arith.constant 0 : index
    %c0_151 = arith.constant 0 : index
    %150 = vector.load %arg4[%c0_148, %c5_149, %c0_150, %c0_151] : memref<1x8x8x64xf32, #tpu.memory_space<vmem>>, vector<1x1x8x64xf32>
    tpu.vector_store %arg4[%c0_148, %c5_149, %c0_150, %c0_151], %149 {strides = array<i32>} : memref<1x8x8x64xf32, #tpu.memory_space<vmem>>, vector<1x1x8x64xf32>,
    %c0_152 = arith.constant 0 : index
    %c12 = arith.constant 12 : index
    %c0_153 = arith.constant 0 : index
    %151 = vector.load %arg8[%c0_152, %c12, %c0_153] : memref<8x16x64xf32, #tpu.memory_space<vmem>>, vector<8x2x64xf32>
    %cst_154 = arith.constant dense<0.000000e+00> : vector<8x64xf32>
    %152 = vector.multi_reduction <add>, %151, %cst_154 [1] : vector<8x2x64xf32> to vector<8x64xf32>
    %cst_155 = arith.constant 5.000000e-01 : f32
    %153 = vector.broadcast %cst_155 : f32 to vector<8x64xf32>
    %154 = arith.mulf %152, %153 : vector<8x64xf32>
    %155 = vector.shape_cast %154 : vector<8x64xf32> to vector<1x1x8x64xf32>
    %c0_156 = arith.constant 0 : index
    %c6_157 = arith.constant 6 : index
    %c0_158 = arith.constant 0 : index
    %c0_159 = arith.constant 0 : index
    %156 = vector.load %arg4[%c0_156, %c6_157, %c0_158, %c0_159] : memref<1x8x8x64xf32, #tpu.memory_space<vmem>>, vector<1x1x8x64xf32>
    tpu.vector_store %arg4[%c0_156, %c6_157, %c0_158, %c0_159], %155 {strides = array<i32>} : memref<1x8x8x64xf32, #tpu.memory_space<vmem>>, vector<1x1x8x64xf32>,
    %c0_160 = arith.constant 0 : index
    %c14 = arith.constant 14 : index
    %c0_161 = arith.constant 0 : index
    %157 = vector.load %arg8[%c0_160, %c14, %c0_161] : memref<8x16x64xf32, #tpu.memory_space<vmem>>, vector<8x2x64xf32>
    %cst_162 = arith.constant dense<0.000000e+00> : vector<8x64xf32>
    %158 = vector.multi_reduction <add>, %157, %cst_162 [1] : vector<8x2x64xf32> to vector<8x64xf32>
    %cst_163 = arith.constant 5.000000e-01 : f32
    %159 = vector.broadcast %cst_163 : f32 to vector<8x64xf32>
    %160 = arith.mulf %158, %159 : vector<8x64xf32>
    %161 = vector.shape_cast %160 : vector<8x64xf32> to vector<1x1x8x64xf32>
    %c0_164 = arith.constant 0 : index
    %c7_165 = arith.constant 7 : index
    %c0_166 = arith.constant 0 : index
    %c0_167 = arith.constant 0 : index
    %162 = vector.load %arg4[%c0_164, %c7_165, %c0_166, %c0_167] : memref<1x8x8x64xf32, #tpu.memory_space<vmem>>, vector<1x1x8x64xf32>
    tpu.vector_store %arg4[%c0_164, %c7_165, %c0_166, %c0_167], %161 {strides = array<i32>} : memref<1x8x8x64xf32, #tpu.memory_space<vmem>>, vector<1x1x8x64xf32>,
    return
  }
  func.func @transform_0(%arg0: i32) -> (i32, i32, i32, i32) {
    %c0_i32 = arith.constant 0 : i32
    %c0_i32_0 = arith.constant 0 : i32
    %c0_i32_1 = arith.constant 0 : i32
    %c0_i32_2 = arith.constant 0 : i32
    return %arg0, %c0_i32, %c0_i32_0, %c0_i32_1 : i32, i32, i32, i32
  }
  func.func @transform_1(%arg0: i32) -> (i32, i32) {
    %c0_i32 = arith.constant 0 : i32
    %c0_i32_0 = arith.constant 0 : i32
    %c0_i32_1 = arith.constant 0 : i32
    return %c0_i32, %c0_i32_0 : i32, i32
  }
  func.func @transform_2(%arg0: i32) -> (i32, i32, i32) {
    %c0_i32 = arith.constant 0 : i32
    %c0_i32_0 = arith.constant 0 : i32
    %c0_i32_1 = arith.constant 0 : i32
    %c0_i32_2 = arith.constant 0 : i32
    return %c0_i32, %c0_i32_0, %c0_i32_1 : i32, i32, i32
  }
  func.func @transform_3(%arg0: i32) -> (i32, i32, i32, i32) {
    %c0_i32 = arith.constant 0 : i32
    %c0_i32_0 = arith.constant 0 : i32
    %c0_i32_1 = arith.constant 0 : i32
    %c0_i32_2 = arith.constant 0 : i32
    return %arg0, %c0_i32, %c0_i32_0, %c0_i32_1 : i32, i32, i32, i32
  }
  func.func @transform_4(%arg0: i32) -> (i32, i32, i32) {
    %c0_i32 = arith.constant 0 : i32
    %c0_i32_0 = arith.constant 0 : i32
    %c0_i32_1 = arith.constant 0 : i32
    return %arg0, %c0_i32, %c0_i32_0 : i32, i32, i32
  }
  func.func @transform_5(%arg0: i32) -> (i32, i32, i32) {
    %c0_i32 = arith.constant 0 : i32
    %c0_i32_0 = arith.constant 0 : i32
    %c0_i32_1 = arith.constant 0 : i32
    return %arg0, %c0_i32, %c0_i32_0 : i32, i32, i32
  }
}

</mosaic_0001>

<llo_original>
// kernel: tpu_custom_call.1
$region0: #{tpu_custom_call.1}
  #allocation0 [shape = 'u32[]', space=smem, size = 0x4, offset = 0x4, fixed_abs, tag = 'smem constant byte address 0x4 - core index']
  #allocation1 [shape = 'u32[72,128]{1,0:T(1,128)}', space=vmem, size = 0x9000, scoped, tag = 'internal scratch']
  #allocation2 [shape = 'f32[1,18,32,4]{3,2,1,0:T(8,128)}', space=vmem, size = 0x48000, scoped, tag = 'scratch operand']
  #allocation3 [shape = 'f32[8,16,64]{2,1,0:T(8,128)}', space=vmem, size = 0x10000, scoped, tag = 'scratch operand']
  %s0 = inlined_call_operand.vmem [shape: f32[2,16,16,4], index: 0, kind: input, shape index: {}]
  %s1 = inlined_call_operand.vmem [shape: f32[2,4], index: 1, kind: input, shape index: {}]
  %s2 = inlined_call_operand.vmem [shape: bf16[9,4,64], index: 2, kind: input, shape index: {}]
  %s3 = inlined_call_operand.hbm [shape: f32[2,8,8,64], index: 3, kind: output, shape index: {0}]
  %s4 = inlined_call_operand.hbm [shape: f32[2,1,64], index: 4, kind: output, shape index: {1}]
  %s5 = inlined_call_operand.hbm [shape: f32[2,1,64], index: 5, kind: output, shape index: {2}]
  %6 = xla_tuple %s3, %s4, %s5
  %s7 = sld [smem:[#allocation0]]
  $region61: #{tpu_custom_call.1} parent=0
    _
  %s9 = ssub.s32 1, %s7
  %s10 = scalar_select 0, %s9, %s7
  $region1: #{tpu_custom_call.1} parent=0
    #allocation4 [shape = 'u8[65536]{0}', space=vmem, size = 0x10000, scoped, tag = 'output window, operand 0']
    #allocation5 [shape = 's32[2]{0}', space=sflag, size = 0x8, scoped, tag = 'scoped memory for tpu_custom_call.1']
    #allocation6 [shape = 'u8[1024]{0}', space=vmem, size = 0x400, scoped, tag = 'output window, operand 1']
    #allocation7 [shape = 's32[2]{0}', space=sflag, size = 0x8, scoped, tag = 'scoped memory for tpu_custom_call.1']
    #allocation8 [shape = 'u8[1024]{0}', space=vmem, size = 0x400, scoped, tag = 'output window, operand 2']
    %11 = vsyncpa [#allocation5], 0
    %s12 = scalar_lea.sflag [#allocation5], 1
    %13 = vsyncpa %s12, 0
    %14 = vsyncpa [#allocation7], 0
    %s15 = scalar_lea.sflag [#allocation7], 1
    %16 = vsyncpa %s15, 0
    loop: start=0, step=1, limit=4
    $region2: #{tpu_custom_call.1} parent=1 // loop_pre_header
      _
    $region3: #{tpu_custom_call.1} parent=1 // loop_header
      %s18 = sphi 0, %s22
      %p19 = scmp.ge.s32.totalorder %s18, 4
      %s28 = sphi 0, %s30
      %s31 = sphi 0, %s28
      %s32 = sphi 0, %s31
      %s48 = sphi 0, %s32
      %s52 = sphi 0, %s52
      %s54 = sphi 0, %s52
      %s55 = sphi 0, %s54
      %s69 = sphi 0, %s55
      %s73 = sphi 0, %s73
      %s75 = sphi 0, %s73
      %s76 = sphi 0, %s75
      %s90 = sphi 0, %s76
      %s96 = sphi 0, %s98
      %s99 = sphi 0, %s96
      %s100 = sphi 0, %s99
      %s116 = sphi 0, %s100
      %s122 = sphi 0, %s124
      %s125 = sphi 0, %s122
      %s126 = sphi 0, %s125
      %s142 = sphi 0, %s126
      %s148 = sphi 0, %s150
      %s151 = sphi 0, %s148
      %s152 = sphi 0, %s151
      %s168 = sphi 0, %s152
    $region4: #{tpu_custom_call.1} parent=1 // loop_header_branch
      %21 = sbr.rel (%p19) target = $region8
    $region5: #{tpu_custom_call.1} parent=1 // loop_body
      %s23 = ssub.s32 %s18, 1
      %s24 = ssub.s32 %s18, 2
      %s25 = sadd.s32 %s18, 1
      %s26 = ssub.s32 %s18, %s25
      %p27 = scmp.eq.s32.totalorder %s26, 0
      %s29 = sadd.s32 %s28, 1
      %s30 = scalar_select %p27, %s28, %s29
      %p33 = pneg %p27
      %p34 = scmp.eq.s32.totalorder %s18, 1
      %p35 = por %p33, %p34
      %p36 = scmp.ne.s32.totalorder %s28, %s31
      %p37 = scmp.eq.s32.totalorder %s18, 0
      %p38 = por %p36, %p37
      %p39 = scmp.ne.s32.totalorder %s28, %s31
      %p40 = scmp.eq.s32.totalorder %s23, 1
      %p41 = por %p39, %p40
      %p42 = scmp.ne.s32.totalorder %s31, %s32
      %p43 = scmp.eq.s32.totalorder %s23, 0
      %p44 = por %p42, %p43
      %p45 = scmp.ne.s32.totalorder %s31, %s32
      %p46 = scmp.eq.s32.totalorder %s24, 1
      %p47 = por %p45, %p46
      %p49 = scmp.ne.s32.totalorder %s32, %s48
      %p50 = scmp.eq.s32.totalorder %s24, 0
      %p51 = por %p49, %p50
      %s53 = sadd.s32 %s52, 1
      %p56 = scmp.eq.s32.totalorder %s18, 1
      %p57 = scmp.ne.s32.totalorder %s52, %s54
      %p58 = scmp.eq.s32.totalorder %s18, 0
      %p59 = por %p57, %p58
      %p60 = scmp.ne.s32.totalorder %s52, %s54
      %p61 = scmp.eq.s32.totalorder %s23, 1
      %p62 = por %p60, %p61
      %p63 = scmp.ne.s32.totalorder %s54, %s55
      %p64 = scmp.eq.s32.totalorder %s23, 0
      %p65 = por %p63, %p64
      %p66 = scmp.ne.s32.totalorder %s54, %s55
      %p67 = scmp.eq.s32.totalorder %s24, 1
      %p68 = por %p66, %p67
      %p70 = scmp.ne.s32.totalorder %s55, %s69
      %p71 = scmp.eq.s32.totalorder %s24, 0
      %p72 = por %p70, %p71
      %s74 = sadd.s32 %s73, 1
      %p77 = scmp.eq.s32.totalorder %s18, 1
      %p78 = scmp.ne.s32.totalorder %s73, %s75
      %p79 = scmp.eq.s32.totalorder %s18, 0
      %p80 = por %p78, %p79
      %p81 = scmp.ne.s32.totalorder %s73, %s75
      %p82 = scmp.eq.s32.totalorder %s23, 1
      %p83 = por %p81, %p82
      %p84 = scmp.ne.s32.totalorder %s75, %s76
      %p85 = scmp.eq.s32.totalorder %s23, 0
      %p86 = por %p84, %p85
      %p87 = scmp.ne.s32.totalorder %s75, %s76
      %p88 = scmp.eq.s32.totalorder %s24, 1
      %p89 = por %p87, %p88
      %p91 = scmp.ne.s32.totalorder %s76, %s90
      %p92 = scmp.eq.s32.totalorder %s24, 0
      %p93 = por %p91, %p92
      %s94 = ssub.s32 %s18, %s25
      %p95 = scmp.eq.s32.totalorder %s94, 0
      %s97 = sadd.s32 %s96, 1
      %s98 = scalar_select %p95, %s96, %s97
      %p101 = pneg %p95
      %p102 = scmp.eq.s32.totalorder %s18, 1
      %p103 = por %p101, %p102
      %p104 = scmp.ne.s32.totalorder %s96, %s99
      %p105 = scmp.eq.s32.totalorder %s18, 0
      %p106 = por %p104, %p105
      %p107 = scmp.ne.s32.totalorder %s96, %s99
      %p108 = scmp.eq.s32.totalorder %s23, 1
      %p109 = por %p107, %p108
      %p110 = scmp.ne.s32.totalorder %s99, %s100
      %p111 = scmp.eq.s32.totalorder %s23, 0
      %p112 = por %p110, %p111
      %p113 = scmp.ne.s32.totalorder %s99, %s100
      %p114 = scmp.eq.s32.totalorder %s24, 1
      %p115 = por %p113, %p114
      %p117 = scmp.ne.s32.totalorder %s100, %s116
      %p118 = scmp.eq.s32.totalorder %s24, 0
      %p119 = por %p117, %p118
      %s120 = ssub.s32 %s18, %s25
      %p121 = scmp.eq.s32.totalorder %s120, 0
      %s123 = sadd.s32 %s122, 1
      %s124 = scalar_select %p121, %s122, %s123
      %p127 = pneg %p121
      %p128 = scmp.eq.s32.totalorder %s18, 1
      %p129 = por %p127, %p128
      %p130 = scmp.ne.s32.totalorder %s122, %s125
      %p131 = scmp.eq.s32.totalorder %s18, 0
      %p132 = por %p130, %p131
      %p133 = scmp.ne.s32.totalorder %s122, %s125
      %p134 = scmp.eq.s32.totalorder %s23, 1
      %p135 = por %p133, %p134
      %p136 = scmp.ne.s32.totalorder %s125, %s126
      %p137 = scmp.eq.s32.totalorder %s23, 0
      %p138 = por %p136, %p137
      %p139 = scmp.ne.s32.totalorder %s125, %s126
      %p140 = scmp.eq.s32.totalorder %s24, 1
      %p141 = por %p139, %p140
      %p143 = scmp.ne.s32.totalorder %s126, %s142
      %p144 = scmp.eq.s32.totalorder %s24, 0
      %p145 = por %p143, %p144
      %s146 = ssub.s32 %s18, %s25
      %p147 = scmp.eq.s32.totalorder %s146, 0
      %s149 = sadd.s32 %s148, 1
      %s150 = scalar_select %p147, %s148, %s149
      %p153 = pneg %p147
      %p154 = scmp.eq.s32.totalorder %s18, 1
      %p155 = por %p153, %p154
      %p156 = scmp.ne.s32.totalorder %s148, %s151
      %p157 = scmp.eq.s32.totalorder %s18, 0
      %p158 = por %p156, %p157
      %p159 = scmp.ne.s32.totalorder %s148, %s151
      %p160 = scmp.eq.s32.totalorder %s23, 1
      %p161 = por %p159, %p160
      %p162 = scmp.ne.s32.totalorder %s151, %s152
      %p163 = scmp.eq.s32.totalorder %s23, 0
      %p164 = por %p162, %p163
      %p165 = scmp.ne.s32.totalorder %s151, %s152
      %p166 = scmp.eq.s32.totalorder %s24, 1
      %p167 = por %p165, %p166
      %p169 = scmp.ne.s32.totalorder %s152, %s168
      %p170 = scmp.eq.s32.totalorder %s24, 0
      %p171 = por %p169, %p170
      %p172 = scmp.le.s32.totalorder 1, %s18
      %p173 = scmp.lt.s32.totalorder %s18, 3
      %p174 = pnand %p172, %p173
      %p175 = pneg %p174
      // Predicated region
      $region9: #{tpu_custom_call.1} parent=5 // pred_check
        _
      $region10: #{tpu_custom_call.1} parent=5 // pred_check_branch
        %177 = sbr.rel (%p174) target = $region12
      $region11: #{tpu_custom_call.1} parent=5 // pred_region
        %s178 = ssub.s32 %s18, 1
        // Predicated region
        $region13: #{tpu_custom_call.1} parent=11 // pred_check
          %p179 = pneg %p65
        $region14: #{tpu_custom_call.1} parent=11 // pred_check_branch
          %181 = sbr.rel (%p179) target = $region16
        $region15: #{tpu_custom_call.1} parent=11 // pred_region
          _
        $region16: #{tpu_custom_call.1} parent=11 // pred_fallthru
          _
        // Predicated region
        $region17: #{tpu_custom_call.1} parent=11 // pred_check
          %p182 = pneg %p86
        $region18: #{tpu_custom_call.1} parent=11 // pred_check_branch
          %184 = sbr.rel (%p182) target = $region20
        $region19: #{tpu_custom_call.1} parent=11 // pred_region
          _
        $region20: #{tpu_custom_call.1} parent=11 // pred_fallthru
          _
      $region12: #{tpu_custom_call.1} parent=5 // pred_fallthru
        _
      %p185 = scmp.lt.s32.totalorder %s18, 2
      // Predicated region
      $region21: #{tpu_custom_call.1} parent=5 // pred_check
        %p186 = pneg %p185
      $region22: #{tpu_custom_call.1} parent=5 // pred_check_branch
        %188 = sbr.rel (%p186) target = $region24
      $region23: #{tpu_custom_call.1} parent=5 // pred_region
        // Predicated region
        $region25: #{tpu_custom_call.1} parent=23 // pred_check
          %p189 = pneg %p38
        $region26: #{tpu_custom_call.1} parent=23 // pred_check_branch
          %191 = sbr.rel (%p189) target = $region28
        $region27: #{tpu_custom_call.1} parent=23 // pred_region
          %p192 = scmp.lt.s32.totalorder %s18, 1
          %s193 = scalar_select %p192, %s18, 1
          %s194 = smul.addr %s193, 32
          %s195 = smul.addr %s194, 8
          %s196 = scalar_lea.vmem %s0, %s195
        $region28: #{tpu_custom_call.1} parent=23 // pred_fallthru
          _
      $region24: #{tpu_custom_call.1} parent=5 // pred_fallthru
        _
      %p197 = scmp.le.s32.totalorder 1, %s18
      %p198 = scmp.lt.s32.totalorder %s18, 3
      %p199 = pnand %p197, %p198
      %p200 = pneg %p199
      // Predicated region
      $region29: #{tpu_custom_call.1} parent=5 // pred_check
        _
      $region30: #{tpu_custom_call.1} parent=5 // pred_check_branch
        %202 = sbr.rel (%p199) target = $region32
      $region31: #{tpu_custom_call.1} parent=5 // pred_region
        %s203 = ssub.s32 %s18, 1
        %p204 = scmp.lt.s32.totalorder %s23, 1
        %s205 = scalar_select %p204, %s23, 1
        %s206 = smul.addr %s205, 32
        %s207 = smul.addr %s206, 8
        %s208 = scalar_lea.vmem %s0, %s207
        %p209 = pneg %p44
        %p210 = pneg %p41
        %p211 = pneg %p65
        %p212 = pneg %p62
        %p213 = pneg %p86
        %p214 = pneg %p83
        %p215 = pneg %p112
        %p216 = pneg %p109
        %s217 = sand.u32 %s99, 1
        %s218 = scalar_lea.sflag [#allocation5], %s217
        %s219 = sand.u32 %s99, 1
        %s220 = smul.addr %s219, 64
        %s221 = scalar_lea.vmem [#allocation4], %s220
        %p222 = pneg %p138
        %p223 = pneg %p135
        %s224 = sand.u32 %s23, 1
        %s225 = scalar_lea.sflag [#allocation7], %s224
        %s226 = sand.u32 %s125, 1
        %s227 = scalar_lea.vmem [#allocation6], %s226
        %p228 = pneg %p164
        %p229 = pneg %p161
        %s230 = sand.u32 %s23, 1
        %s231 = scalar_lea.sflag [#allocation7], %s230
        %s232 = sand.u32 %s151, 1
        %s233 = scalar_lea.vmem [#allocation8], %s232
        %p234 = scmp.lt.s32.totalorder %s23, 1
        %s235 = scalar_select %p234, %s23, 1
        %s236 = smul.addr %s235, 32
        %s237 = smul.addr %s236, 8
        %s238 = scalar_lea.vmem %s0, %s237
        %v240 = vld [vmem:[%s238] sm:$0xff]
        %v241 = vld [vmem:[%s238 + $0x8] sm:$0xff]
        %v242 = vld [vmem:[%s238 + $0x10] sm:$0xff]
        %v243 = vld [vmem:[%s238 + $0x18] sm:$0xff]
        %v244 = vld [vmem:[%s238 + $0x20] sm:$0xff]
        %v245 = vld [vmem:[%s238 + $0x28] sm:$0xff]
        %v246 = vld [vmem:[%s238 + $0x30] sm:$0xff]
        %v247 = vld [vmem:[%s238 + $0x38] sm:$0xff]
        %v248 = vld [vmem:[%s238 + $0x40] sm:$0xff]
        %v249 = vld [vmem:[%s238 + $0x48] sm:$0xff]
        %v250 = vld [vmem:[%s238 + $0x50] sm:$0xff]
        %v251 = vld [vmem:[%s238 + $0x58] sm:$0xff]
        %v252 = vld [vmem:[%s238 + $0x60] sm:$0xff]
        %v253 = vld [vmem:[%s238 + $0x68] sm:$0xff]
        %v254 = vld [vmem:[%s238 + $0x70] sm:$0xff]
        %v255 = vld [vmem:[%s238 + $0x78] sm:$0xff]
        %v256 = vld [vmem:[%s238 + $0x80] sm:$0xff]
        %v257 = vld [vmem:[%s238 + $0x88] sm:$0xff]
        %v258 = vld [vmem:[%s238 + $0x90] sm:$0xff]
        %v259 = vld [vmem:[%s238 + $0x98] sm:$0xff]
        %v260 = vld [vmem:[%s238 + $0xa0] sm:$0xff]
        %v261 = vld [vmem:[%s238 + $0xa8] sm:$0xff]
        %v262 = vld [vmem:[%s238 + $0xb0] sm:$0xff]
        %v263 = vld [vmem:[%s238 + $0xb8] sm:$0xff]
        %v264 = vld [vmem:[%s238 + $0xc0] sm:$0xff]
        %v265 = vld [vmem:[%s238 + $0xc8] sm:$0xff]
        %v266 = vld [vmem:[%s238 + $0xd0] sm:$0xff]
        %v267 = vld [vmem:[%s238 + $0xd8] sm:$0xff]
        %v268 = vld [vmem:[%s238 + $0xe0] sm:$0xff]
        %v269 = vld [vmem:[%s238 + $0xe8] sm:$0xff]
        %v270 = vld [vmem:[%s238 + $0xf0] sm:$0xff]
        %v271 = vld [vmem:[%s238 + $0xf8] sm:$0xff]
        %vm272 = vcmask 31744
        %273 = vst.msk [vmem:[#allocation2] sm:$0xff] %vm272, 0.0
        %274 = vst.msk [vmem:[#allocation2 + $0x8] sm:$0xff] %vm272, 0.0
        %275 = vst.msk [vmem:[#allocation2 + $0x10] sm:$0xff] %vm272, 0.0
        %276 = vst.msk [vmem:[#allocation2 + $0x18] sm:$0xff] %vm272, 0.0
        %277 = vst.msk [vmem:[#allocation2 + $0x20] sm:$0xff] %vm272, 0.0
        %278 = vst.msk [vmem:[#allocation2 + $0x28] sm:$0xff] %vm272, 0.0
        %279 = vst.msk [vmem:[#allocation2 + $0x30] sm:$0xff] %vm272, 0.0
        %280 = vst.msk [vmem:[#allocation2 + $0x38] sm:$0xff] %vm272, 0.0
        %281 = vst.msk [vmem:[#allocation2 + $0x40] sm:$0xff] %vm272, 0.0
        %282 = vst.msk [vmem:[#allocation2 + $0x48] sm:$0xff] %vm272, 0.0
        %283 = vst.msk [vmem:[#allocation2 + $0x50] sm:$0xff] %vm272, 0.0
        %284 = vst.msk [vmem:[#allocation2 + $0x58] sm:$0xff] %vm272, 0.0
        %285 = vst.msk [vmem:[#allocation2 + $0x60] sm:$0xff] %vm272, 0.0
        %286 = vst.msk [vmem:[#allocation2 + $0x68] sm:$0xff] %vm272, 0.0
        %287 = vst.msk [vmem:[#allocation2 + $0x70] sm:$0xff] %vm272, 0.0
        %288 = vst.msk [vmem:[#allocation2 + $0x78] sm:$0xff] %vm272, 0.0
        %289 = vst.msk [vmem:[#allocation2 + $0x80] sm:$0xff] %vm272, 0.0
        %290 = vst.msk [vmem:[#allocation2 + $0x88] sm:$0xff] %vm272, 0.0
        %291 = vst.msk [vmem:[#allocation2 + $0x90] sm:$0xff] %vm272, 0.0
        %292 = vst.msk [vmem:[#allocation2 + $0x98] sm:$0xff] %vm272, 0.0
        %293 = vst.msk [vmem:[#allocation2 + $0xa0] sm:$0xff] %vm272, 0.0
        %294 = vst.msk [vmem:[#allocation2 + $0xa8] sm:$0xff] %vm272, 0.0
        %295 = vst.msk [vmem:[#allocation2 + $0xb0] sm:$0xff] %vm272, 0.0
        %296 = vst.msk [vmem:[#allocation2 + $0xb8] sm:$0xff] %vm272, 0.0
        %297 = vst.msk [vmem:[#allocation2 + $0xc0] sm:$0xff] %vm272, 0.0
        %298 = vst.msk [vmem:[#allocation2 + $0xc8] sm:$0xff] %vm272, 0.0
        %299 = vst.msk [vmem:[#allocation2 + $0xd0] sm:$0xff] %vm272, 0.0
        %300 = vst.msk [vmem:[#allocation2 + $0xd8] sm:$0xff] %vm272, 0.0
        %301 = vst.msk [vmem:[#allocation2 + $0xe0] sm:$0xff] %vm272, 0.0
        %302 = vst.msk [vmem:[#allocation2 + $0xe8] sm:$0xff] %vm272, 0.0
        %303 = vst.msk [vmem:[#allocation2 + $0xf0] sm:$0xff] %vm272, 0.0
        %304 = vst.msk [vmem:[#allocation2 + $0xf8] sm:$0xff] %vm272, 0.0
        %305 = vst.msk [vmem:[#allocation2 + $0x100] sm:$0xff] %vm272, 0.0
        %306 = vst.msk [vmem:[#allocation2 + $0x108] sm:$0xff] %vm272, 0.0
        %307 = vst.msk [vmem:[#allocation2 + $0x110] sm:$0xff] %vm272, 0.0
        %308 = vst.msk [vmem:[#allocation2 + $0x118] sm:$0xff] %vm272, 0.0
        %309 = vst.msk [vmem:[#allocation2 + $0x120] sm:$0xff] %vm272, 0.0
        %310 = vst.msk [vmem:[#allocation2 + $0x128] sm:$0xff] %vm272, 0.0
        %311 = vst.msk [vmem:[#allocation2 + $0x130] sm:$0xff] %vm272, 0.0
        %312 = vst.msk [vmem:[#allocation2 + $0x138] sm:$0xff] %vm272, 0.0
        %313 = vst.msk [vmem:[#allocation2 + $0x140] sm:$0xff] %vm272, 0.0
        %314 = vst.msk [vmem:[#allocation2 + $0x148] sm:$0xff] %vm272, 0.0
        %315 = vst.msk [vmem:[#allocation2 + $0x150] sm:$0xff] %vm272, 0.0
        %316 = vst.msk [vmem:[#allocation2 + $0x158] sm:$0xff] %vm272, 0.0
        %317 = vst.msk [vmem:[#allocation2 + $0x160] sm:$0xff] %vm272, 0.0
        %318 = vst.msk [vmem:[#allocation2 + $0x168] sm:$0xff] %vm272, 0.0
        %319 = vst.msk [vmem:[#allocation2 + $0x170] sm:$0xff] %vm272, 0.0
        %320 = vst.msk [vmem:[#allocation2 + $0x178] sm:$0xff] %vm272, 0.0
        %321 = vst.msk [vmem:[#allocation2 + $0x180] sm:$0xff] %vm272, 0.0
        %322 = vst.msk [vmem:[#allocation2 + $0x188] sm:$0xff] %vm272, 0.0
        %323 = vst.msk [vmem:[#allocation2 + $0x190] sm:$0xff] %vm272, 0.0
        %324 = vst.msk [vmem:[#allocation2 + $0x198] sm:$0xff] %vm272, 0.0
        %325 = vst.msk [vmem:[#allocation2 + $0x1a0] sm:$0xff] %vm272, 0.0
        %326 = vst.msk [vmem:[#allocation2 + $0x1a8] sm:$0xff] %vm272, 0.0
        %327 = vst.msk [vmem:[#allocation2 + $0x1b0] sm:$0xff] %vm272, 0.0
        %328 = vst.msk [vmem:[#allocation2 + $0x1b8] sm:$0xff] %vm272, 0.0
        %329 = vst.msk [vmem:[#allocation2 + $0x1c0] sm:$0xff] %vm272, 0.0
        %330 = vst.msk [vmem:[#allocation2 + $0x1c8] sm:$0xff] %vm272, 0.0
        %331 = vst.msk [vmem:[#allocation2 + $0x1d0] sm:$0xff] %vm272, 0.0
        %332 = vst.msk [vmem:[#allocation2 + $0x1d8] sm:$0xff] %vm272, 0.0
        %333 = vst.msk [vmem:[#allocation2 + $0x1e0] sm:$0xff] %vm272, 0.0
        %334 = vst.msk [vmem:[#allocation2 + $0x1e8] sm:$0xff] %vm272, 0.0
        %335 = vst.msk [vmem:[#allocation2 + $0x1f0] sm:$0xff] %vm272, 0.0
        %336 = vst.msk [vmem:[#allocation2 + $0x1f8] sm:$0xff] %vm272, 0.0
        %337 = vst.msk [vmem:[#allocation2 + $0x200] sm:$0xff] %vm272, 0.0
        %338 = vst.msk [vmem:[#allocation2 + $0x208] sm:$0xff] %vm272, 0.0
        %339 = vst.msk [vmem:[#allocation2 + $0x210] sm:$0xff] %vm272, 0.0
        %340 = vst.msk [vmem:[#allocation2 + $0x218] sm:$0xff] %vm272, 0.0
        %341 = vst.msk [vmem:[#allocation2 + $0x220] sm:$0xff] %vm272, 0.0
        %342 = vst.msk [vmem:[#allocation2 + $0x228] sm:$0xff] %vm272, 0.0
        %343 = vst.msk [vmem:[#allocation2 + $0x230] sm:$0xff] %vm272, 0.0
        %344 = vst.msk [vmem:[#allocation2 + $0x238] sm:$0xff] %vm272, 0.0
        %s345 = scalar_lea.vmem [#allocation2], 32
        %346 = vst.msk [vmem:[%s345 + $0x8] sm:$0xff] %vm272, %v240
        %347 = vst.msk [vmem:[%s345 + $0x10] sm:$0xff] %vm272, %v241
        %348 = vst.msk [vmem:[%s345 + $0x28] sm:$0xff] %vm272, %v242
        %349 = vst.msk [vmem:[%s345 + $0x30] sm:$0xff] %vm272, %v243
        %350 = vst.msk [vmem:[%s345 + $0x48] sm:$0xff] %vm272, %v244
        %351 = vst.msk [vmem:[%s345 + $0x50] sm:$0xff] %vm272, %v245
        %352 = vst.msk [vmem:[%s345 + $0x68] sm:$0xff] %vm272, %v246
        %353 = vst.msk [vmem:[%s345 + $0x70] sm:$0xff] %vm272, %v247
        %354 = vst.msk [vmem:[%s345 + $0x88] sm:$0xff] %vm272, %v248
        %355 = vst.msk [vmem:[%s345 + $0x90] sm:$0xff] %vm272, %v249
        %356 = vst.msk [vmem:[%s345 + $0xa8] sm:$0xff] %vm272, %v250
        %357 = vst.msk [vmem:[%s345 + $0xb0] sm:$0xff] %vm272, %v251
        %358 = vst.msk [vmem:[%s345 + $0xc8] sm:$0xff] %vm272, %v252
        %359 = vst.msk [vmem:[%s345 + $0xd0] sm:$0xff] %vm272, %v253
        %360 = vst.msk [vmem:[%s345 + $0xe8] sm:$0xff] %vm272, %v254
        %361 = vst.msk [vmem:[%s345 + $0xf0] sm:$0xff] %vm272, %v255
        %362 = vst.msk [vmem:[%s345 + $0x108] sm:$0xff] %vm272, %v256
        %363 = vst.msk [vmem:[%s345 + $0x110] sm:$0xff] %vm272, %v257
        %364 = vst.msk [vmem:[%s345 + $0x128] sm:$0xff] %vm272, %v258
        %365 = vst.msk [vmem:[%s345 + $0x130] sm:$0xff] %vm272, %v259
        %366 = vst.msk [vmem:[%s345 + $0x148] sm:$0xff] %vm272, %v260
        %367 = vst.msk [vmem:[%s345 + $0x150] sm:$0xff] %vm272, %v261
        %368 = vst.msk [vmem:[%s345 + $0x168] sm:$0xff] %vm272, %v262
        %369 = vst.msk [vmem:[%s345 + $0x170] sm:$0xff] %vm272, %v263
        %370 = vst.msk [vmem:[%s345 + $0x188] sm:$0xff] %vm272, %v264
        %371 = vst.msk [vmem:[%s345 + $0x190] sm:$0xff] %vm272, %v265
        %372 = vst.msk [vmem:[%s345 + $0x1a8] sm:$0xff] %vm272, %v266
        %373 = vst.msk [vmem:[%s345 + $0x1b0] sm:$0xff] %vm272, %v267
        %374 = vst.msk [vmem:[%s345 + $0x1c8] sm:$0xff] %vm272, %v268
        %375 = vst.msk [vmem:[%s345 + $0x1d0] sm:$0xff] %vm272, %v269
        %376 = vst.msk [vmem:[%s345 + $0x1e8] sm:$0xff] %vm272, %v270
        %377 = vst.msk [vmem:[%s345 + $0x1f0] sm:$0xff] %vm272, %v271
        %v378 = vld [vmem:[#allocation2 + $0x7] sm:$0xff]
        %v379 = vld [vmem:[#allocation2 + $0xf] sm:$0xff]
        %v380 = vld [vmem:[#allocation2 + $0x27] sm:$0xff]
        %v381 = vld [vmem:[#allocation2 + $0x2f] sm:$0xff]
        %v382 = vld [vmem:[#allocation2 + $0x47] sm:$0xff]
        %v383 = vld [vmem:[#allocation2 + $0x4f] sm:$0xff]
        %v384 = vld [vmem:[#allocation2 + $0x67] sm:$0xff]
        %v385 = vld [vmem:[#allocation2 + $0x6f] sm:$0xff]
        %v386 = vld [vmem:[#allocation2 + $0x87] sm:$0xff]
        %v387 = vld [vmem:[#allocation2 + $0x8f] sm:$0xff]
        %v388 = vld [vmem:[#allocation2 + $0xa7] sm:$0xff]
        %v389 = vld [vmem:[#allocation2 + $0xaf] sm:$0xff]
        %v390 = vld [vmem:[#allocation2 + $0xc7] sm:$0xff]
        %v391 = vld [vmem:[#allocation2 + $0xcf] sm:$0xff]
        %v392 = vld [vmem:[#allocation2 + $0xe7] sm:$0xff]
        %v393 = vld [vmem:[#allocation2 + $0xef] sm:$0xff]
        %v394 = vld [vmem:[#allocation2 + $0x107] sm:$0xff]
        %v395 = vld [vmem:[#allocation2 + $0x10f] sm:$0xff]
        %v396 = vld [vmem:[#allocation2 + $0x127] sm:$0xff]
        %v397 = vld [vmem:[#allocation2 + $0x12f] sm:$0xff]
        %v398 = vld [vmem:[#allocation2 + $0x147] sm:$0xff]
        %v399 = vld [vmem:[#allocation2 + $0x14f] sm:$0xff]
        %v400 = vld [vmem:[#allocation2 + $0x167] sm:$0xff]
        %v401 = vld [vmem:[#allocation2 + $0x16f] sm:$0xff]
        %v402 = vld [vmem:[#allocation2 + $0x187] sm:$0xff]
        %v403 = vld [vmem:[#allocation2 + $0x18f] sm:$0xff]
        %v404 = vld [vmem:[#allocation2 + $0x1a7] sm:$0xff]
        %v405 = vld [vmem:[#allocation2 + $0x1af] sm:$0xff]
        %v406 = vld [vmem:[#allocation2 + $0x1c7] sm:$0xff]
        %v407 = vld [vmem:[#allocation2 + $0x1cf] sm:$0xff]
        %v408 = vld [vmem:[#allocation2 + $0x1e7] sm:$0xff]
        %v409 = vld [vmem:[#allocation2 + $0x1ef] sm:$0xff]
        %v410 = vld [vmem:[#allocation2 + $0x207] sm:$0xff]
        %v411 = vld [vmem:[#allocation2 + $0x20f] sm:$0xff]
        %v412 = vld [vmem:[#allocation2 + $0x227] sm:$0xff]
        %v413 = vld [vmem:[#allocation2 + $0x22f] sm:$0xff]
        %v414 = vpack.c.bf16 %v378, %v378
        %v415 = vpack.c.bf16 %v379, %v379
        %v416 = vpack.c.bf16 %v380, %v380
        %v417 = vpack.c.bf16 %v381, %v381
        %v418 = vpack.c.bf16 %v382, %v382
        %v419 = vpack.c.bf16 %v383, %v383
        %v420 = vpack.c.bf16 %v384, %v384
        %v421 = vpack.c.bf16 %v385, %v385
        %v422 = vpack.c.bf16 %v386, %v386
        %v423 = vpack.c.bf16 %v387, %v387
        %v424 = vpack.c.bf16 %v388, %v388
        %v425 = vpack.c.bf16 %v389, %v389
        %v426 = vpack.c.bf16 %v390, %v390
        %v427 = vpack.c.bf16 %v391, %v391
        %v428 = vpack.c.bf16 %v392, %v392
        %v429 = vpack.c.bf16 %v393, %v393
        %v430 = vpack.c.bf16 %v394, %v394
        %v431 = vpack.c.bf16 %v395, %v395
        %v432 = vpack.c.bf16 %v396, %v396
        %v433 = vpack.c.bf16 %v397, %v397
        %v434 = vpack.c.bf16 %v398, %v398
        %v435 = vpack.c.bf16 %v399, %v399
        %v436 = vpack.c.bf16 %v400, %v400
        %v437 = vpack.c.bf16 %v401, %v401
        %v438 = vpack.c.bf16 %v402, %v402
        %v439 = vpack.c.bf16 %v403, %v403
        %v440 = vpack.c.bf16 %v404, %v404
        %v441 = vpack.c.bf16 %v405, %v405
        %v442 = vpack.c.bf16 %v406, %v406
        %v443 = vpack.c.bf16 %v407, %v407
        %v444 = vpack.c.bf16 %v408, %v408
        %v445 = vpack.c.bf16 %v409, %v409
        %v446 = vpack.c.bf16 %v410, %v410
        %v447 = vpack.c.bf16 %v411, %v411
        %v448 = vpack.c.bf16 %v412, %v412
        %v449 = vpack.c.bf16 %v413, %v413
        %v450 = vld [vmem:[%s2] sm:$0x3]
        %s451 = scalar_lea.vmem %s2, 6
        %v452 = vld [vmem:[%s451] sm:$0x3]
        %v485 = vunpack.c.l.b16 %v416
        %v486 = vunpack.c.l.b16 %v417
        %v487 = vunpack.c.l.b16 %v418
        %v488 = vunpack.c.l.b16 %v419
        %v489 = vunpack.c.l.b16 %v420
        %v490 = vunpack.c.l.b16 %v421
        %v491 = vunpack.c.l.b16 %v422
        %v492 = vunpack.c.l.b16 %v423
        %v493 = vunpack.c.l.b16 %v424
        %v494 = vunpack.c.l.b16 %v425
        %v495 = vunpack.c.l.b16 %v426
        %v496 = vunpack.c.l.b16 %v427
        %v497 = vunpack.c.l.b16 %v428
        %v498 = vunpack.c.l.b16 %v429
        %v499 = vunpack.c.l.b16 %v430
        %v500 = vunpack.c.l.b16 %v431
        %v501 = vunpack.c.l.b16 %v432
        %v502 = vunpack.c.l.b16 %v433
        %v503 = vunpack.c.l.b16 %v434
        %v504 = vunpack.c.l.b16 %v435
        %v505 = vunpack.c.l.b16 %v436
        %v506 = vunpack.c.l.b16 %v437
        %v507 = vunpack.c.l.b16 %v438
        %v508 = vunpack.c.l.b16 %v439
        %v509 = vunpack.c.l.b16 %v440
        %v510 = vunpack.c.l.b16 %v441
        %v511 = vunpack.c.l.b16 %v442
        %v512 = vunpack.c.l.b16 %v443
        %v513 = vunpack.c.l.b16 %v444
        %v514 = vunpack.c.l.b16 %v445
        %v515 = vunpack.c.l.b16 %v446
        %v516 = vunpack.c.l.b16 %v447
        %v517 = vpack.c.b16 %v486, %v485
        %v518 = vpack.c.b16 %v488, %v487
        %v519 = vpack.c.b16 %v490, %v489
        %v520 = vpack.c.b16 %v492, %v491
        %v521 = vpack.c.b16 %v494, %v493
        %v522 = vpack.c.b16 %v496, %v495
        %v523 = vpack.c.b16 %v498, %v497
        %v524 = vpack.c.b16 %v500, %v499
        %v525 = vpack.c.b16 %v502, %v501
        %v526 = vpack.c.b16 %v504, %v503
        %v527 = vpack.c.b16 %v506, %v505
        %v528 = vpack.c.b16 %v508, %v507
        %v529 = vpack.c.b16 %v510, %v509
        %v530 = vpack.c.b16 %v512, %v511
        %v531 = vpack.c.b16 %v514, %v513
        %v532 = vpack.c.b16 %v516, %v515
        %v534 = vsel %vm272, %v517, 0
        %v537 = vsel %vm272, %v518, 0
        %v540 = vsel %vm272, %v519, 0
        %v543 = vsel %vm272, %v520, 0
        %v546 = vsel %vm272, %v521, 0
        %v549 = vsel %vm272, %v522, 0
        %v552 = vsel %vm272, %v523, 0
        %v555 = vsel %vm272, %v524, 0
        %v558 = vsel %vm272, %v525, 0
        %v561 = vsel %vm272, %v526, 0
        %v564 = vsel %vm272, %v527, 0
        %v567 = vsel %vm272, %v528, 0
        %v570 = vsel %vm272, %v529, 0
        %v573 = vsel %vm272, %v530, 0
        %v576 = vsel %vm272, %v531, 0
        %v579 = vsel %vm272, %v532, 0
        %vm581 = vcmask 1041408
        %v583 = vsel %vm581, %v452, 0
        %585 = vmatpush.bf16.msra.mxu0 0
        %586 = vmatpush.bf16.msra.mxu0 0
        %587 = vmatpush.bf16.msra.mxu0 0
        %588 = vmatpush.bf16.msra.mxu0 0
        %589 = vmatpush.bf16.msra.mxu0 0
        %590 = vmatpush.bf16.msra.mxu0 0
        %591 = vmatpush.bf16.msra.mxu0 0
        %592 = vmatpush.bf16.msra.mxu0 %v583
        %593 = vmatmul.bf16.gmra.mxu0 %v534
        %v594 = vpop.f32.mrf.mxu0
        %v595 = vadd.f32 0.0, %v594
        %v596 = vpop.f32.mrf.mxu0
        %v597 = vadd.f32 0.0, %v596
        %598 = vmatmul.bf16.gmra.mxu0 %v537
        %v599 = vpop.f32.mrf.mxu0
        %v600 = vadd.f32 0.0, %v599
        %v601 = vpop.f32.mrf.mxu0
        %v602 = vadd.f32 0.0, %v601
        %603 = vmatmul.bf16.gmra.mxu0 %v540
        %v604 = vpop.f32.mrf.mxu0
        %v605 = vadd.f32 0.0, %v604
        %v606 = vpop.f32.mrf.mxu0
        %v607 = vadd.f32 0.0, %v606
        %608 = vmatmul.bf16.gmra.mxu0 %v543
        %v609 = vpop.f32.mrf.mxu0
        %v610 = vadd.f32 0.0, %v609
        %v611 = vpop.f32.mrf.mxu0
        %v612 = vadd.f32 0.0, %v611
        %613 = vmatmul.bf16.gmra.mxu0 %v546
        %v614 = vpop.f32.mrf.mxu0
        %v615 = vadd.f32 0.0, %v614
        %v616 = vpop.f32.mrf.mxu0
        %v617 = vadd.f32 0.0, %v616
        %618 = vmatmul.bf16.gmra.mxu0 %v549
        %v619 = vpop.f32.mrf.mxu0
        %v620 = vadd.f32 0.0, %v619
        %v621 = vpop.f32.mrf.mxu0
        %v622 = vadd.f32 0.0, %v621
        %623 = vmatmul.bf16.gmra.mxu0 %v552
        %v624 = vpop.f32.mrf.mxu0
        %v625 = vadd.f32 0.0, %v624
        %v626 = vpop.f32.mrf.mxu0
        %v627 = vadd.f32 0.0, %v626
        %628 = vmatmul.bf16.gmra.mxu0 %v555
        %v629 = vpop.f32.mrf.mxu0
        %v630 = vadd.f32 0.0, %v629
        %v631 = vpop.f32.mrf.mxu0
        %v632 = vadd.f32 0.0, %v631
        %633 = vmatmul.bf16.gmra.mxu0 %v558
        %v634 = vpop.f32.mrf.mxu0
        %v635 = vadd.f32 0.0, %v634
        %v636 = vpop.f32.mrf.mxu0
        %v637 = vadd.f32 0.0, %v636
        %638 = vmatmul.bf16.gmra.mxu0 %v561
        %v639 = vpop.f32.mrf.mxu0
        %v640 = vadd.f32 0.0, %v639
        %v641 = vpop.f32.mrf.mxu0
        %v642 = vadd.f32 0.0, %v641
        %643 = vmatmul.bf16.gmra.mxu0 %v564
        %v644 = vpop.f32.mrf.mxu0
        %v645 = vadd.f32 0.0, %v644
        %v646 = vpop.f32.mrf.mxu0
        %v647 = vadd.f32 0.0, %v646
        %648 = vmatmul.bf16.gmra.mxu0 %v567
        %v649 = vpop.f32.mrf.mxu0
        %v650 = vadd.f32 0.0, %v649
        %v651 = vpop.f32.mrf.mxu0
        %v652 = vadd.f32 0.0, %v651
        %653 = vmatmul.bf16.gmra.mxu0 %v570
        %v654 = vpop.f32.mrf.mxu0
        %v655 = vadd.f32 0.0, %v654
        %v656 = vpop.f32.mrf.mxu0
        %v657 = vadd.f32 0.0, %v656
        %658 = vmatmul.bf16.gmra.mxu0 %v573
        %v659 = vpop.f32.mrf.mxu0
        %v660 = vadd.f32 0.0, %v659
        %v661 = vpop.f32.mrf.mxu0
        %v662 = vadd.f32 0.0, %v661
        %663 = vmatmul.bf16.gmra.mxu0 %v576
        %v664 = vpop.f32.mrf.mxu0
        %v665 = vadd.f32 0.0, %v664
        %v666 = vpop.f32.mrf.mxu0
        %v667 = vadd.f32 0.0, %v666
        %668 = vmatmul.bf16.gmra.mxu0 %v579
        %v669 = vpop.f32.mrf.mxu0
        %v670 = vadd.f32 0.0, %v669
        %v671 = vpop.f32.mrf.mxu0
        %v672 = vadd.f32 0.0, %v671
        %673 = vdwg.mxu0
        %v676 = vunpack.c.l.b16 %v414
        %v677 = vunpack.c.l.b16 %v415
        %v678 = vpack.c.b16 %v677, %v676
        %v680 = vsel %vm272, %v678, 0
        %v683 = vsel %vm581, %v450, 0
        %685 = vmatpush.bf16.msra.mxu0 0
        %686 = vmatpush.bf16.msra.mxu0 0
        %687 = vmatpush.bf16.msra.mxu0 0
        %688 = vmatpush.bf16.msra.mxu0 0
        %689 = vmatpush.bf16.msra.mxu0 0
        %690 = vmatpush.bf16.msra.mxu0 0
        %691 = vmatpush.bf16.msra.mxu0 0
        %692 = vmatpush.bf16.msra.mxu0 %v683
        %693 = vmatmul.bf16.gmra.mxu0 %v680
        %v694 = vpop.f32.mrf.mxu0
        %v695 = vadd.f32 %v595, %v694
        %v696 = vpop.f32.mrf.mxu0
        %v697 = vadd.f32 %v597, %v696
        %698 = vmatmul.bf16.gmra.mxu0 %v534
        %v699 = vpop.f32.mrf.mxu0
        %v700 = vadd.f32 %v600, %v699
        %v701 = vpop.f32.mrf.mxu0
        %v702 = vadd.f32 %v602, %v701
        %703 = vmatmul.bf16.gmra.mxu0 %v537
        %v704 = vpop.f32.mrf.mxu0
        %v705 = vadd.f32 %v605, %v704
        %v706 = vpop.f32.mrf.mxu0
        %v707 = vadd.f32 %v607, %v706
        %708 = vmatmul.bf16.gmra.mxu0 %v540
        %v709 = vpop.f32.mrf.mxu0
        %v710 = vadd.f32 %v610, %v709
        %v711 = vpop.f32.mrf.mxu0
        %v712 = vadd.f32 %v612, %v711
        %713 = vmatmul.bf16.gmra.mxu0 %v543
        %v714 = vpop.f32.mrf.mxu0
        %v715 = vadd.f32 %v615, %v714
        %v716 = vpop.f32.mrf.mxu0
        %v717 = vadd.f32 %v617, %v716
        %718 = vmatmul.bf16.gmra.mxu0 %v546
        %v719 = vpop.f32.mrf.mxu0
        %v720 = vadd.f32 %v620, %v719
        %v721 = vpop.f32.mrf.mxu0
        %v722 = vadd.f32 %v622, %v721
        %723 = vmatmul.bf16.gmra.mxu0 %v549
        %v724 = vpop.f32.mrf.mxu0
        %v725 = vadd.f32 %v625, %v724
        %v726 = vpop.f32.mrf.mxu0
        %v727 = vadd.f32 %v627, %v726
        %728 = vmatmul.bf16.gmra.mxu0 %v552
        %v729 = vpop.f32.mrf.mxu0
        %v730 = vadd.f32 %v630, %v729
        %v731 = vpop.f32.mrf.mxu0
        %v732 = vadd.f32 %v632, %v731
        %733 = vmatmul.bf16.gmra.mxu0 %v555
        %v734 = vpop.f32.mrf.mxu0
        %v735 = vadd.f32 %v635, %v734
        %v736 = vpop.f32.mrf.mxu0
        %v737 = vadd.f32 %v637, %v736
        %738 = vmatmul.bf16.gmra.mxu0 %v558
        %v739 = vpop.f32.mrf.mxu0
        %v740 = vadd.f32 %v640, %v739
        %v741 = vpop.f32.mrf.mxu0
        %v742 = vadd.f32 %v642, %v741
        %743 = vmatmul.bf16.gmra.mxu0 %v561
        %v744 = vpop.f32.mrf.mxu0
        %v745 = vadd.f32 %v645, %v744
        %v746 = vpop.f32.mrf.mxu0
        %v747 = vadd.f32 %v647, %v746
        %748 = vmatmul.bf16.gmra.mxu0 %v564
        %v749 = vpop.f32.mrf.mxu0
        %v750 = vadd.f32 %v650, %v749
        %v751 = vpop.f32.mrf.mxu0
        %v752 = vadd.f32 %v652, %v751
        %753 = vmatmul.bf16.gmra.mxu0 %v567
        %v754 = vpop.f32.mrf.mxu0
        %v755 = vadd.f32 %v655, %v754
        %v756 = vpop.f32.mrf.mxu0
        %v757 = vadd.f32 %v657, %v756
        %758 = vmatmul.bf16.gmra.mxu0 %v570
        %v759 = vpop.f32.mrf.mxu0
        %v760 = vadd.f32 %v660, %v759
        %v761 = vpop.f32.mrf.mxu0
        %v762 = vadd.f32 %v662, %v761
        %763 = vmatmul.bf16.gmra.mxu0 %v573
        %v764 = vpop.f32.mrf.mxu0
        %v765 = vadd.f32 %v665, %v764
        %v766 = vpop.f32.mrf.mxu0
        %v767 = vadd.f32 %v667, %v766
        %768 = vmatmul.bf16.gmra.mxu0 %v576
        %v769 = vpop.f32.mrf.mxu0
        %v770 = vadd.f32 %v670, %v769
        %v771 = vpop.f32.mrf.mxu0
        %v772 = vadd.f32 %v672, %v771
        %773 = vdwg.mxu0
        %s774 = scalar_lea.vmem %s2, 12
        %v775 = vld [vmem:[%s774] sm:$0x3]
        %v778 = vunpack.c.l.b16 %v448
        %v779 = vunpack.c.l.b16 %v449
        %v780 = vpack.c.b16 %v779, %v778
        %v782 = vsel %vm272, %v780, 0
        %v785 = vsel %vm581, %v775, 0
        %787 = vmatpush.bf16.msra.mxu0 0
        %788 = vmatpush.bf16.msra.mxu0 0
        %789 = vmatpush.bf16.msra.mxu0 0
        %790 = vmatpush.bf16.msra.mxu0 0
        %791 = vmatpush.bf16.msra.mxu0 0
        %792 = vmatpush.bf16.msra.mxu0 0
        %793 = vmatpush.bf16.msra.mxu0 0
        %794 = vmatpush.bf16.msra.mxu0 %v785
        %795 = vmatmul.bf16.gmra.mxu0 %v537
        %v796 = vpop.f32.mrf.mxu0
        %v797 = vadd.f32 0.0, %v796
        %v798 = vpop.f32.mrf.mxu0
        %v799 = vadd.f32 0.0, %v798
        %800 = vmatmul.bf16.gmra.mxu0 %v540
        %v801 = vpop.f32.mrf.mxu0
        %v802 = vadd.f32 0.0, %v801
        %v803 = vpop.f32.mrf.mxu0
        %v804 = vadd.f32 0.0, %v803
        %805 = vmatmul.bf16.gmra.mxu0 %v543
        %v806 = vpop.f32.mrf.mxu0
        %v807 = vadd.f32 0.0, %v806
        %v808 = vpop.f32.mrf.mxu0
        %v809 = vadd.f32 0.0, %v808
        %810 = vmatmul.bf16.gmra.mxu0 %v546
        %v811 = vpop.f32.mrf.mxu0
        %v812 = vadd.f32 0.0, %v811
        %v813 = vpop.f32.mrf.mxu0
        %v814 = vadd.f32 0.0, %v813
        %815 = vmatmul.bf16.gmra.mxu0 %v549
        %v816 = vpop.f32.mrf.mxu0
        %v817 = vadd.f32 0.0, %v816
        %v818 = vpop.f32.mrf.mxu0
        %v819 = vadd.f32 0.0, %v818
        %820 = vmatmul.bf16.gmra.mxu0 %v552
        %v821 = vpop.f32.mrf.mxu0
        %v822 = vadd.f32 0.0, %v821
        %v823 = vpop.f32.mrf.mxu0
        %v824 = vadd.f32 0.0, %v823
        %825 = vmatmul.bf16.gmra.mxu0 %v555
        %v826 = vpop.f32.mrf.mxu0
        %v827 = vadd.f32 0.0, %v826
        %v828 = vpop.f32.mrf.mxu0
        %v829 = vadd.f32 0.0, %v828
        %830 = vmatmul.bf16.gmra.mxu0 %v558
        %v831 = vpop.f32.mrf.mxu0
        %v832 = vadd.f32 0.0, %v831
        %v833 = vpop.f32.mrf.mxu0
        %v834 = vadd.f32 0.0, %v833
        %835 = vmatmul.bf16.gmra.mxu0 %v561
        %v836 = vpop.f32.mrf.mxu0
        %v837 = vadd.f32 0.0, %v836
        %v838 = vpop.f32.mrf.mxu0
        %v839 = vadd.f32 0.0, %v838
        %840 = vmatmul.bf16.gmra.mxu0 %v564
        %v841 = vpop.f32.mrf.mxu0
        %v842 = vadd.f32 0.0, %v841
        %v843 = vpop.f32.mrf.mxu0
        %v844 = vadd.f32 0.0, %v843
        %845 = vmatmul.bf16.gmra.mxu0 %v567
        %v846 = vpop.f32.mrf.mxu0
        %v847 = vadd.f32 0.0, %v846
        %v848 = vpop.f32.mrf.mxu0
        %v849 = vadd.f32 0.0, %v848
        %850 = vmatmul.bf16.gmra.mxu0 %v570
        %v851 = vpop.f32.mrf.mxu0
        %v852 = vadd.f32 0.0, %v851
        %v853 = vpop.f32.mrf.mxu0
        %v854 = vadd.f32 0.0, %v853
        %855 = vmatmul.bf16.gmra.mxu0 %v573
        %v856 = vpop.f32.mrf.mxu0
        %v857 = vadd.f32 0.0, %v856
        %v858 = vpop.f32.mrf.mxu0
        %v859 = vadd.f32 0.0, %v858
        %860 = vmatmul.bf16.gmra.mxu0 %v576
        %v861 = vpop.f32.mrf.mxu0
        %v862 = vadd.f32 0.0, %v861
        %v863 = vpop.f32.mrf.mxu0
        %v864 = vadd.f32 0.0, %v863
        %865 = vmatmul.bf16.gmra.mxu0 %v579
        %v866 = vpop.f32.mrf.mxu0
        %v867 = vadd.f32 0.0, %v866
        %v868 = vpop.f32.mrf.mxu0
        %v869 = vadd.f32 0.0, %v868
        %870 = vmatmul.bf16.gmra.mxu0 %v782
        %v871 = vpop.f32.mrf.mxu0
        %v872 = vadd.f32 0.0, %v871
        %v873 = vpop.f32.mrf.mxu0
        %v874 = vadd.f32 0.0, %v873
        %875 = vdwg.mxu0
        %v876 = vadd.f32 %v695, %v797
        %v877 = vadd.f32 %v697, %v799
        %v878 = vadd.f32 %v700, %v802
        %v879 = vadd.f32 %v702, %v804
        %v880 = vadd.f32 %v705, %v807
        %v881 = vadd.f32 %v707, %v809
        %v882 = vadd.f32 %v710, %v812
        %v883 = vadd.f32 %v712, %v814
        %v884 = vadd.f32 %v715, %v817
        %v885 = vadd.f32 %v717, %v819
        %v886 = vadd.f32 %v720, %v822
        %v887 = vadd.f32 %v722, %v824
        %v888 = vadd.f32 %v725, %v827
        %v889 = vadd.f32 %v727, %v829
        %v890 = vadd.f32 %v730, %v832
        %v891 = vadd.f32 %v732, %v834
        %v892 = vadd.f32 %v735, %v837
        %v893 = vadd.f32 %v737, %v839
        %v894 = vadd.f32 %v740, %v842
        %v895 = vadd.f32 %v742, %v844
        %v896 = vadd.f32 %v745, %v847
        %v897 = vadd.f32 %v747, %v849
        %v898 = vadd.f32 %v750, %v852
        %v899 = vadd.f32 %v752, %v854
        %v900 = vadd.f32 %v755, %v857
        %v901 = vadd.f32 %v757, %v859
        %v902 = vadd.f32 %v760, %v862
        %v903 = vadd.f32 %v762, %v864
        %v904 = vadd.f32 %v765, %v867
        %v905 = vadd.f32 %v767, %v869
        %v906 = vadd.f32 %v770, %v872
        %v907 = vadd.f32 %v772, %v874
        %v908 = vld [vmem:[#allocation2 + $0x8] sm:$0xff]
        %v909 = vld [vmem:[#allocation2 + $0x10] sm:$0xff]
        %v910 = vld [vmem:[#allocation2 + $0x28] sm:$0xff]
        %v911 = vld [vmem:[#allocation2 + $0x30] sm:$0xff]
        %v912 = vld [vmem:[#allocation2 + $0x48] sm:$0xff]
        %v913 = vld [vmem:[#allocation2 + $0x50] sm:$0xff]
        %v914 = vld [vmem:[#allocation2 + $0x68] sm:$0xff]
        %v915 = vld [vmem:[#allocation2 + $0x70] sm:$0xff]
        %v916 = vld [vmem:[#allocation2 + $0x88] sm:$0xff]
        %v917 = vld [vmem:[#allocation2 + $0x90] sm:$0xff]
        %v918 = vld [vmem:[#allocation2 + $0xa8] sm:$0xff]
        %v919 = vld [vmem:[#allocation2 + $0xb0] sm:$0xff]
        %v920 = vld [vmem:[#allocation2 + $0xc8] sm:$0xff]
        %v921 = vld [vmem:[#allocation2 + $0xd0] sm:$0xff]
        %v922 = vld [vmem:[#allocation2 + $0xe8] sm:$0xff]
        %v923 = vld [vmem:[#allocation2 + $0xf0] sm:$0xff]
        %v924 = vld [vmem:[#allocation2 + $0x108] sm:$0xff]
        %v925 = vld [vmem:[#allocation2 + $0x110] sm:$0xff]
        %v926 = vld [vmem:[#allocation2 + $0x128] sm:$0xff]
        %v927 = vld [vmem:[#allocation2 + $0x130] sm:$0xff]
        %v928 = vld [vmem:[#allocation2 + $0x148] sm:$0xff]
        %v929 = vld [vmem:[#allocation2 + $0x150] sm:$0xff]
        %v930 = vld [vmem:[#allocation2 + $0x168] sm:$0xff]
        %v931 = vld [vmem:[#allocation2 + $0x170] sm:$0xff]
        %v932 = vld [vmem:[#allocation2 + $0x188] sm:$0xff]
        %v933 = vld [vmem:[#allocation2 + $0x190] sm:$0xff]
        %v934 = vld [vmem:[#allocation2 + $0x1a8] sm:$0xff]
        %v935 = vld [vmem:[#allocation2 + $0x1b0] sm:$0xff]
        %v936 = vld [vmem:[#allocation2 + $0x1c8] sm:$0xff]
        %v937 = vld [vmem:[#allocation2 + $0x1d0] sm:$0xff]
        %v938 = vld [vmem:[#allocation2 + $0x1e8] sm:$0xff]
        %v939 = vld [vmem:[#allocation2 + $0x1f0] sm:$0xff]
        %v940 = vld [vmem:[#allocation2 + $0x208] sm:$0xff]
        %v941 = vld [vmem:[#allocation2 + $0x210] sm:$0xff]
        %v942 = vld [vmem:[#allocation2 + $0x228] sm:$0xff]
        %v943 = vld [vmem:[#allocation2 + $0x230] sm:$0xff]
        %v944 = vpack.c.bf16 %v908, %v908
        %v945 = vpack.c.bf16 %v909, %v909
        %v946 = vpack.c.bf16 %v910, %v910
        %v947 = vpack.c.bf16 %v911, %v911
        %v948 = vpack.c.bf16 %v912, %v912
        %v949 = vpack.c.bf16 %v913, %v913
        %v950 = vpack.c.bf16 %v914, %v914
        %v951 = vpack.c.bf16 %v915, %v915
        %v952 = vpack.c.bf16 %v916, %v916
        %v953 = vpack.c.bf16 %v917, %v917
        %v954 = vpack.c.bf16 %v918, %v918
        %v955 = vpack.c.bf16 %v919, %v919
        %v956 = vpack.c.bf16 %v920, %v920
        %v957 = vpack.c.bf16 %v921, %v921
        %v958 = vpack.c.bf16 %v922, %v922
        %v959 = vpack.c.bf16 %v923, %v923
        %v960 = vpack.c.bf16 %v924, %v924
        %v961 = vpack.c.bf16 %v925, %v925
        %v962 = vpack.c.bf16 %v926, %v926
        %v963 = vpack.c.bf16 %v927, %v927
        %v964 = vpack.c.bf16 %v928, %v928
        %v965 = vpack.c.bf16 %v929, %v929
        %v966 = vpack.c.bf16 %v930, %v930
        %v967 = vpack.c.bf16 %v931, %v931
        %v968 = vpack.c.bf16 %v932, %v932
        %v969 = vpack.c.bf16 %v933, %v933
        %v970 = vpack.c.bf16 %v934, %v934
        %v971 = vpack.c.bf16 %v935, %v935
        %v972 = vpack.c.bf16 %v936, %v936
        %v973 = vpack.c.bf16 %v937, %v937
        %v974 = vpack.c.bf16 %v938, %v938
        %v975 = vpack.c.bf16 %v939, %v939
        %v976 = vpack.c.bf16 %v940, %v940
        %v977 = vpack.c.bf16 %v941, %v941
        %v978 = vpack.c.bf16 %v942, %v942
        %v979 = vpack.c.bf16 %v943, %v943
        %s980 = scalar_lea.vmem %s2, 2
        %v981 = vld [vmem:[%s980] sm:$0x3]
        %v1014 = vunpack.c.l.b16 %v944
        %v1015 = vunpack.c.l.b16 %v945
        %v1016 = vunpack.c.l.b16 %v946
        %v1017 = vunpack.c.l.b16 %v947
        %v1018 = vunpack.c.l.b16 %v948
        %v1019 = vunpack.c.l.b16 %v949
        %v1020 = vunpack.c.l.b16 %v950
        %v1021 = vunpack.c.l.b16 %v951
        %v1022 = vunpack.c.l.b16 %v952
        %v1023 = vunpack.c.l.b16 %v953
        %v1024 = vunpack.c.l.b16 %v954
        %v1025 = vunpack.c.l.b16 %v955
        %v1026 = vunpack.c.l.b16 %v956
        %v1027 = vunpack.c.l.b16 %v957
        %v1028 = vunpack.c.l.b16 %v958
        %v1029 = vunpack.c.l.b16 %v959
        %v1030 = vunpack.c.l.b16 %v960
        %v1031 = vunpack.c.l.b16 %v961
        %v1032 = vunpack.c.l.b16 %v962
        %v1033 = vunpack.c.l.b16 %v963
        %v1034 = vunpack.c.l.b16 %v964
        %v1035 = vunpack.c.l.b16 %v965
        %v1036 = vunpack.c.l.b16 %v966
        %v1037 = vunpack.c.l.b16 %v967
        %v1038 = vunpack.c.l.b16 %v968
        %v1039 = vunpack.c.l.b16 %v969
        %v1040 = vunpack.c.l.b16 %v970
        %v1041 = vunpack.c.l.b16 %v971
        %v1042 = vunpack.c.l.b16 %v972
        %v1043 = vunpack.c.l.b16 %v973
        %v1044 = vunpack.c.l.b16 %v974
        %v1045 = vunpack.c.l.b16 %v975
        %v1046 = vpack.c.b16 %v1015, %v1014
        %v1047 = vpack.c.b16 %v1017, %v1016
        %v1048 = vpack.c.b16 %v1019, %v1018
        %v1049 = vpack.c.b16 %v1021, %v1020
        %v1050 = vpack.c.b16 %v1023, %v1022
        %v1051 = vpack.c.b16 %v1025, %v1024
        %v1052 = vpack.c.b16 %v1027, %v1026
        %v1053 = vpack.c.b16 %v1029, %v1028
        %v1054 = vpack.c.b16 %v1031, %v1030
        %v1055 = vpack.c.b16 %v1033, %v1032
        %v1056 = vpack.c.b16 %v1035, %v1034
        %v1057 = vpack.c.b16 %v1037, %v1036
        %v1058 = vpack.c.b16 %v1039, %v1038
        %v1059 = vpack.c.b16 %v1041, %v1040
        %v1060 = vpack.c.b16 %v1043, %v1042
        %v1061 = vpack.c.b16 %v1045, %v1044
        %v1063 = vsel %vm272, %v1046, 0
        %v1066 = vsel %vm272, %v1047, 0
        %v1069 = vsel %vm272, %v1048, 0
        %v1072 = vsel %vm272, %v1049, 0
        %v1075 = vsel %vm272, %v1050, 0
        %v1078 = vsel %vm272, %v1051, 0
        %v1081 = vsel %vm272, %v1052, 0
        %v1084 = vsel %vm272, %v1053, 0
        %v1087 = vsel %vm272, %v1054, 0
        %v1090 = vsel %vm272, %v1055, 0
        %v1093 = vsel %vm272, %v1056, 0
        %v1096 = vsel %vm272, %v1057, 0
        %v1099 = vsel %vm272, %v1058, 0
        %v1102 = vsel %vm272, %v1059, 0
        %v1105 = vsel %vm272, %v1060, 0
        %v1108 = vsel %vm272, %v1061, 0
        %v1111 = vsel %vm581, %v981, 0
        %1113 = vmatpush.bf16.msra.mxu0 0
        %1114 = vmatpush.bf16.msra.mxu0 0
        %1115 = vmatpush.bf16.msra.mxu0 0
        %1116 = vmatpush.bf16.msra.mxu0 0
        %1117 = vmatpush.bf16.msra.mxu0 0
        %1118 = vmatpush.bf16.msra.mxu0 0
        %1119 = vmatpush.bf16.msra.mxu0 0
        %1120 = vmatpush.bf16.msra.mxu0 %v1111
        %1121 = vmatmul.bf16.gmra.mxu0 %v1063
        %v1122 = vpop.f32.mrf.mxu0
        %v1123 = vadd.f32 0.0, %v1122
        %v1124 = vpop.f32.mrf.mxu0
        %v1125 = vadd.f32 0.0, %v1124
        %1126 = vmatmul.bf16.gmra.mxu0 %v1066
        %v1127 = vpop.f32.mrf.mxu0
        %v1128 = vadd.f32 0.0, %v1127
        %v1129 = vpop.f32.mrf.mxu0
        %v1130 = vadd.f32 0.0, %v1129
        %1131 = vmatmul.bf16.gmra.mxu0 %v1069
        %v1132 = vpop.f32.mrf.mxu0
        %v1133 = vadd.f32 0.0, %v1132
        %v1134 = vpop.f32.mrf.mxu0
        %v1135 = vadd.f32 0.0, %v1134
        %1136 = vmatmul.bf16.gmra.mxu0 %v1072
        %v1137 = vpop.f32.mrf.mxu0
        %v1138 = vadd.f32 0.0, %v1137
        %v1139 = vpop.f32.mrf.mxu0
        %v1140 = vadd.f32 0.0, %v1139
        %1141 = vmatmul.bf16.gmra.mxu0 %v1075
        %v1142 = vpop.f32.mrf.mxu0
        %v1143 = vadd.f32 0.0, %v1142
        %v1144 = vpop.f32.mrf.mxu0
        %v1145 = vadd.f32 0.0, %v1144
        %1146 = vmatmul.bf16.gmra.mxu0 %v1078
        %v1147 = vpop.f32.mrf.mxu0
        %v1148 = vadd.f32 0.0, %v1147
        %v1149 = vpop.f32.mrf.mxu0
        %v1150 = vadd.f32 0.0, %v1149
        %1151 = vmatmul.bf16.gmra.mxu0 %v1081
        %v1152 = vpop.f32.mrf.mxu0
        %v1153 = vadd.f32 0.0, %v1152
        %v1154 = vpop.f32.mrf.mxu0
        %v1155 = vadd.f32 0.0, %v1154
        %1156 = vmatmul.bf16.gmra.mxu0 %v1084
        %v1157 = vpop.f32.mrf.mxu0
        %v1158 = vadd.f32 0.0, %v1157
        %v1159 = vpop.f32.mrf.mxu0
        %v1160 = vadd.f32 0.0, %v1159
        %1161 = vmatmul.bf16.gmra.mxu0 %v1087
        %v1162 = vpop.f32.mrf.mxu0
        %v1163 = vadd.f32 0.0, %v1162
        %v1164 = vpop.f32.mrf.mxu0
        %v1165 = vadd.f32 0.0, %v1164
        %1166 = vmatmul.bf16.gmra.mxu0 %v1090
        %v1167 = vpop.f32.mrf.mxu0
        %v1168 = vadd.f32 0.0, %v1167
        %v1169 = vpop.f32.mrf.mxu0
        %v1170 = vadd.f32 0.0, %v1169
        %1171 = vmatmul.bf16.gmra.mxu0 %v1093
        %v1172 = vpop.f32.mrf.mxu0
        %v1173 = vadd.f32 0.0, %v1172
        %v1174 = vpop.f32.mrf.mxu0
        %v1175 = vadd.f32 0.0, %v1174
        %1176 = vmatmul.bf16.gmra.mxu0 %v1096
        %v1177 = vpop.f32.mrf.mxu0
        %v1178 = vadd.f32 0.0, %v1177
        %v1179 = vpop.f32.mrf.mxu0
        %v1180 = vadd.f32 0.0, %v1179
        %1181 = vmatmul.bf16.gmra.mxu0 %v1099
        %v1182 = vpop.f32.mrf.mxu0
        %v1183 = vadd.f32 0.0, %v1182
        %v1184 = vpop.f32.mrf.mxu0
        %v1185 = vadd.f32 0.0, %v1184
        %1186 = vmatmul.bf16.gmra.mxu0 %v1102
        %v1187 = vpop.f32.mrf.mxu0
        %v1188 = vadd.f32 0.0, %v1187
        %v1189 = vpop.f32.mrf.mxu0
        %v1190 = vadd.f32 0.0, %v1189
        %1191 = vmatmul.bf16.gmra.mxu0 %v1105
        %v1192 = vpop.f32.mrf.mxu0
        %v1193 = vadd.f32 0.0, %v1192
        %v1194 = vpop.f32.mrf.mxu0
        %v1195 = vadd.f32 0.0, %v1194
        %1196 = vmatmul.bf16.gmra.mxu0 %v1108
        %v1197 = vpop.f32.mrf.mxu0
        %v1198 = vadd.f32 0.0, %v1197
        %v1199 = vpop.f32.mrf.mxu0
        %v1200 = vadd.f32 0.0, %v1199
        %1201 = vdwg.mxu0
        %v1202 = vadd.f32 %v876, %v1123
        %v1203 = vadd.f32 %v877, %v1125
        %v1204 = vadd.f32 %v878, %v1128
        %v1205 = vadd.f32 %v879, %v1130
        %v1206 = vadd.f32 %v880, %v1133
        %v1207 = vadd.f32 %v881, %v1135
        %v1208 = vadd.f32 %v882, %v1138
        %v1209 = vadd.f32 %v883, %v1140
        %v1210 = vadd.f32 %v884, %v1143
        %v1211 = vadd.f32 %v885, %v1145
        %v1212 = vadd.f32 %v886, %v1148
        %v1213 = vadd.f32 %v887, %v1150
        %v1214 = vadd.f32 %v888, %v1153
        %v1215 = vadd.f32 %v889, %v1155
        %v1216 = vadd.f32 %v890, %v1158
        %v1217 = vadd.f32 %v891, %v1160
        %v1218 = vadd.f32 %v892, %v1163
        %v1219 = vadd.f32 %v893, %v1165
        %v1220 = vadd.f32 %v894, %v1168
        %v1221 = vadd.f32 %v895, %v1170
        %v1222 = vadd.f32 %v896, %v1173
        %v1223 = vadd.f32 %v897, %v1175
        %v1224 = vadd.f32 %v898, %v1178
        %v1225 = vadd.f32 %v899, %v1180
        %v1226 = vadd.f32 %v900, %v1183
        %v1227 = vadd.f32 %v901, %v1185
        %v1228 = vadd.f32 %v902, %v1188
        %v1229 = vadd.f32 %v903, %v1190
        %v1230 = vadd.f32 %v904, %v1193
        %v1231 = vadd.f32 %v905, %v1195
        %v1232 = vadd.f32 %v906, %v1198
        %v1233 = vadd.f32 %v907, %v1200
        %s1234 = scalar_lea.vmem %s2, 8
        %v1235 = vld [vmem:[%s1234] sm:$0x3]
        %v1238 = vunpack.c.l.b16 %v976
        %v1239 = vunpack.c.l.b16 %v977
        %v1240 = vpack.c.b16 %v1239, %v1238
        %v1242 = vsel %vm272, %v1240, 0
        %v1245 = vsel %vm581, %v1235, 0
        %1247 = vmatpush.bf16.msra.mxu0 0
        %1248 = vmatpush.bf16.msra.mxu0 0
        %1249 = vmatpush.bf16.msra.mxu0 0
        %1250 = vmatpush.bf16.msra.mxu0 0
        %1251 = vmatpush.bf16.msra.mxu0 0
        %1252 = vmatpush.bf16.msra.mxu0 0
        %1253 = vmatpush.bf16.msra.mxu0 0
        %1254 = vmatpush.bf16.msra.mxu0 %v1245
        %1255 = vmatmul.bf16.gmra.mxu0 %v1066
        %v1256 = vpop.f32.mrf.mxu0
        %v1257 = vadd.f32 0.0, %v1256
        %v1258 = vpop.f32.mrf.mxu0
        %v1259 = vadd.f32 0.0, %v1258
        %1260 = vmatmul.bf16.gmra.mxu0 %v1069
        %v1261 = vpop.f32.mrf.mxu0
        %v1262 = vadd.f32 0.0, %v1261
        %v1263 = vpop.f32.mrf.mxu0
        %v1264 = vadd.f32 0.0, %v1263
        %1265 = vmatmul.bf16.gmra.mxu0 %v1072
        %v1266 = vpop.f32.mrf.mxu0
        %v1267 = vadd.f32 0.0, %v1266
        %v1268 = vpop.f32.mrf.mxu0
        %v1269 = vadd.f32 0.0, %v1268
        %1270 = vmatmul.bf16.gmra.mxu0 %v1075
        %v1271 = vpop.f32.mrf.mxu0
        %v1272 = vadd.f32 0.0, %v1271
        %v1273 = vpop.f32.mrf.mxu0
        %v1274 = vadd.f32 0.0, %v1273
        %1275 = vmatmul.bf16.gmra.mxu0 %v1078
        %v1276 = vpop.f32.mrf.mxu0
        %v1277 = vadd.f32 0.0, %v1276
        %v1278 = vpop.f32.mrf.mxu0
        %v1279 = vadd.f32 0.0, %v1278
        %1280 = vmatmul.bf16.gmra.mxu0 %v1081
        %v1281 = vpop.f32.mrf.mxu0
        %v1282 = vadd.f32 0.0, %v1281
        %v1283 = vpop.f32.mrf.mxu0
        %v1284 = vadd.f32 0.0, %v1283
        %1285 = vmatmul.bf16.gmra.mxu0 %v1084
        %v1286 = vpop.f32.mrf.mxu0
        %v1287 = vadd.f32 0.0, %v1286
        %v1288 = vpop.f32.mrf.mxu0
        %v1289 = vadd.f32 0.0, %v1288
        %1290 = vmatmul.bf16.gmra.mxu0 %v1087
        %v1291 = vpop.f32.mrf.mxu0
        %v1292 = vadd.f32 0.0, %v1291
        %v1293 = vpop.f32.mrf.mxu0
        %v1294 = vadd.f32 0.0, %v1293
        %1295 = vmatmul.bf16.gmra.mxu0 %v1090
        %v1296 = vpop.f32.mrf.mxu0
        %v1297 = vadd.f32 0.0, %v1296
        %v1298 = vpop.f32.mrf.mxu0
        %v1299 = vadd.f32 0.0, %v1298
        %1300 = vmatmul.bf16.gmra.mxu0 %v1093
        %v1301 = vpop.f32.mrf.mxu0
        %v1302 = vadd.f32 0.0, %v1301
        %v1303 = vpop.f32.mrf.mxu0
        %v1304 = vadd.f32 0.0, %v1303
        %1305 = vmatmul.bf16.gmra.mxu0 %v1096
        %v1306 = vpop.f32.mrf.mxu0
        %v1307 = vadd.f32 0.0, %v1306
        %v1308 = vpop.f32.mrf.mxu0
        %v1309 = vadd.f32 0.0, %v1308
        %1310 = vmatmul.bf16.gmra.mxu0 %v1099
        %v1311 = vpop.f32.mrf.mxu0
        %v1312 = vadd.f32 0.0, %v1311
        %v1313 = vpop.f32.mrf.mxu0
        %v1314 = vadd.f32 0.0, %v1313
        %1315 = vmatmul.bf16.gmra.mxu0 %v1102
        %v1316 = vpop.f32.mrf.mxu0
        %v1317 = vadd.f32 0.0, %v1316
        %v1318 = vpop.f32.mrf.mxu0
        %v1319 = vadd.f32 0.0, %v1318
        %1320 = vmatmul.bf16.gmra.mxu0 %v1105
        %v1321 = vpop.f32.mrf.mxu0
        %v1322 = vadd.f32 0.0, %v1321
        %v1323 = vpop.f32.mrf.mxu0
        %v1324 = vadd.f32 0.0, %v1323
        %1325 = vmatmul.bf16.gmra.mxu0 %v1108
        %v1326 = vpop.f32.mrf.mxu0
        %v1327 = vadd.f32 0.0, %v1326
        %v1328 = vpop.f32.mrf.mxu0
        %v1329 = vadd.f32 0.0, %v1328
        %1330 = vmatmul.bf16.gmra.mxu0 %v1242
        %v1331 = vpop.f32.mrf.mxu0
        %v1332 = vadd.f32 0.0, %v1331
        %v1333 = vpop.f32.mrf.mxu0
        %v1334 = vadd.f32 0.0, %v1333
        %1335 = vdwg.mxu0
        %v1336 = vadd.f32 %v1202, %v1257
        %v1337 = vadd.f32 %v1203, %v1259
        %v1338 = vadd.f32 %v1204, %v1262
        %v1339 = vadd.f32 %v1205, %v1264
        %v1340 = vadd.f32 %v1206, %v1267
        %v1341 = vadd.f32 %v1207, %v1269
        %v1342 = vadd.f32 %v1208, %v1272
        %v1343 = vadd.f32 %v1209, %v1274
        %v1344 = vadd.f32 %v1210, %v1277
        %v1345 = vadd.f32 %v1211, %v1279
        %v1346 = vadd.f32 %v1212, %v1282
        %v1347 = vadd.f32 %v1213, %v1284
        %v1348 = vadd.f32 %v1214, %v1287
        %v1349 = vadd.f32 %v1215, %v1289
        %v1350 = vadd.f32 %v1216, %v1292
        %v1351 = vadd.f32 %v1217, %v1294
        %v1352 = vadd.f32 %v1218, %v1297
        %v1353 = vadd.f32 %v1219, %v1299
        %v1354 = vadd.f32 %v1220, %v1302
        %v1355 = vadd.f32 %v1221, %v1304
        %v1356 = vadd.f32 %v1222, %v1307
        %v1357 = vadd.f32 %v1223, %v1309
        %v1358 = vadd.f32 %v1224, %v1312
        %v1359 = vadd.f32 %v1225, %v1314
        %v1360 = vadd.f32 %v1226, %v1317
        %v1361 = vadd.f32 %v1227, %v1319
        %v1362 = vadd.f32 %v1228, %v1322
        %v1363 = vadd.f32 %v1229, %v1324
        %v1364 = vadd.f32 %v1230, %v1327
        %v1365 = vadd.f32 %v1231, %v1329
        %v1366 = vadd.f32 %v1232, %v1332
        %v1367 = vadd.f32 %v1233, %v1334
        %s1368 = scalar_lea.vmem %s2, 14
        %v1369 = vld [vmem:[%s1368] sm:$0x3]
        %v1372 = vunpack.c.l.b16 %v978
        %v1373 = vunpack.c.l.b16 %v979
        %v1374 = vpack.c.b16 %v1373, %v1372
        %v1376 = vsel %vm272, %v1374, 0
        %v1379 = vsel %vm581, %v1369, 0
        %1381 = vmatpush.bf16.msra.mxu0 0
        %1382 = vmatpush.bf16.msra.mxu0 0
        %1383 = vmatpush.bf16.msra.mxu0 0
        %1384 = vmatpush.bf16.msra.mxu0 0
        %1385 = vmatpush.bf16.msra.mxu0 0
        %1386 = vmatpush.bf16.msra.mxu0 0
        %1387 = vmatpush.bf16.msra.mxu0 0
        %1388 = vmatpush.bf16.msra.mxu0 %v1379
        %1389 = vmatmul.bf16.gmra.mxu0 %v1069
        %v1390 = vpop.f32.mrf.mxu0
        %v1391 = vadd.f32 0.0, %v1390
        %v1392 = vpop.f32.mrf.mxu0
        %v1393 = vadd.f32 0.0, %v1392
        %1394 = vmatmul.bf16.gmra.mxu0 %v1072
        %v1395 = vpop.f32.mrf.mxu0
        %v1396 = vadd.f32 0.0, %v1395
        %v1397 = vpop.f32.mrf.mxu0
        %v1398 = vadd.f32 0.0, %v1397
        %1399 = vmatmul.bf16.gmra.mxu0 %v1075
        %v1400 = vpop.f32.mrf.mxu0
        %v1401 = vadd.f32 0.0, %v1400
        %v1402 = vpop.f32.mrf.mxu0
        %v1403 = vadd.f32 0.0, %v1402
        %1404 = vmatmul.bf16.gmra.mxu0 %v1078
        %v1405 = vpop.f32.mrf.mxu0
        %v1406 = vadd.f32 0.0, %v1405
        %v1407 = vpop.f32.mrf.mxu0
        %v1408 = vadd.f32 0.0, %v1407
        %1409 = vmatmul.bf16.gmra.mxu0 %v1081
        %v1410 = vpop.f32.mrf.mxu0
        %v1411 = vadd.f32 0.0, %v1410
        %v1412 = vpop.f32.mrf.mxu0
        %v1413 = vadd.f32 0.0, %v1412
        %1414 = vmatmul.bf16.gmra.mxu0 %v1084
        %v1415 = vpop.f32.mrf.mxu0
        %v1416 = vadd.f32 0.0, %v1415
        %v1417 = vpop.f32.mrf.mxu0
        %v1418 = vadd.f32 0.0, %v1417
        %1419 = vmatmul.bf16.gmra.mxu0 %v1087
        %v1420 = vpop.f32.mrf.mxu0
        %v1421 = vadd.f32 0.0, %v1420
        %v1422 = vpop.f32.mrf.mxu0
        %v1423 = vadd.f32 0.0, %v1422
        %1424 = vmatmul.bf16.gmra.mxu0 %v1090
        %v1425 = vpop.f32.mrf.mxu0
        %v1426 = vadd.f32 0.0, %v1425
        %v1427 = vpop.f32.mrf.mxu0
        %v1428 = vadd.f32 0.0, %v1427
        %1429 = vmatmul.bf16.gmra.mxu0 %v1093
        %v1430 = vpop.f32.mrf.mxu0
        %v1431 = vadd.f32 0.0, %v1430
        %v1432 = vpop.f32.mrf.mxu0
        %v1433 = vadd.f32 0.0, %v1432
        %1434 = vmatmul.bf16.gmra.mxu0 %v1096
        %v1435 = vpop.f32.mrf.mxu0
        %v1436 = vadd.f32 0.0, %v1435
        %v1437 = vpop.f32.mrf.mxu0
        %v1438 = vadd.f32 0.0, %v1437
        %1439 = vmatmul.bf16.gmra.mxu0 %v1099
        %v1440 = vpop.f32.mrf.mxu0
        %v1441 = vadd.f32 0.0, %v1440
        %v1442 = vpop.f32.mrf.mxu0
        %v1443 = vadd.f32 0.0, %v1442
        %1444 = vmatmul.bf16.gmra.mxu0 %v1102
        %v1445 = vpop.f32.mrf.mxu0
        %v1446 = vadd.f32 0.0, %v1445
        %v1447 = vpop.f32.mrf.mxu0
        %v1448 = vadd.f32 0.0, %v1447
        %1449 = vmatmul.bf16.gmra.mxu0 %v1105
        %v1450 = vpop.f32.mrf.mxu0
        %v1451 = vadd.f32 0.0, %v1450
        %v1452 = vpop.f32.mrf.mxu0
        %v1453 = vadd.f32 0.0, %v1452
        %1454 = vmatmul.bf16.gmra.mxu0 %v1108
        %v1455 = vpop.f32.mrf.mxu0
        %v1456 = vadd.f32 0.0, %v1455
        %v1457 = vpop.f32.mrf.mxu0
        %v1458 = vadd.f32 0.0, %v1457
        %1459 = vmatmul.bf16.gmra.mxu0 %v1242
        %v1460 = vpop.f32.mrf.mxu0
        %v1461 = vadd.f32 0.0, %v1460
        %v1462 = vpop.f32.mrf.mxu0
        %v1463 = vadd.f32 0.0, %v1462
        %1464 = vmatmul.bf16.gmra.mxu0 %v1376
        %v1465 = vpop.f32.mrf.mxu0
        %v1466 = vadd.f32 0.0, %v1465
        %v1467 = vpop.f32.mrf.mxu0
        %v1468 = vadd.f32 0.0, %v1467
        %1469 = vdwg.mxu0
        %v1470 = vadd.f32 %v1336, %v1391
        %v1471 = vadd.f32 %v1337, %v1393
        %v1472 = vadd.f32 %v1338, %v1396
        %v1473 = vadd.f32 %v1339, %v1398
        %v1474 = vadd.f32 %v1340, %v1401
        %v1475 = vadd.f32 %v1341, %v1403
        %v1476 = vadd.f32 %v1342, %v1406
        %v1477 = vadd.f32 %v1343, %v1408
        %v1478 = vadd.f32 %v1344, %v1411
        %v1479 = vadd.f32 %v1345, %v1413
        %v1480 = vadd.f32 %v1346, %v1416
        %v1481 = vadd.f32 %v1347, %v1418
        %v1482 = vadd.f32 %v1348, %v1421
        %v1483 = vadd.f32 %v1349, %v1423
        %v1484 = vadd.f32 %v1350, %v1426
        %v1485 = vadd.f32 %v1351, %v1428
        %v1486 = vadd.f32 %v1352, %v1431
        %v1487 = vadd.f32 %v1353, %v1433
        %v1488 = vadd.f32 %v1354, %v1436
        %v1489 = vadd.f32 %v1355, %v1438
        %v1490 = vadd.f32 %v1356, %v1441
        %v1491 = vadd.f32 %v1357, %v1443
        %v1492 = vadd.f32 %v1358, %v1446
        %v1493 = vadd.f32 %v1359, %v1448
        %v1494 = vadd.f32 %v1360, %v1451
        %v1495 = vadd.f32 %v1361, %v1453
        %v1496 = vadd.f32 %v1362, %v1456
        %v1497 = vadd.f32 %v1363, %v1458
        %v1498 = vadd.f32 %v1364, %v1461
        %v1499 = vadd.f32 %v1365, %v1463
        %v1500 = vadd.f32 %v1366, %v1466
        %v1501 = vadd.f32 %v1367, %v1468
        %v1502 = vld [vmem:[#allocation2 + $0x9] sm:$0xff]
        %v1503 = vld [vmem:[#allocation2 + $0x11] sm:$0xff]
        %v1504 = vld [vmem:[#allocation2 + $0x29] sm:$0xff]
        %v1505 = vld [vmem:[#allocation2 + $0x31] sm:$0xff]
        %v1506 = vld [vmem:[#allocation2 + $0x49] sm:$0xff]
        %v1507 = vld [vmem:[#allocation2 + $0x51] sm:$0xff]
        %v1508 = vld [vmem:[#allocation2 + $0x69] sm:$0xff]
        %v1509 = vld [vmem:[#allocation2 + $0x71] sm:$0xff]
        %v1510 = vld [vmem:[#allocation2 + $0x89] sm:$0xff]
        %v1511 = vld [vmem:[#allocation2 + $0x91] sm:$0xff]
        %v1512 = vld [vmem:[#allocation2 + $0xa9] sm:$0xff]
        %v1513 = vld [vmem:[#allocation2 + $0xb1] sm:$0xff]
        %v1514 = vld [vmem:[#allocation2 + $0xc9] sm:$0xff]
        %v1515 = vld [vmem:[#allocation2 + $0xd1] sm:$0xff]
        %v1516 = vld [vmem:[#allocation2 + $0xe9] sm:$0xff]
        %v1517 = vld [vmem:[#allocation2 + $0xf1] sm:$0xff]
        %v1518 = vld [vmem:[#allocation2 + $0x109] sm:$0xff]
        %v1519 = vld [vmem:[#allocation2 + $0x111] sm:$0xff]
        %v1520 = vld [vmem:[#allocation2 + $0x129] sm:$0xff]
        %v1521 = vld [vmem:[#allocation2 + $0x131] sm:$0xff]
        %v1522 = vld [vmem:[#allocation2 + $0x149] sm:$0xff]
        %v1523 = vld [vmem:[#allocation2 + $0x151] sm:$0xff]
        %v1524 = vld [vmem:[#allocation2 + $0x169] sm:$0xff]
        %v1525 = vld [vmem:[#allocation2 + $0x171] sm:$0xff]
        %v1526 = vld [vmem:[#allocation2 + $0x189] sm:$0xff]
        %v1527 = vld [vmem:[#allocation2 + $0x191] sm:$0xff]
        %v1528 = vld [vmem:[#allocation2 + $0x1a9] sm:$0xff]
        %v1529 = vld [vmem:[#allocation2 + $0x1b1] sm:$0xff]
        %v1530 = vld [vmem:[#allocation2 + $0x1c9] sm:$0xff]
        %v1531 = vld [vmem:[#allocation2 + $0x1d1] sm:$0xff]
        %v1532 = vld [vmem:[#allocation2 + $0x1e9] sm:$0xff]
        %v1533 = vld [vmem:[#allocation2 + $0x1f1] sm:$0xff]
        %v1534 = vld [vmem:[#allocation2 + $0x209] sm:$0xff]
        %v1535 = vld [vmem:[#allocation2 + $0x211] sm:$0xff]
        %v1536 = vld [vmem:[#allocation2 + $0x229] sm:$0xff]
        %v1537 = vld [vmem:[#allocation2 + $0x231] sm:$0xff]
        %v1538 = vpack.c.bf16 %v1502, %v1502
        %v1539 = vpack.c.bf16 %v1503, %v1503
        %v1540 = vpack.c.bf16 %v1504, %v1504
        %v1541 = vpack.c.bf16 %v1505, %v1505
        %v1542 = vpack.c.bf16 %v1506, %v1506
        %v1543 = vpack.c.bf16 %v1507, %v1507
        %v1544 = vpack.c.bf16 %v1508, %v1508
        %v1545 = vpack.c.bf16 %v1509, %v1509
        %v1546 = vpack.c.bf16 %v1510, %v1510
        %v1547 = vpack.c.bf16 %v1511, %v1511
        %v1548 = vpack.c.bf16 %v1512, %v1512
        %v1549 = vpack.c.bf16 %v1513, %v1513
        %v1550 = vpack.c.bf16 %v1514, %v1514
        %v1551 = vpack.c.bf16 %v1515, %v1515
        %v1552 = vpack.c.bf16 %v1516, %v1516
        %v1553 = vpack.c.bf16 %v1517, %v1517
        %v1554 = vpack.c.bf16 %v1518, %v1518
        %v1555 = vpack.c.bf16 %v1519, %v1519
        %v1556 = vpack.c.bf16 %v1520, %v1520
        %v1557 = vpack.c.bf16 %v1521, %v1521
        %v1558 = vpack.c.bf16 %v1522, %v1522
        %v1559 = vpack.c.bf16 %v1523, %v1523
        %v1560 = vpack.c.bf16 %v1524, %v1524
        %v1561 = vpack.c.bf16 %v1525, %v1525
        %v1562 = vpack.c.bf16 %v1526, %v1526
        %v1563 = vpack.c.bf16 %v1527, %v1527
        %v1564 = vpack.c.bf16 %v1528, %v1528
        %v1565 = vpack.c.bf16 %v1529, %v1529
        %v1566 = vpack.c.bf16 %v1530, %v1530
        %v1567 = vpack.c.bf16 %v1531, %v1531
        %v1568 = vpack.c.bf16 %v1532, %v1532
        %v1569 = vpack.c.bf16 %v1533, %v1533
        %v1570 = vpack.c.bf16 %v1534, %v1534
        %v1571 = vpack.c.bf16 %v1535, %v1535
        %v1572 = vpack.c.bf16 %v1536, %v1536
        %v1573 = vpack.c.bf16 %v1537, %v1537
        %s1574 = scalar_lea.vmem %s2, 4
        %v1575 = vld [vmem:[%s1574] sm:$0x3]
        %v1608 = vunpack.c.l.b16 %v1538
        %v1609 = vunpack.c.l.b16 %v1539
        %v1610 = vunpack.c.l.b16 %v1540
        %v1611 = vunpack.c.l.b16 %v1541
        %v1612 = vunpack.c.l.b16 %v1542
        %v1613 = vunpack.c.l.b16 %v1543
        %v1614 = vunpack.c.l.b16 %v1544
        %v1615 = vunpack.c.l.b16 %v1545
        %v1616 = vunpack.c.l.b16 %v1546
        %v1617 = vunpack.c.l.b16 %v1547
        %v1618 = vunpack.c.l.b16 %v1548
        %v1619 = vunpack.c.l.b16 %v1549
        %v1620 = vunpack.c.l.b16 %v1550
        %v1621 = vunpack.c.l.b16 %v1551
        %v1622 = vunpack.c.l.b16 %v1552
        %v1623 = vunpack.c.l.b16 %v1553
        %v1624 = vunpack.c.l.b16 %v1554
        %v1625 = vunpack.c.l.b16 %v1555
        %v1626 = vunpack.c.l.b16 %v1556
        %v1627 = vunpack.c.l.b16 %v1557
        %v1628 = vunpack.c.l.b16 %v1558
        %v1629 = vunpack.c.l.b16 %v1559
        %v1630 = vunpack.c.l.b16 %v1560
        %v1631 = vunpack.c.l.b16 %v1561
        %v1632 = vunpack.c.l.b16 %v1562
        %v1633 = vunpack.c.l.b16 %v1563
        %v1634 = vunpack.c.l.b16 %v1564
        %v1635 = vunpack.c.l.b16 %v1565
        %v1636 = vunpack.c.l.b16 %v1566
        %v1637 = vunpack.c.l.b16 %v1567
        %v1638 = vunpack.c.l.b16 %v1568
        %v1639 = vunpack.c.l.b16 %v1569
        %v1640 = vpack.c.b16 %v1609, %v1608
        %v1641 = vpack.c.b16 %v1611, %v1610
        %v1642 = vpack.c.b16 %v1613, %v1612
        %v1643 = vpack.c.b16 %v1615, %v1614
        %v1644 = vpack.c.b16 %v1617, %v1616
        %v1645 = vpack.c.b16 %v1619, %v1618
        %v1646 = vpack.c.b16 %v1621, %v1620
        %v1647 = vpack.c.b16 %v1623, %v1622
        %v1648 = vpack.c.b16 %v1625, %v1624
        %v1649 = vpack.c.b16 %v1627, %v1626
        %v1650 = vpack.c.b16 %v1629, %v1628
        %v1651 = vpack.c.b16 %v1631, %v1630
        %v1652 = vpack.c.b16 %v1633, %v1632
        %v1653 = vpack.c.b16 %v1635, %v1634
        %v1654 = vpack.c.b16 %v1637, %v1636
        %v1655 = vpack.c.b16 %v1639, %v1638
        %v1657 = vsel %vm272, %v1640, 0
        %v1660 = vsel %vm272, %v1641, 0
        %v1663 = vsel %vm272, %v1642, 0
        %v1666 = vsel %vm272, %v1643, 0
        %v1669 = vsel %vm272, %v1644, 0
        %v1672 = vsel %vm272, %v1645, 0
        %v1675 = vsel %vm272, %v1646, 0
        %v1678 = vsel %vm272, %v1647, 0
        %v1681 = vsel %vm272, %v1648, 0
        %v1684 = vsel %vm272, %v1649, 0
        %v1687 = vsel %vm272, %v1650, 0
        %v1690 = vsel %vm272, %v1651, 0
        %v1693 = vsel %vm272, %v1652, 0
        %v1696 = vsel %vm272, %v1653, 0
        %v1699 = vsel %vm272, %v1654, 0
        %v1702 = vsel %vm272, %v1655, 0
        %v1705 = vsel %vm581, %v1575, 0
        %1707 = vmatpush.bf16.msra.mxu0 0
        %1708 = vmatpush.bf16.msra.mxu0 0
        %1709 = vmatpush.bf16.msra.mxu0 0
        %1710 = vmatpush.bf16.msra.mxu0 0
        %1711 = vmatpush.bf16.msra.mxu0 0
        %1712 = vmatpush.bf16.msra.mxu0 0
        %1713 = vmatpush.bf16.msra.mxu0 0
        %1714 = vmatpush.bf16.msra.mxu0 %v1705
        %1715 = vmatmul.bf16.gmra.mxu0 %v1657
        %v1716 = vpop.f32.mrf.mxu0
        %v1717 = vadd.f32 0.0, %v1716
        %v1718 = vpop.f32.mrf.mxu0
        %v1719 = vadd.f32 0.0, %v1718
        %1720 = vmatmul.bf16.gmra.mxu0 %v1660
        %v1721 = vpop.f32.mrf.mxu0
        %v1722 = vadd.f32 0.0, %v1721
        %v1723 = vpop.f32.mrf.mxu0
        %v1724 = vadd.f32 0.0, %v1723
        %1725 = vmatmul.bf16.gmra.mxu0 %v1663
        %v1726 = vpop.f32.mrf.mxu0
        %v1727 = vadd.f32 0.0, %v1726
        %v1728 = vpop.f32.mrf.mxu0
        %v1729 = vadd.f32 0.0, %v1728
        %1730 = vmatmul.bf16.gmra.mxu0 %v1666
        %v1731 = vpop.f32.mrf.mxu0
        %v1732 = vadd.f32 0.0, %v1731
        %v1733 = vpop.f32.mrf.mxu0
        %v1734 = vadd.f32 0.0, %v1733
        %1735 = vmatmul.bf16.gmra.mxu0 %v1669
        %v1736 = vpop.f32.mrf.mxu0
        %v1737 = vadd.f32 0.0, %v1736
        %v1738 = vpop.f32.mrf.mxu0
        %v1739 = vadd.f32 0.0, %v1738
        %1740 = vmatmul.bf16.gmra.mxu0 %v1672
        %v1741 = vpop.f32.mrf.mxu0
        %v1742 = vadd.f32 0.0, %v1741
        %v1743 = vpop.f32.mrf.mxu0
        %v1744 = vadd.f32 0.0, %v1743
        %1745 = vmatmul.bf16.gmra.mxu0 %v1675
        %v1746 = vpop.f32.mrf.mxu0
        %v1747 = vadd.f32 0.0, %v1746
        %v1748 = vpop.f32.mrf.mxu0
        %v1749 = vadd.f32 0.0, %v1748
        %1750 = vmatmul.bf16.gmra.mxu0 %v1678
        %v1751 = vpop.f32.mrf.mxu0
        %v1752 = vadd.f32 0.0, %v1751
        %v1753 = vpop.f32.mrf.mxu0
        %v1754 = vadd.f32 0.0, %v1753
        %1755 = vmatmul.bf16.gmra.mxu0 %v1681
        %v1756 = vpop.f32.mrf.mxu0
        %v1757 = vadd.f32 0.0, %v1756
        %v1758 = vpop.f32.mrf.mxu0
        %v1759 = vadd.f32 0.0, %v1758
        %1760 = vmatmul.bf16.gmra.mxu0 %v1684
        %v1761 = vpop.f32.mrf.mxu0
        %v1762 = vadd.f32 0.0, %v1761
        %v1763 = vpop.f32.mrf.mxu0
        %v1764 = vadd.f32 0.0, %v1763
        %1765 = vmatmul.bf16.gmra.mxu0 %v1687
        %v1766 = vpop.f32.mrf.mxu0
        %v1767 = vadd.f32 0.0, %v1766
        %v1768 = vpop.f32.mrf.mxu0
        %v1769 = vadd.f32 0.0, %v1768
        %1770 = vmatmul.bf16.gmra.mxu0 %v1690
        %v1771 = vpop.f32.mrf.mxu0
        %v1772 = vadd.f32 0.0, %v1771
        %v1773 = vpop.f32.mrf.mxu0
        %v1774 = vadd.f32 0.0, %v1773
        %1775 = vmatmul.bf16.gmra.mxu0 %v1693
        %v1776 = vpop.f32.mrf.mxu0
        %v1777 = vadd.f32 0.0, %v1776
        %v1778 = vpop.f32.mrf.mxu0
        %v1779 = vadd.f32 0.0, %v1778
        %1780 = vmatmul.bf16.gmra.mxu0 %v1696
        %v1781 = vpop.f32.mrf.mxu0
        %v1782 = vadd.f32 0.0, %v1781
        %v1783 = vpop.f32.mrf.mxu0
        %v1784 = vadd.f32 0.0, %v1783
        %1785 = vmatmul.bf16.gmra.mxu0 %v1699
        %v1786 = vpop.f32.mrf.mxu0
        %v1787 = vadd.f32 0.0, %v1786
        %v1788 = vpop.f32.mrf.mxu0
        %v1789 = vadd.f32 0.0, %v1788
        %1790 = vmatmul.bf16.gmra.mxu0 %v1702
        %v1791 = vpop.f32.mrf.mxu0
        %v1792 = vadd.f32 0.0, %v1791
        %v1793 = vpop.f32.mrf.mxu0
        %v1794 = vadd.f32 0.0, %v1793
        %1795 = vdwg.mxu0
        %v1796 = vadd.f32 %v1470, %v1717
        %v1797 = vadd.f32 %v1471, %v1719
        %v1798 = vadd.f32 %v1472, %v1722
        %v1799 = vadd.f32 %v1473, %v1724
        %v1800 = vadd.f32 %v1474, %v1727
        %v1801 = vadd.f32 %v1475, %v1729
        %v1802 = vadd.f32 %v1476, %v1732
        %v1803 = vadd.f32 %v1477, %v1734
        %v1804 = vadd.f32 %v1478, %v1737
        %v1805 = vadd.f32 %v1479, %v1739
        %v1806 = vadd.f32 %v1480, %v1742
        %v1807 = vadd.f32 %v1481, %v1744
        %v1808 = vadd.f32 %v1482, %v1747
        %v1809 = vadd.f32 %v1483, %v1749
        %v1810 = vadd.f32 %v1484, %v1752
        %v1811 = vadd.f32 %v1485, %v1754
        %v1812 = vadd.f32 %v1486, %v1757
        %v1813 = vadd.f32 %v1487, %v1759
        %v1814 = vadd.f32 %v1488, %v1762
        %v1815 = vadd.f32 %v1489, %v1764
        %v1816 = vadd.f32 %v1490, %v1767
        %v1817 = vadd.f32 %v1491, %v1769
        %v1818 = vadd.f32 %v1492, %v1772
        %v1819 = vadd.f32 %v1493, %v1774
        %v1820 = vadd.f32 %v1494, %v1777
        %v1821 = vadd.f32 %v1495, %v1779
        %v1822 = vadd.f32 %v1496, %v1782
        %v1823 = vadd.f32 %v1497, %v1784
        %v1824 = vadd.f32 %v1498, %v1787
        %v1825 = vadd.f32 %v1499, %v1789
        %v1826 = vadd.f32 %v1500, %v1792
        %v1827 = vadd.f32 %v1501, %v1794
        %s1828 = scalar_lea.vmem %s2, 10
        %v1829 = vld [vmem:[%s1828] sm:$0x3]
        %v1832 = vunpack.c.l.b16 %v1570
        %v1833 = vunpack.c.l.b16 %v1571
        %v1834 = vpack.c.b16 %v1833, %v1832
        %v1836 = vsel %vm272, %v1834, 0
        %v1839 = vsel %vm581, %v1829, 0
        %1841 = vmatpush.bf16.msra.mxu0 0
        %1842 = vmatpush.bf16.msra.mxu0 0
        %1843 = vmatpush.bf16.msra.mxu0 0
        %1844 = vmatpush.bf16.msra.mxu0 0
        %1845 = vmatpush.bf16.msra.mxu0 0
        %1846 = vmatpush.bf16.msra.mxu0 0
        %1847 = vmatpush.bf16.msra.mxu0 0
        %1848 = vmatpush.bf16.msra.mxu0 %v1839
        %1849 = vmatmul.bf16.gmra.mxu0 %v1660
        %v1850 = vpop.f32.mrf.mxu0
        %v1851 = vadd.f32 0.0, %v1850
        %v1852 = vpop.f32.mrf.mxu0
        %v1853 = vadd.f32 0.0, %v1852
        %1854 = vmatmul.bf16.gmra.mxu0 %v1663
        %v1855 = vpop.f32.mrf.mxu0
        %v1856 = vadd.f32 0.0, %v1855
        %v1857 = vpop.f32.mrf.mxu0
        %v1858 = vadd.f32 0.0, %v1857
        %1859 = vmatmul.bf16.gmra.mxu0 %v1666
        %v1860 = vpop.f32.mrf.mxu0
        %v1861 = vadd.f32 0.0, %v1860
        %v1862 = vpop.f32.mrf.mxu0
        %v1863 = vadd.f32 0.0, %v1862
        %1864 = vmatmul.bf16.gmra.mxu0 %v1669
        %v1865 = vpop.f32.mrf.mxu0
        %v1866 = vadd.f32 0.0, %v1865
        %v1867 = vpop.f32.mrf.mxu0
        %v1868 = vadd.f32 0.0, %v1867
        %1869 = vmatmul.bf16.gmra.mxu0 %v1672
        %v1870 = vpop.f32.mrf.mxu0
        %v1871 = vadd.f32 0.0, %v1870
        %v1872 = vpop.f32.mrf.mxu0
        %v1873 = vadd.f32 0.0, %v1872
        %1874 = vmatmul.bf16.gmra.mxu0 %v1675
        %v1875 = vpop.f32.mrf.mxu0
        %v1876 = vadd.f32 0.0, %v1875
        %v1877 = vpop.f32.mrf.mxu0
        %v1878 = vadd.f32 0.0, %v1877
        %1879 = vmatmul.bf16.gmra.mxu0 %v1678
        %v1880 = vpop.f32.mrf.mxu0
        %v1881 = vadd.f32 0.0, %v1880
        %v1882 = vpop.f32.mrf.mxu0
        %v1883 = vadd.f32 0.0, %v1882
        %1884 = vmatmul.bf16.gmra.mxu0 %v1681
        %v1885 = vpop.f32.mrf.mxu0
        %v1886 = vadd.f32 0.0, %v1885
        %v1887 = vpop.f32.mrf.mxu0
        %v1888 = vadd.f32 0.0, %v1887
        %1889 = vmatmul.bf16.gmra.mxu0 %v1684
        %v1890 = vpop.f32.mrf.mxu0
        %v1891 = vadd.f32 0.0, %v1890
        %v1892 = vpop.f32.mrf.mxu0
        %v1893 = vadd.f32 0.0, %v1892
        %1894 = vmatmul.bf16.gmra.mxu0 %v1687
        %v1895 = vpop.f32.mrf.mxu0
        %v1896 = vadd.f32 0.0, %v1895
        %v1897 = vpop.f32.mrf.mxu0
        %v1898 = vadd.f32 0.0, %v1897
        %1899 = vmatmul.bf16.gmra.mxu0 %v1690
        %v1900 = vpop.f32.mrf.mxu0
        %v1901 = vadd.f32 0.0, %v1900
        %v1902 = vpop.f32.mrf.mxu0
        %v1903 = vadd.f32 0.0, %v1902
        %1904 = vmatmul.bf16.gmra.mxu0 %v1693
        %v1905 = vpop.f32.mrf.mxu0
        %v1906 = vadd.f32 0.0, %v1905
        %v1907 = vpop.f32.mrf.mxu0
        %v1908 = vadd.f32 0.0, %v1907
        %1909 = vmatmul.bf16.gmra.mxu0 %v1696
        %v1910 = vpop.f32.mrf.mxu0
        %v1911 = vadd.f32 0.0, %v1910
        %v1912 = vpop.f32.mrf.mxu0
        %v1913 = vadd.f32 0.0, %v1912
        %1914 = vmatmul.bf16.gmra.mxu0 %v1699
        %v1915 = vpop.f32.mrf.mxu0
        %v1916 = vadd.f32 0.0, %v1915
        %v1917 = vpop.f32.mrf.mxu0
        %v1918 = vadd.f32 0.0, %v1917
        %1919 = vmatmul.bf16.gmra.mxu0 %v1702
        %v1920 = vpop.f32.mrf.mxu0
        %v1921 = vadd.f32 0.0, %v1920
        %v1922 = vpop.f32.mrf.mxu0
        %v1923 = vadd.f32 0.0, %v1922
        %1924 = vmatmul.bf16.gmra.mxu0 %v1836
        %v1925 = vpop.f32.mrf.mxu0
        %v1926 = vadd.f32 0.0, %v1925
        %v1927 = vpop.f32.mrf.mxu0
        %v1928 = vadd.f32 0.0, %v1927
        %1929 = vdwg.mxu0
        %v1930 = vadd.f32 %v1796, %v1851
        %v1931 = vadd.f32 %v1797, %v1853
        %v1932 = vadd.f32 %v1798, %v1856
        %v1933 = vadd.f32 %v1799, %v1858
        %v1934 = vadd.f32 %v1800, %v1861
        %v1935 = vadd.f32 %v1801, %v1863
        %v1936 = vadd.f32 %v1802, %v1866
        %v1937 = vadd.f32 %v1803, %v1868
        %v1938 = vadd.f32 %v1804, %v1871
        %v1939 = vadd.f32 %v1805, %v1873
        %v1940 = vadd.f32 %v1806, %v1876
        %v1941 = vadd.f32 %v1807, %v1878
        %v1942 = vadd.f32 %v1808, %v1881
        %v1943 = vadd.f32 %v1809, %v1883
        %v1944 = vadd.f32 %v1810, %v1886
        %v1945 = vadd.f32 %v1811, %v1888
        %v1946 = vadd.f32 %v1812, %v1891
        %v1947 = vadd.f32 %v1813, %v1893
        %v1948 = vadd.f32 %v1814, %v1896
        %v1949 = vadd.f32 %v1815, %v1898
        %v1950 = vadd.f32 %v1816, %v1901
        %v1951 = vadd.f32 %v1817, %v1903
        %v1952 = vadd.f32 %v1818, %v1906
        %v1953 = vadd.f32 %v1819, %v1908
        %v1954 = vadd.f32 %v1820, %v1911
        %v1955 = vadd.f32 %v1821, %v1913
        %v1956 = vadd.f32 %v1822, %v1916
        %v1957 = vadd.f32 %v1823, %v1918
        %v1958 = vadd.f32 %v1824, %v1921
        %v1959 = vadd.f32 %v1825, %v1923
        %v1960 = vadd.f32 %v1826, %v1926
        %v1961 = vadd.f32 %v1827, %v1928
        %s1962 = scalar_lea.vmem %s2, 16
        %v1963 = vld [vmem:[%s1962] sm:$0x3]
        %v1966 = vunpack.c.l.b16 %v1572
        %v1967 = vunpack.c.l.b16 %v1573
        %v1968 = vpack.c.b16 %v1967, %v1966
        %v1970 = vsel %vm272, %v1968, 0
        %v1973 = vsel %vm581, %v1963, 0
        %1975 = vmatpush.bf16.msra.mxu0 0
        %1976 = vmatpush.bf16.msra.mxu0 0
        %1977 = vmatpush.bf16.msra.mxu0 0
        %1978 = vmatpush.bf16.msra.mxu0 0
        %1979 = vmatpush.bf16.msra.mxu0 0
        %1980 = vmatpush.bf16.msra.mxu0 0
        %1981 = vmatpush.bf16.msra.mxu0 0
        %1982 = vmatpush.bf16.msra.mxu0 %v1973
        %1983 = vmatmul.bf16.gmra.mxu0 %v1663
        %v1984 = vpop.f32.mrf.mxu0
        %v1985 = vadd.f32 0.0, %v1984
        %v1986 = vpop.f32.mrf.mxu0
        %v1987 = vadd.f32 0.0, %v1986
        %1988 = vmatmul.bf16.gmra.mxu0 %v1666
        %v1989 = vpop.f32.mrf.mxu0
        %v1990 = vadd.f32 0.0, %v1989
        %v1991 = vpop.f32.mrf.mxu0
        %v1992 = vadd.f32 0.0, %v1991
        %1993 = vmatmul.bf16.gmra.mxu0 %v1669
        %v1994 = vpop.f32.mrf.mxu0
        %v1995 = vadd.f32 0.0, %v1994
        %v1996 = vpop.f32.mrf.mxu0
        %v1997 = vadd.f32 0.0, %v1996
        %1998 = vmatmul.bf16.gmra.mxu0 %v1672
        %v1999 = vpop.f32.mrf.mxu0
        %v2000 = vadd.f32 0.0, %v1999
        %v2001 = vpop.f32.mrf.mxu0
        %v2002 = vadd.f32 0.0, %v2001
        %2003 = vmatmul.bf16.gmra.mxu0 %v1675
        %v2004 = vpop.f32.mrf.mxu0
        %v2005 = vadd.f32 0.0, %v2004
        %v2006 = vpop.f32.mrf.mxu0
        %v2007 = vadd.f32 0.0, %v2006
        %2008 = vmatmul.bf16.gmra.mxu0 %v1678
        %v2009 = vpop.f32.mrf.mxu0
        %v2010 = vadd.f32 0.0, %v2009
        %v2011 = vpop.f32.mrf.mxu0
        %v2012 = vadd.f32 0.0, %v2011
        %2013 = vmatmul.bf16.gmra.mxu0 %v1681
        %v2014 = vpop.f32.mrf.mxu0
        %v2015 = vadd.f32 0.0, %v2014
        %v2016 = vpop.f32.mrf.mxu0
        %v2017 = vadd.f32 0.0, %v2016
        %2018 = vmatmul.bf16.gmra.mxu0 %v1684
        %v2019 = vpop.f32.mrf.mxu0
        %v2020 = vadd.f32 0.0, %v2019
        %v2021 = vpop.f32.mrf.mxu0
        %v2022 = vadd.f32 0.0, %v2021
        %2023 = vmatmul.bf16.gmra.mxu0 %v1687
        %v2024 = vpop.f32.mrf.mxu0
        %v2025 = vadd.f32 0.0, %v2024
        %v2026 = vpop.f32.mrf.mxu0
        %v2027 = vadd.f32 0.0, %v2026
        %2028 = vmatmul.bf16.gmra.mxu0 %v1690
        %v2029 = vpop.f32.mrf.mxu0
        %v2030 = vadd.f32 0.0, %v2029
        %v2031 = vpop.f32.mrf.mxu0
        %v2032 = vadd.f32 0.0, %v2031
        %2033 = vmatmul.bf16.gmra.mxu0 %v1693
        %v2034 = vpop.f32.mrf.mxu0
        %v2035 = vadd.f32 0.0, %v2034
        %v2036 = vpop.f32.mrf.mxu0
        %v2037 = vadd.f32 0.0, %v2036
        %2038 = vmatmul.bf16.gmra.mxu0 %v1696
        %v2039 = vpop.f32.mrf.mxu0
        %v2040 = vadd.f32 0.0, %v2039
        %v2041 = vpop.f32.mrf.mxu0
        %v2042 = vadd.f32 0.0, %v2041
        %2043 = vmatmul.bf16.gmra.mxu0 %v1699
        %v2044 = vpop.f32.mrf.mxu0
        %v2045 = vadd.f32 0.0, %v2044
        %v2046 = vpop.f32.mrf.mxu0
        %v2047 = vadd.f32 0.0, %v2046
        %2048 = vmatmul.bf16.gmra.mxu0 %v1702
        %v2049 = vpop.f32.mrf.mxu0
        %v2050 = vadd.f32 0.0, %v2049
        %v2051 = vpop.f32.mrf.mxu0
        %v2052 = vadd.f32 0.0, %v2051
        %2053 = vmatmul.bf16.gmra.mxu0 %v1836
        %v2054 = vpop.f32.mrf.mxu0
        %v2055 = vadd.f32 0.0, %v2054
        %v2056 = vpop.f32.mrf.mxu0
        %v2057 = vadd.f32 0.0, %v2056
        %2058 = vmatmul.bf16.gmra.mxu0 %v1970
        %v2059 = vpop.f32.mrf.mxu0
        %v2060 = vadd.f32 0.0, %v2059
        %v2061 = vpop.f32.mrf.mxu0
        %v2062 = vadd.f32 0.0, %v2061
        %2063 = vdwg.mxu0
        %v2064 = vadd.f32 %v1930, %v1985
        %v2065 = vadd.f32 %v1931, %v1987
        %v2066 = vadd.f32 %v1932, %v1990
        %v2067 = vadd.f32 %v1933, %v1992
        %v2068 = vadd.f32 %v1934, %v1995
        %v2069 = vadd.f32 %v1935, %v1997
        %v2070 = vadd.f32 %v1936, %v2000
        %v2071 = vadd.f32 %v1937, %v2002
        %v2072 = vadd.f32 %v1938, %v2005
        %v2073 = vadd.f32 %v1939, %v2007
        %v2074 = vadd.f32 %v1940, %v2010
        %v2075 = vadd.f32 %v1941, %v2012
        %v2076 = vadd.f32 %v1942, %v2015
        %v2077 = vadd.f32 %v1943, %v2017
        %v2078 = vadd.f32 %v1944, %v2020
        %v2079 = vadd.f32 %v1945, %v2022
        %v2080 = vadd.f32 %v1946, %v2025
        %v2081 = vadd.f32 %v1947, %v2027
        %v2082 = vadd.f32 %v1948, %v2030
        %v2083 = vadd.f32 %v1949, %v2032
        %v2084 = vadd.f32 %v1950, %v2035
        %v2085 = vadd.f32 %v1951, %v2037
        %v2086 = vadd.f32 %v1952, %v2040
        %v2087 = vadd.f32 %v1953, %v2042
        %v2088 = vadd.f32 %v1954, %v2045
        %v2089 = vadd.f32 %v1955, %v2047
        %v2090 = vadd.f32 %v1956, %v2050
        %v2091 = vadd.f32 %v1957, %v2052
        %v2092 = vadd.f32 %v1958, %v2055
        %v2093 = vadd.f32 %v1959, %v2057
        %v2094 = vadd.f32 %v1960, %v2060
        %v2095 = vadd.f32 %v1961, %v2062
        %vm2096 = vcmask 523264
        %v2097 = vsel %vm2096, %v2064, 0.0
        %v2098 = vsel %vm2096, %v2065, 0.0
        %v2099 = vadd.f32 %v2097, %v2098
        %v2100 = vsel %vm2096, %v2066, 0.0
        %v2101 = vadd.f32 %v2099, %v2100
        %v2102 = vsel %vm2096, %v2067, 0.0
        %v2103 = vadd.f32 %v2101, %v2102
        %v2104 = vsel %vm2096, %v2068, 0.0
        %v2105 = vadd.f32 %v2103, %v2104
        %v2106 = vsel %vm2096, %v2069, 0.0
        %v2107 = vadd.f32 %v2105, %v2106
        %v2108 = vsel %vm2096, %v2070, 0.0
        %v2109 = vadd.f32 %v2107, %v2108
        %v2110 = vsel %vm2096, %v2071, 0.0
        %v2111 = vadd.f32 %v2109, %v2110
        %v2112 = vsel %vm2096, %v2072, 0.0
        %v2113 = vadd.f32 %v2111, %v2112
        %v2114 = vsel %vm2096, %v2073, 0.0
        %v2115 = vadd.f32 %v2113, %v2114
        %v2116 = vsel %vm2096, %v2074, 0.0
        %v2117 = vadd.f32 %v2115, %v2116
        %v2118 = vsel %vm2096, %v2075, 0.0
        %v2119 = vadd.f32 %v2117, %v2118
        %v2120 = vsel %vm2096, %v2076, 0.0
        %v2121 = vadd.f32 %v2119, %v2120
        %v2122 = vsel %vm2096, %v2077, 0.0
        %v2123 = vadd.f32 %v2121, %v2122
        %v2124 = vsel %vm2096, %v2078, 0.0
        %v2125 = vadd.f32 %v2123, %v2124
        %v2126 = vsel %vm2096, %v2079, 0.0
        %v2127 = vadd.f32 %v2125, %v2126
        %v2128 = vsel %vm2096, %v2080, 0.0
        %v2129 = vadd.f32 %v2127, %v2128
        %v2130 = vsel %vm2096, %v2081, 0.0
        %v2131 = vadd.f32 %v2129, %v2130
        %v2132 = vsel %vm2096, %v2082, 0.0
        %v2133 = vadd.f32 %v2131, %v2132
        %v2134 = vsel %vm2096, %v2083, 0.0
        %v2135 = vadd.f32 %v2133, %v2134
        %v2136 = vsel %vm2096, %v2084, 0.0
        %v2137 = vadd.f32 %v2135, %v2136
        %v2138 = vsel %vm2096, %v2085, 0.0
        %v2139 = vadd.f32 %v2137, %v2138
        %v2140 = vsel %vm2096, %v2086, 0.0
        %v2141 = vadd.f32 %v2139, %v2140
        %v2142 = vsel %vm2096, %v2087, 0.0
        %v2143 = vadd.f32 %v2141, %v2142
        %v2144 = vsel %vm2096, %v2088, 0.0
        %v2145 = vadd.f32 %v2143, %v2144
        %v2146 = vsel %vm2096, %v2089, 0.0
        %v2147 = vadd.f32 %v2145, %v2146
        %v2148 = vsel %vm2096, %v2090, 0.0
        %v2149 = vadd.f32 %v2147, %v2148
        %v2150 = vsel %vm2096, %v2091, 0.0
        %v2151 = vadd.f32 %v2149, %v2150
        %v2152 = vsel %vm2096, %v2092, 0.0
        %v2153 = vadd.f32 %v2151, %v2152
        %v2154 = vsel %vm2096, %v2093, 0.0
        %v2155 = vadd.f32 %v2153, %v2154
        %v2156 = vsel %vm2096, %v2094, 0.0
        %v2157 = vadd.f32 %v2155, %v2156
        %v2158 = vsel %vm2096, %v2095, 0.0
        %v2159 = vadd.f32 %v2157, %v2158
        %v2160 = vrot.slane %v2159, 4
        %v2161 = vadd.f32 %v2159, %v2160
        %v2162 = vrot.slane %v2161, 2
        %v2163 = vadd.f32 %v2161, %v2162
        %v2164 = vrot.slane %v2163, 1
        %v2165 = vadd.f32 %v2163, %v2164
        %vm2166 = vcmask 516096
        %2167 = vst.msk [vmem:[%s227] sm:$0x1] %vm2166, %v2165
        %v2168 = vmul.f32 %v2064, %v2064
        %v2169 = vmul.f32 %v2065, %v2065
        %v2170 = vmul.f32 %v2066, %v2066
        %v2171 = vmul.f32 %v2067, %v2067
        %v2172 = vmul.f32 %v2068, %v2068
        %v2173 = vmul.f32 %v2069, %v2069
        %v2174 = vmul.f32 %v2070, %v2070
        %v2175 = vmul.f32 %v2071, %v2071
        %v2176 = vmul.f32 %v2072, %v2072
        %v2177 = vmul.f32 %v2073, %v2073
        %v2178 = vmul.f32 %v2074, %v2074
        %v2179 = vmul.f32 %v2075, %v2075
        %v2180 = vmul.f32 %v2076, %v2076
        %v2181 = vmul.f32 %v2077, %v2077
        %v2182 = vmul.f32 %v2078, %v2078
        %v2183 = vmul.f32 %v2079, %v2079
        %v2184 = vmul.f32 %v2080, %v2080
        %v2185 = vmul.f32 %v2081, %v2081
        %v2186 = vmul.f32 %v2082, %v2082
        %v2187 = vmul.f32 %v2083, %v2083
        %v2188 = vmul.f32 %v2084, %v2084
        %v2189 = vmul.f32 %v2085, %v2085
        %v2190 = vmul.f32 %v2086, %v2086
        %v2191 = vmul.f32 %v2087, %v2087
        %v2192 = vmul.f32 %v2088, %v2088
        %v2193 = vmul.f32 %v2089, %v2089
        %v2194 = vmul.f32 %v2090, %v2090
        %v2195 = vmul.f32 %v2091, %v2091
        %v2196 = vmul.f32 %v2092, %v2092
        %v2197 = vmul.f32 %v2093, %v2093
        %v2198 = vmul.f32 %v2094, %v2094
        %v2199 = vmul.f32 %v2095, %v2095
        %v2200 = vsel %vm2096, %v2168, 0.0
        %v2201 = vsel %vm2096, %v2169, 0.0
        %v2202 = vadd.f32 %v2200, %v2201
        %v2203 = vsel %vm2096, %v2170, 0.0
        %v2204 = vadd.f32 %v2202, %v2203
        %v2205 = vsel %vm2096, %v2171, 0.0
        %v2206 = vadd.f32 %v2204, %v2205
        %v2207 = vsel %vm2096, %v2172, 0.0
        %v2208 = vadd.f32 %v2206, %v2207
        %v2209 = vsel %vm2096, %v2173, 0.0
        %v2210 = vadd.f32 %v2208, %v2209
        %v2211 = vsel %vm2096, %v2174, 0.0
        %v2212 = vadd.f32 %v2210, %v2211
        %v2213 = vsel %vm2096, %v2175, 0.0
        %v2214 = vadd.f32 %v2212, %v2213
        %v2215 = vsel %vm2096, %v2176, 0.0
        %v2216 = vadd.f32 %v2214, %v2215
        %v2217 = vsel %vm2096, %v2177, 0.0
        %v2218 = vadd.f32 %v2216, %v2217
        %v2219 = vsel %vm2096, %v2178, 0.0
        %v2220 = vadd.f32 %v2218, %v2219
        %v2221 = vsel %vm2096, %v2179, 0.0
        %v2222 = vadd.f32 %v2220, %v2221
        %v2223 = vsel %vm2096, %v2180, 0.0
        %v2224 = vadd.f32 %v2222, %v2223
        %v2225 = vsel %vm2096, %v2181, 0.0
        %v2226 = vadd.f32 %v2224, %v2225
        %v2227 = vsel %vm2096, %v2182, 0.0
        %v2228 = vadd.f32 %v2226, %v2227
        %v2229 = vsel %vm2096, %v2183, 0.0
        %v2230 = vadd.f32 %v2228, %v2229
        %v2231 = vsel %vm2096, %v2184, 0.0
        %v2232 = vadd.f32 %v2230, %v2231
        %v2233 = vsel %vm2096, %v2185, 0.0
        %v2234 = vadd.f32 %v2232, %v2233
        %v2235 = vsel %vm2096, %v2186, 0.0
        %v2236 = vadd.f32 %v2234, %v2235
        %v2237 = vsel %vm2096, %v2187, 0.0
        %v2238 = vadd.f32 %v2236, %v2237
        %v2239 = vsel %vm2096, %v2188, 0.0
        %v2240 = vadd.f32 %v2238, %v2239
        %v2241 = vsel %vm2096, %v2189, 0.0
        %v2242 = vadd.f32 %v2240, %v2241
        %v2243 = vsel %vm2096, %v2190, 0.0
        %v2244 = vadd.f32 %v2242, %v2243
        %v2245 = vsel %vm2096, %v2191, 0.0
        %v2246 = vadd.f32 %v2244, %v2245
        %v2247 = vsel %vm2096, %v2192, 0.0
        %v2248 = vadd.f32 %v2246, %v2247
        %v2249 = vsel %vm2096, %v2193, 0.0
        %v2250 = vadd.f32 %v2248, %v2249
        %v2251 = vsel %vm2096, %v2194, 0.0
        %v2252 = vadd.f32 %v2250, %v2251
        %v2253 = vsel %vm2096, %v2195, 0.0
        %v2254 = vadd.f32 %v2252, %v2253
        %v2255 = vsel %vm2096, %v2196, 0.0
        %v2256 = vadd.f32 %v2254, %v2255
        %v2257 = vsel %vm2096, %v2197, 0.0
        %v2258 = vadd.f32 %v2256, %v2257
        %v2259 = vsel %vm2096, %v2198, 0.0
        %v2260 = vadd.f32 %v2258, %v2259
        %v2261 = vsel %vm2096, %v2199, 0.0
        %v2262 = vadd.f32 %v2260, %v2261
        %v2263 = vrot.slane %v2262, 4
        %v2264 = vadd.f32 %v2262, %v2263
        %v2265 = vrot.slane %v2264, 2
        %v2266 = vadd.f32 %v2264, %v2265
        %v2267 = vrot.slane %v2266, 1
        %v2268 = vadd.f32 %v2266, %v2267
        %2269 = vst.msk [vmem:[%s233] sm:$0x1] %vm2166, %v2268
        %vm2270 = vcmask 517120
        %v2271 = vsel %vm2270, %v2064, 0.0
        %v2272 = vrot.slane %v2271, 4
        %v2273 = vadd.f32 %v2271, %v2272
        %v2274 = vrot.slane %v2273, 2
        %v2275 = vadd.f32 %v2273, %v2274
        %v2276 = vrot.slane %v2275, 1
        %v2277 = vadd.f32 %v2275, %v2276
        %v2278 = vsel %vm2270, %v2066, 0.0
        %v2279 = vrot.slane %v2278, 4
        %v2280 = vadd.f32 %v2278, %v2279
        %v2281 = vrot.slane %v2280, 2
        %v2282 = vadd.f32 %v2280, %v2281
        %v2283 = vrot.slane %v2282, 1
        %v2284 = vadd.f32 %v2282, %v2283
        %v2285 = vsel %vm2270, %v2068, 0.0
        %v2286 = vrot.slane %v2285, 4
        %v2287 = vadd.f32 %v2285, %v2286
        %v2288 = vrot.slane %v2287, 2
        %v2289 = vadd.f32 %v2287, %v2288
        %v2290 = vrot.slane %v2289, 1
        %v2291 = vadd.f32 %v2289, %v2290
        %v2292 = vsel %vm2270, %v2070, 0.0
        %v2293 = vrot.slane %v2292, 4
        %v2294 = vadd.f32 %v2292, %v2293
        %v2295 = vrot.slane %v2294, 2
        %v2296 = vadd.f32 %v2294, %v2295
        %v2297 = vrot.slane %v2296, 1
        %v2298 = vadd.f32 %v2296, %v2297
        %v2299 = vsel %vm2270, %v2072, 0.0
        %v2300 = vrot.slane %v2299, 4
        %v2301 = vadd.f32 %v2299, %v2300
        %v2302 = vrot.slane %v2301, 2
        %v2303 = vadd.f32 %v2301, %v2302
        %v2304 = vrot.slane %v2303, 1
        %v2305 = vadd.f32 %v2303, %v2304
        %v2306 = vsel %vm2270, %v2074, 0.0
        %v2307 = vrot.slane %v2306, 4
        %v2308 = vadd.f32 %v2306, %v2307
        %v2309 = vrot.slane %v2308, 2
        %v2310 = vadd.f32 %v2308, %v2309
        %v2311 = vrot.slane %v2310, 1
        %v2312 = vadd.f32 %v2310, %v2311
        %v2313 = vsel %vm2270, %v2076, 0.0
        %v2314 = vrot.slane %v2313, 4
        %v2315 = vadd.f32 %v2313, %v2314
        %v2316 = vrot.slane %v2315, 2
        %v2317 = vadd.f32 %v2315, %v2316
        %v2318 = vrot.slane %v2317, 1
        %v2319 = vadd.f32 %v2317, %v2318
        %v2320 = vsel %vm2270, %v2078, 0.0
        %v2321 = vrot.slane %v2320, 4
        %v2322 = vadd.f32 %v2320, %v2321
        %v2323 = vrot.slane %v2322, 2
        %v2324 = vadd.f32 %v2322, %v2323
        %v2325 = vrot.slane %v2324, 1
        %v2326 = vadd.f32 %v2324, %v2325
        %v2327 = vsel %vm2270, %v2080, 0.0
        %v2328 = vrot.slane %v2327, 4
        %v2329 = vadd.f32 %v2327, %v2328
        %v2330 = vrot.slane %v2329, 2
        %v2331 = vadd.f32 %v2329, %v2330
        %v2332 = vrot.slane %v2331, 1
        %v2333 = vadd.f32 %v2331, %v2332
        %v2334 = vsel %vm2270, %v2082, 0.0
        %v2335 = vrot.slane %v2334, 4
        %v2336 = vadd.f32 %v2334, %v2335
        %v2337 = vrot.slane %v2336, 2
        %v2338 = vadd.f32 %v2336, %v2337
        %v2339 = vrot.slane %v2338, 1
        %v2340 = vadd.f32 %v2338, %v2339
        %v2341 = vsel %vm2270, %v2084, 0.0
        %v2342 = vrot.slane %v2341, 4
        %v2343 = vadd.f32 %v2341, %v2342
        %v2344 = vrot.slane %v2343, 2
        %v2345 = vadd.f32 %v2343, %v2344
        %v2346 = vrot.slane %v2345, 1
        %v2347 = vadd.f32 %v2345, %v2346
        %v2348 = vsel %vm2270, %v2086, 0.0
        %v2349 = vrot.slane %v2348, 4
        %v2350 = vadd.f32 %v2348, %v2349
        %v2351 = vrot.slane %v2350, 2
        %v2352 = vadd.f32 %v2350, %v2351
        %v2353 = vrot.slane %v2352, 1
        %v2354 = vadd.f32 %v2352, %v2353
        %v2355 = vsel %vm2270, %v2088, 0.0
        %v2356 = vrot.slane %v2355, 4
        %v2357 = vadd.f32 %v2355, %v2356
        %v2358 = vrot.slane %v2357, 2
        %v2359 = vadd.f32 %v2357, %v2358
        %v2360 = vrot.slane %v2359, 1
        %v2361 = vadd.f32 %v2359, %v2360
        %v2362 = vsel %vm2270, %v2090, 0.0
        %v2363 = vrot.slane %v2362, 4
        %v2364 = vadd.f32 %v2362, %v2363
        %v2365 = vrot.slane %v2364, 2
        %v2366 = vadd.f32 %v2364, %v2365
        %v2367 = vrot.slane %v2366, 1
        %v2368 = vadd.f32 %v2366, %v2367
        %v2369 = vsel %vm2270, %v2092, 0.0
        %v2370 = vrot.slane %v2369, 4
        %v2371 = vadd.f32 %v2369, %v2370
        %v2372 = vrot.slane %v2371, 2
        %v2373 = vadd.f32 %v2371, %v2372
        %v2374 = vrot.slane %v2373, 1
        %v2375 = vadd.f32 %v2373, %v2374
        %v2376 = vsel %vm2270, %v2094, 0.0
        %v2377 = vrot.slane %v2376, 4
        %v2378 = vadd.f32 %v2376, %v2377
        %v2379 = vrot.slane %v2378, 2
        %v2380 = vadd.f32 %v2378, %v2379
        %v2381 = vrot.slane %v2380, 1
        %v2382 = vadd.f32 %v2380, %v2381
        %v2383 = vmul.f32 %v2277, 0.5
        %v2384 = vmul.f32 %v2284, 0.5
        %v2385 = vmul.f32 %v2291, 0.5
        %v2386 = vmul.f32 %v2298, 0.5
        %v2387 = vmul.f32 %v2305, 0.5
        %v2388 = vmul.f32 %v2312, 0.5
        %v2389 = vmul.f32 %v2319, 0.5
        %v2390 = vmul.f32 %v2326, 0.5
        %v2391 = vmul.f32 %v2333, 0.5
        %v2392 = vmul.f32 %v2340, 0.5
        %v2393 = vmul.f32 %v2347, 0.5
        %v2394 = vmul.f32 %v2354, 0.5
        %v2395 = vmul.f32 %v2361, 0.5
        %v2396 = vmul.f32 %v2368, 0.5
        %v2397 = vmul.f32 %v2375, 0.5
        %v2398 = vmul.f32 %v2382, 0.5
        %vm2415 = vcmask 1041409
        %v2416 = vsel %vm2415, %v2384, %v2383
        %vm2417 = vcmask 1042434
        %v2418 = vsel %vm2417, %v2385, %v2416
        %vm2419 = vcmask 1043459
        %v2420 = vsel %vm2419, %v2386, %v2418
        %vm2421 = vcmask 1044484
        %v2422 = vsel %vm2421, %v2387, %v2420
        %vm2423 = vcmask 1045509
        %v2424 = vsel %vm2423, %v2388, %v2422
        %vm2425 = vcmask 1046534
        %v2426 = vsel %vm2425, %v2389, %v2424
        %vm2427 = vcmask 1047559
        %v2428 = vsel %vm2427, %v2390, %v2426
        %v2429 = vsel %vm2415, %v2392, %v2391
        %v2430 = vsel %vm2417, %v2393, %v2429
        %v2431 = vsel %vm2419, %v2394, %v2430
        %v2432 = vsel %vm2421, %v2395, %v2431
        %v2433 = vsel %vm2423, %v2396, %v2432
        %v2434 = vsel %vm2425, %v2397, %v2433
        %v2435 = vsel %vm2427, %v2398, %v2434
        %2438 = vst.msk [vmem:[#allocation3] sm:$0xff] %vm2096, %v2428
        %2439 = vst.msk [vmem:[#allocation3 + $0x8] sm:$0xff] %vm2096, %v2435
        %v2456 = vrot.slane %v2064, 2
        %v2457 = vrot.slane %v2066, 2
        %v2458 = vrot.slane %v2068, 2
        %v2459 = vrot.slane %v2070, 2
        %v2460 = vrot.slane %v2072, 2
        %v2461 = vrot.slane %v2074, 2
        %v2462 = vrot.slane %v2076, 2
        %v2463 = vrot.slane %v2078, 2
        %v2464 = vrot.slane %v2080, 2
        %v2465 = vrot.slane %v2082, 2
        %v2466 = vrot.slane %v2084, 2
        %v2467 = vrot.slane %v2086, 2
        %v2468 = vrot.slane %v2088, 2
        %v2469 = vrot.slane %v2090, 2
        %v2470 = vrot.slane %v2092, 2
        %v2471 = vrot.slane %v2094, 2
        %v2488 = vsel %vm2270, %v2456, 0.0
        %v2489 = vrot.slane %v2488, 4
        %v2490 = vadd.f32 %v2488, %v2489
        %v2491 = vrot.slane %v2490, 2
        %v2492 = vadd.f32 %v2490, %v2491
        %v2493 = vrot.slane %v2492, 1
        %v2494 = vadd.f32 %v2492, %v2493
        %v2495 = vsel %vm2270, %v2457, 0.0
        %v2496 = vrot.slane %v2495, 4
        %v2497 = vadd.f32 %v2495, %v2496
        %v2498 = vrot.slane %v2497, 2
        %v2499 = vadd.f32 %v2497, %v2498
        %v2500 = vrot.slane %v2499, 1
        %v2501 = vadd.f32 %v2499, %v2500
        %v2502 = vsel %vm2270, %v2458, 0.0
        %v2503 = vrot.slane %v2502, 4
        %v2504 = vadd.f32 %v2502, %v2503
        %v2505 = vrot.slane %v2504, 2
        %v2506 = vadd.f32 %v2504, %v2505
        %v2507 = vrot.slane %v2506, 1
        %v2508 = vadd.f32 %v2506, %v2507
        %v2509 = vsel %vm2270, %v2459, 0.0
        %v2510 = vrot.slane %v2509, 4
        %v2511 = vadd.f32 %v2509, %v2510
        %v2512 = vrot.slane %v2511, 2
        %v2513 = vadd.f32 %v2511, %v2512
        %v2514 = vrot.slane %v2513, 1
        %v2515 = vadd.f32 %v2513, %v2514
        %v2516 = vsel %vm2270, %v2460, 0.0
        %v2517 = vrot.slane %v2516, 4
        %v2518 = vadd.f32 %v2516, %v2517
        %v2519 = vrot.slane %v2518, 2
        %v2520 = vadd.f32 %v2518, %v2519
        %v2521 = vrot.slane %v2520, 1
        %v2522 = vadd.f32 %v2520, %v2521
        %v2523 = vsel %vm2270, %v2461, 0.0
        %v2524 = vrot.slane %v2523, 4
        %v2525 = vadd.f32 %v2523, %v2524
        %v2526 = vrot.slane %v2525, 2
        %v2527 = vadd.f32 %v2525, %v2526
        %v2528 = vrot.slane %v2527, 1
        %v2529 = vadd.f32 %v2527, %v2528
        %v2530 = vsel %vm2270, %v2462, 0.0
        %v2531 = vrot.slane %v2530, 4
        %v2532 = vadd.f32 %v2530, %v2531
        %v2533 = vrot.slane %v2532, 2
        %v2534 = vadd.f32 %v2532, %v2533
        %v2535 = vrot.slane %v2534, 1
        %v2536 = vadd.f32 %v2534, %v2535
        %v2537 = vsel %vm2270, %v2463, 0.0
        %v2538 = vrot.slane %v2537, 4
        %v2539 = vadd.f32 %v2537, %v2538
        %v2540 = vrot.slane %v2539, 2
        %v2541 = vadd.f32 %v2539, %v2540
        %v2542 = vrot.slane %v2541, 1
        %v2543 = vadd.f32 %v2541, %v2542
        %v2544 = vsel %vm2270, %v2464, 0.0
        %v2545 = vrot.slane %v2544, 4
        %v2546 = vadd.f32 %v2544, %v2545
        %v2547 = vrot.slane %v2546, 2
        %v2548 = vadd.f32 %v2546, %v2547
        %v2549 = vrot.slane %v2548, 1
        %v2550 = vadd.f32 %v2548, %v2549
        %v2551 = vsel %vm2270, %v2465, 0.0
        %v2552 = vrot.slane %v2551, 4
        %v2553 = vadd.f32 %v2551, %v2552
        %v2554 = vrot.slane %v2553, 2
        %v2555 = vadd.f32 %v2553, %v2554
        %v2556 = vrot.slane %v2555, 1
        %v2557 = vadd.f32 %v2555, %v2556
        %v2558 = vsel %vm2270, %v2466, 0.0
        %v2559 = vrot.slane %v2558, 4
        %v2560 = vadd.f32 %v2558, %v2559
        %v2561 = vrot.slane %v2560, 2
        %v2562 = vadd.f32 %v2560, %v2561
        %v2563 = vrot.slane %v2562, 1
        %v2564 = vadd.f32 %v2562, %v2563
        %v2565 = vsel %vm2270, %v2467, 0.0
        %v2566 = vrot.slane %v2565, 4
        %v2567 = vadd.f32 %v2565, %v2566
        %v2568 = vrot.slane %v2567, 2
        %v2569 = vadd.f32 %v2567, %v2568
        %v2570 = vrot.slane %v2569, 1
        %v2571 = vadd.f32 %v2569, %v2570
        %v2572 = vsel %vm2270, %v2468, 0.0
        %v2573 = vrot.slane %v2572, 4
        %v2574 = vadd.f32 %v2572, %v2573
        %v2575 = vrot.slane %v2574, 2
        %v2576 = vadd.f32 %v2574, %v2575
        %v2577 = vrot.slane %v2576, 1
        %v2578 = vadd.f32 %v2576, %v2577
        %v2579 = vsel %vm2270, %v2469, 0.0
        %v2580 = vrot.slane %v2579, 4
        %v2581 = vadd.f32 %v2579, %v2580
        %v2582 = vrot.slane %v2581, 2
        %v2583 = vadd.f32 %v2581, %v2582
        %v2584 = vrot.slane %v2583, 1
        %v2585 = vadd.f32 %v2583, %v2584
        %v2586 = vsel %vm2270, %v2470, 0.0
        %v2587 = vrot.slane %v2586, 4
        %v2588 = vadd.f32 %v2586, %v2587
        %v2589 = vrot.slane %v2588, 2
        %v2590 = vadd.f32 %v2588, %v2589
        %v2591 = vrot.slane %v2590, 1
        %v2592 = vadd.f32 %v2590, %v2591
        %v2593 = vsel %vm2270, %v2471, 0.0
        %v2594 = vrot.slane %v2593, 4
        %v2595 = vadd.f32 %v2593, %v2594
        %v2596 = vrot.slane %v2595, 2
        %v2597 = vadd.f32 %v2595, %v2596
        %v2598 = vrot.slane %v2597, 1
        %v2599 = vadd.f32 %v2597, %v2598
        %v2600 = vmul.f32 %v2494, 0.5
        %v2601 = vmul.f32 %v2501, 0.5
        %v2602 = vmul.f32 %v2508, 0.5
        %v2603 = vmul.f32 %v2515, 0.5
        %v2604 = vmul.f32 %v2522, 0.5
        %v2605 = vmul.f32 %v2529, 0.5
        %v2606 = vmul.f32 %v2536, 0.5
        %v2607 = vmul.f32 %v2543, 0.5
        %v2608 = vmul.f32 %v2550, 0.5
        %v2609 = vmul.f32 %v2557, 0.5
        %v2610 = vmul.f32 %v2564, 0.5
        %v2611 = vmul.f32 %v2571, 0.5
        %v2612 = vmul.f32 %v2578, 0.5
        %v2613 = vmul.f32 %v2585, 0.5
        %v2614 = vmul.f32 %v2592, 0.5
        %v2615 = vmul.f32 %v2599, 0.5
        %v2632 = vsel %vm2415, %v2601, %v2600
        %v2633 = vsel %vm2417, %v2602, %v2632
        %v2634 = vsel %vm2419, %v2603, %v2633
        %v2635 = vsel %vm2421, %v2604, %v2634
        %v2636 = vsel %vm2423, %v2605, %v2635
        %v2637 = vsel %vm2425, %v2606, %v2636
        %v2638 = vsel %vm2427, %v2607, %v2637
        %v2639 = vsel %vm2415, %v2609, %v2608
        %v2640 = vsel %vm2417, %v2610, %v2639
        %v2641 = vsel %vm2419, %v2611, %v2640
        %v2642 = vsel %vm2421, %v2612, %v2641
        %v2643 = vsel %vm2423, %v2613, %v2642
        %v2644 = vsel %vm2425, %v2614, %v2643
        %v2645 = vsel %vm2427, %v2615, %v2644
        %s2648 = scalar_lea.vmem [#allocation3], 16
        %2649 = vst.msk [vmem:[%s2648] sm:$0xff] %vm2096, %v2638
        %2650 = vst.msk [vmem:[%s2648 + $0x8] sm:$0xff] %vm2096, %v2645
        %v2651 = vrot.slane %v2064, 4
        %v2652 = vrot.slane %v2066, 4
        %v2653 = vrot.slane %v2068, 4
        %v2654 = vrot.slane %v2070, 4
        %v2655 = vrot.slane %v2072, 4
        %v2656 = vrot.slane %v2074, 4
        %v2657 = vrot.slane %v2076, 4
        %v2658 = vrot.slane %v2078, 4
        %v2659 = vrot.slane %v2080, 4
        %v2660 = vrot.slane %v2082, 4
        %v2661 = vrot.slane %v2084, 4
        %v2662 = vrot.slane %v2086, 4
        %v2663 = vrot.slane %v2088, 4
        %v2664 = vrot.slane %v2090, 4
        %v2665 = vrot.slane %v2092, 4
        %v2666 = vrot.slane %v2094, 4
        %v2683 = vsel %vm2270, %v2651, 0.0
        %v2684 = vrot.slane %v2683, 4
        %v2685 = vadd.f32 %v2683, %v2684
        %v2686 = vrot.slane %v2685, 2
        %v2687 = vadd.f32 %v2685, %v2686
        %v2688 = vrot.slane %v2687, 1
        %v2689 = vadd.f32 %v2687, %v2688
        %v2690 = vsel %vm2270, %v2652, 0.0
        %v2691 = vrot.slane %v2690, 4
        %v2692 = vadd.f32 %v2690, %v2691
        %v2693 = vrot.slane %v2692, 2
        %v2694 = vadd.f32 %v2692, %v2693
        %v2695 = vrot.slane %v2694, 1
        %v2696 = vadd.f32 %v2694, %v2695
        %v2697 = vsel %vm2270, %v2653, 0.0
        %v2698 = vrot.slane %v2697, 4
        %v2699 = vadd.f32 %v2697, %v2698
        %v2700 = vrot.slane %v2699, 2
        %v2701 = vadd.f32 %v2699, %v2700
        %v2702 = vrot.slane %v2701, 1
        %v2703 = vadd.f32 %v2701, %v2702
        %v2704 = vsel %vm2270, %v2654, 0.0
        %v2705 = vrot.slane %v2704, 4
        %v2706 = vadd.f32 %v2704, %v2705
        %v2707 = vrot.slane %v2706, 2
        %v2708 = vadd.f32 %v2706, %v2707
        %v2709 = vrot.slane %v2708, 1
        %v2710 = vadd.f32 %v2708, %v2709
        %v2711 = vsel %vm2270, %v2655, 0.0
        %v2712 = vrot.slane %v2711, 4
        %v2713 = vadd.f32 %v2711, %v2712
        %v2714 = vrot.slane %v2713, 2
        %v2715 = vadd.f32 %v2713, %v2714
        %v2716 = vrot.slane %v2715, 1
        %v2717 = vadd.f32 %v2715, %v2716
        %v2718 = vsel %vm2270, %v2656, 0.0
        %v2719 = vrot.slane %v2718, 4
        %v2720 = vadd.f32 %v2718, %v2719
        %v2721 = vrot.slane %v2720, 2
        %v2722 = vadd.f32 %v2720, %v2721
        %v2723 = vrot.slane %v2722, 1
        %v2724 = vadd.f32 %v2722, %v2723
        %v2725 = vsel %vm2270, %v2657, 0.0
        %v2726 = vrot.slane %v2725, 4
        %v2727 = vadd.f32 %v2725, %v2726
        %v2728 = vrot.slane %v2727, 2
        %v2729 = vadd.f32 %v2727, %v2728
        %v2730 = vrot.slane %v2729, 1
        %v2731 = vadd.f32 %v2729, %v2730
        %v2732 = vsel %vm2270, %v2658, 0.0
        %v2733 = vrot.slane %v2732, 4
        %v2734 = vadd.f32 %v2732, %v2733
        %v2735 = vrot.slane %v2734, 2
        %v2736 = vadd.f32 %v2734, %v2735
        %v2737 = vrot.slane %v2736, 1
        %v2738 = vadd.f32 %v2736, %v2737
        %v2739 = vsel %vm2270, %v2659, 0.0
        %v2740 = vrot.slane %v2739, 4
        %v2741 = vadd.f32 %v2739, %v2740
        %v2742 = vrot.slane %v2741, 2
        %v2743 = vadd.f32 %v2741, %v2742
        %v2744 = vrot.slane %v2743, 1
        %v2745 = vadd.f32 %v2743, %v2744
        %v2746 = vsel %vm2270, %v2660, 0.0
        %v2747 = vrot.slane %v2746, 4
        %v2748 = vadd.f32 %v2746, %v2747
        %v2749 = vrot.slane %v2748, 2
        %v2750 = vadd.f32 %v2748, %v2749
        %v2751 = vrot.slane %v2750, 1
        %v2752 = vadd.f32 %v2750, %v2751
        %v2753 = vsel %vm2270, %v2661, 0.0
        %v2754 = vrot.slane %v2753, 4
        %v2755 = vadd.f32 %v2753, %v2754
        %v2756 = vrot.slane %v2755, 2
        %v2757 = vadd.f32 %v2755, %v2756
        %v2758 = vrot.slane %v2757, 1
        %v2759 = vadd.f32 %v2757, %v2758
        %v2760 = vsel %vm2270, %v2662, 0.0
        %v2761 = vrot.slane %v2760, 4
        %v2762 = vadd.f32 %v2760, %v2761
        %v2763 = vrot.slane %v2762, 2
        %v2764 = vadd.f32 %v2762, %v2763
        %v2765 = vrot.slane %v2764, 1
        %v2766 = vadd.f32 %v2764, %v2765
        %v2767 = vsel %vm2270, %v2663, 0.0
        %v2768 = vrot.slane %v2767, 4
        %v2769 = vadd.f32 %v2767, %v2768
        %v2770 = vrot.slane %v2769, 2
        %v2771 = vadd.f32 %v2769, %v2770
        %v2772 = vrot.slane %v2771, 1
        %v2773 = vadd.f32 %v2771, %v2772
        %v2774 = vsel %vm2270, %v2664, 0.0
        %v2775 = vrot.slane %v2774, 4
        %v2776 = vadd.f32 %v2774, %v2775
        %v2777 = vrot.slane %v2776, 2
        %v2778 = vadd.f32 %v2776, %v2777
        %v2779 = vrot.slane %v2778, 1
        %v2780 = vadd.f32 %v2778, %v2779
        %v2781 = vsel %vm2270, %v2665, 0.0
        %v2782 = vrot.slane %v2781, 4
        %v2783 = vadd.f32 %v2781, %v2782
        %v2784 = vrot.slane %v2783, 2
        %v2785 = vadd.f32 %v2783, %v2784
        %v2786 = vrot.slane %v2785, 1
        %v2787 = vadd.f32 %v2785, %v2786
        %v2788 = vsel %vm2270, %v2666, 0.0
        %v2789 = vrot.slane %v2788, 4
        %v2790 = vadd.f32 %v2788, %v2789
        %v2791 = vrot.slane %v2790, 2
        %v2792 = vadd.f32 %v2790, %v2791
        %v2793 = vrot.slane %v2792, 1
        %v2794 = vadd.f32 %v2792, %v2793
        %v2795 = vmul.f32 %v2689, 0.5
        %v2796 = vmul.f32 %v2696, 0.5
        %v2797 = vmul.f32 %v2703, 0.5
        %v2798 = vmul.f32 %v2710, 0.5
        %v2799 = vmul.f32 %v2717, 0.5
        %v2800 = vmul.f32 %v2724, 0.5
        %v2801 = vmul.f32 %v2731, 0.5
        %v2802 = vmul.f32 %v2738, 0.5
        %v2803 = vmul.f32 %v2745, 0.5
        %v2804 = vmul.f32 %v2752, 0.5
        %v2805 = vmul.f32 %v2759, 0.5
        %v2806 = vmul.f32 %v2766, 0.5
        %v2807 = vmul.f32 %v2773, 0.5
        %v2808 = vmul.f32 %v2780, 0.5
        %v2809 = vmul.f32 %v2787, 0.5
        %v2810 = vmul.f32 %v2794, 0.5
        %v2827 = vsel %vm2415, %v2796, %v2795
        %v2828 = vsel %vm2417, %v2797, %v2827
        %v2829 = vsel %vm2419, %v2798, %v2828
        %v2830 = vsel %vm2421, %v2799, %v2829
        %v2831 = vsel %vm2423, %v2800, %v2830
        %v2832 = vsel %vm2425, %v2801, %v2831
        %v2833 = vsel %vm2427, %v2802, %v2832
        %v2834 = vsel %vm2415, %v2804, %v2803
        %v2835 = vsel %vm2417, %v2805, %v2834
        %v2836 = vsel %vm2419, %v2806, %v2835
        %v2837 = vsel %vm2421, %v2807, %v2836
        %v2838 = vsel %vm2423, %v2808, %v2837
        %v2839 = vsel %vm2425, %v2809, %v2838
        %v2840 = vsel %vm2427, %v2810, %v2839
        %s2843 = scalar_lea.vmem [#allocation3], 32
        %2844 = vst.msk [vmem:[%s2843] sm:$0xff] %vm2096, %v2833
        %2845 = vst.msk [vmem:[%s2843 + $0x8] sm:$0xff] %vm2096, %v2840
        %v2846 = vrot.slane %v2064, 6
        %v2847 = vrot.slane %v2066, 6
        %v2848 = vrot.slane %v2068, 6
        %v2849 = vrot.slane %v2070, 6
        %v2850 = vrot.slane %v2072, 6
        %v2851 = vrot.slane %v2074, 6
        %v2852 = vrot.slane %v2076, 6
        %v2853 = vrot.slane %v2078, 6
        %v2854 = vrot.slane %v2080, 6
        %v2855 = vrot.slane %v2082, 6
        %v2856 = vrot.slane %v2084, 6
        %v2857 = vrot.slane %v2086, 6
        %v2858 = vrot.slane %v2088, 6
        %v2859 = vrot.slane %v2090, 6
        %v2860 = vrot.slane %v2092, 6
        %v2861 = vrot.slane %v2094, 6
        %v2878 = vsel %vm2270, %v2846, 0.0
        %v2879 = vrot.slane %v2878, 4
        %v2880 = vadd.f32 %v2878, %v2879
        %v2881 = vrot.slane %v2880, 2
        %v2882 = vadd.f32 %v2880, %v2881
        %v2883 = vrot.slane %v2882, 1
        %v2884 = vadd.f32 %v2882, %v2883
        %v2885 = vsel %vm2270, %v2847, 0.0
        %v2886 = vrot.slane %v2885, 4
        %v2887 = vadd.f32 %v2885, %v2886
        %v2888 = vrot.slane %v2887, 2
        %v2889 = vadd.f32 %v2887, %v2888
        %v2890 = vrot.slane %v2889, 1
        %v2891 = vadd.f32 %v2889, %v2890
        %v2892 = vsel %vm2270, %v2848, 0.0
        %v2893 = vrot.slane %v2892, 4
        %v2894 = vadd.f32 %v2892, %v2893
        %v2895 = vrot.slane %v2894, 2
        %v2896 = vadd.f32 %v2894, %v2895
        %v2897 = vrot.slane %v2896, 1
        %v2898 = vadd.f32 %v2896, %v2897
        %v2899 = vsel %vm2270, %v2849, 0.0
        %v2900 = vrot.slane %v2899, 4
        %v2901 = vadd.f32 %v2899, %v2900
        %v2902 = vrot.slane %v2901, 2
        %v2903 = vadd.f32 %v2901, %v2902
        %v2904 = vrot.slane %v2903, 1
        %v2905 = vadd.f32 %v2903, %v2904
        %v2906 = vsel %vm2270, %v2850, 0.0
        %v2907 = vrot.slane %v2906, 4
        %v2908 = vadd.f32 %v2906, %v2907
        %v2909 = vrot.slane %v2908, 2
        %v2910 = vadd.f32 %v2908, %v2909
        %v2911 = vrot.slane %v2910, 1
        %v2912 = vadd.f32 %v2910, %v2911
        %v2913 = vsel %vm2270, %v2851, 0.0
        %v2914 = vrot.slane %v2913, 4
        %v2915 = vadd.f32 %v2913, %v2914
        %v2916 = vrot.slane %v2915, 2
        %v2917 = vadd.f32 %v2915, %v2916
        %v2918 = vrot.slane %v2917, 1
        %v2919 = vadd.f32 %v2917, %v2918
        %v2920 = vsel %vm2270, %v2852, 0.0
        %v2921 = vrot.slane %v2920, 4
        %v2922 = vadd.f32 %v2920, %v2921
        %v2923 = vrot.slane %v2922, 2
        %v2924 = vadd.f32 %v2922, %v2923
        %v2925 = vrot.slane %v2924, 1
        %v2926 = vadd.f32 %v2924, %v2925
        %v2927 = vsel %vm2270, %v2853, 0.0
        %v2928 = vrot.slane %v2927, 4
        %v2929 = vadd.f32 %v2927, %v2928
        %v2930 = vrot.slane %v2929, 2
        %v2931 = vadd.f32 %v2929, %v2930
        %v2932 = vrot.slane %v2931, 1
        %v2933 = vadd.f32 %v2931, %v2932
        %v2934 = vsel %vm2270, %v2854, 0.0
        %v2935 = vrot.slane %v2934, 4
        %v2936 = vadd.f32 %v2934, %v2935
        %v2937 = vrot.slane %v2936, 2
        %v2938 = vadd.f32 %v2936, %v2937
        %v2939 = vrot.slane %v2938, 1
        %v2940 = vadd.f32 %v2938, %v2939
        %v2941 = vsel %vm2270, %v2855, 0.0
        %v2942 = vrot.slane %v2941, 4
        %v2943 = vadd.f32 %v2941, %v2942
        %v2944 = vrot.slane %v2943, 2
        %v2945 = vadd.f32 %v2943, %v2944
        %v2946 = vrot.slane %v2945, 1
        %v2947 = vadd.f32 %v2945, %v2946
        %v2948 = vsel %vm2270, %v2856, 0.0
        %v2949 = vrot.slane %v2948, 4
        %v2950 = vadd.f32 %v2948, %v2949
        %v2951 = vrot.slane %v2950, 2
        %v2952 = vadd.f32 %v2950, %v2951
        %v2953 = vrot.slane %v2952, 1
        %v2954 = vadd.f32 %v2952, %v2953
        %v2955 = vsel %vm2270, %v2857, 0.0
        %v2956 = vrot.slane %v2955, 4
        %v2957 = vadd.f32 %v2955, %v2956
        %v2958 = vrot.slane %v2957, 2
        %v2959 = vadd.f32 %v2957, %v2958
        %v2960 = vrot.slane %v2959, 1
        %v2961 = vadd.f32 %v2959, %v2960
        %v2962 = vsel %vm2270, %v2858, 0.0
        %v2963 = vrot.slane %v2962, 4
        %v2964 = vadd.f32 %v2962, %v2963
        %v2965 = vrot.slane %v2964, 2
        %v2966 = vadd.f32 %v2964, %v2965
        %v2967 = vrot.slane %v2966, 1
        %v2968 = vadd.f32 %v2966, %v2967
        %v2969 = vsel %vm2270, %v2859, 0.0
        %v2970 = vrot.slane %v2969, 4
        %v2971 = vadd.f32 %v2969, %v2970
        %v2972 = vrot.slane %v2971, 2
        %v2973 = vadd.f32 %v2971, %v2972
        %v2974 = vrot.slane %v2973, 1
        %v2975 = vadd.f32 %v2973, %v2974
        %v2976 = vsel %vm2270, %v2860, 0.0
        %v2977 = vrot.slane %v2976, 4
        %v2978 = vadd.f32 %v2976, %v2977
        %v2979 = vrot.slane %v2978, 2
        %v2980 = vadd.f32 %v2978, %v2979
        %v2981 = vrot.slane %v2980, 1
        %v2982 = vadd.f32 %v2980, %v2981
        %v2983 = vsel %vm2270, %v2861, 0.0
        %v2984 = vrot.slane %v2983, 4
        %v2985 = vadd.f32 %v2983, %v2984
        %v2986 = vrot.slane %v2985, 2
        %v2987 = vadd.f32 %v2985, %v2986
        %v2988 = vrot.slane %v2987, 1
        %v2989 = vadd.f32 %v2987, %v2988
        %v2990 = vmul.f32 %v2884, 0.5
        %v2991 = vmul.f32 %v2891, 0.5
        %v2992 = vmul.f32 %v2898, 0.5
        %v2993 = vmul.f32 %v2905, 0.5
        %v2994 = vmul.f32 %v2912, 0.5
        %v2995 = vmul.f32 %v2919, 0.5
        %v2996 = vmul.f32 %v2926, 0.5
        %v2997 = vmul.f32 %v2933, 0.5
        %v2998 = vmul.f32 %v2940, 0.5
        %v2999 = vmul.f32 %v2947, 0.5
        %v3000 = vmul.f32 %v2954, 0.5
        %v3001 = vmul.f32 %v2961, 0.5
        %v3002 = vmul.f32 %v2968, 0.5
        %v3003 = vmul.f32 %v2975, 0.5
        %v3004 = vmul.f32 %v2982, 0.5
        %v3005 = vmul.f32 %v2989, 0.5
        %v3022 = vsel %vm2415, %v2991, %v2990
        %v3023 = vsel %vm2417, %v2992, %v3022
        %v3024 = vsel %vm2419, %v2993, %v3023
        %v3025 = vsel %vm2421, %v2994, %v3024
        %v3026 = vsel %vm2423, %v2995, %v3025
        %v3027 = vsel %vm2425, %v2996, %v3026
        %v3028 = vsel %vm2427, %v2997, %v3027
        %v3029 = vsel %vm2415, %v2999, %v2998
        %v3030 = vsel %vm2417, %v3000, %v3029
        %v3031 = vsel %vm2419, %v3001, %v3030
        %v3032 = vsel %vm2421, %v3002, %v3031
        %v3033 = vsel %vm2423, %v3003, %v3032
        %v3034 = vsel %vm2425, %v3004, %v3033
        %v3035 = vsel %vm2427, %v3005, %v3034
        %s3038 = scalar_lea.vmem [#allocation3], 48
        %3039 = vst.msk [vmem:[%s3038] sm:$0xff] %vm2096, %v3028
        %3040 = vst.msk [vmem:[%s3038 + $0x8] sm:$0xff] %vm2096, %v3035
        %v3041 = vsel %vm2270, %v2065, 0.0
        %v3042 = vrot.slane %v3041, 4
        %v3043 = vadd.f32 %v3041, %v3042
        %v3044 = vrot.slane %v3043, 2
        %v3045 = vadd.f32 %v3043, %v3044
        %v3046 = vrot.slane %v3045, 1
        %v3047 = vadd.f32 %v3045, %v3046
        %v3048 = vsel %vm2270, %v2067, 0.0
        %v3049 = vrot.slane %v3048, 4
        %v3050 = vadd.f32 %v3048, %v3049
        %v3051 = vrot.slane %v3050, 2
        %v3052 = vadd.f32 %v3050, %v3051
        %v3053 = vrot.slane %v3052, 1
        %v3054 = vadd.f32 %v3052, %v3053
        %v3055 = vsel %vm2270, %v2069, 0.0
        %v3056 = vrot.slane %v3055, 4
        %v3057 = vadd.f32 %v3055, %v3056
        %v3058 = vrot.slane %v3057, 2
        %v3059 = vadd.f32 %v3057, %v3058
        %v3060 = vrot.slane %v3059, 1
        %v3061 = vadd.f32 %v3059, %v3060
        %v3062 = vsel %vm2270, %v2071, 0.0
        %v3063 = vrot.slane %v3062, 4
        %v3064 = vadd.f32 %v3062, %v3063
        %v3065 = vrot.slane %v3064, 2
        %v3066 = vadd.f32 %v3064, %v3065
        %v3067 = vrot.slane %v3066, 1
        %v3068 = vadd.f32 %v3066, %v3067
        %v3069 = vsel %vm2270, %v2073, 0.0
        %v3070 = vrot.slane %v3069, 4
        %v3071 = vadd.f32 %v3069, %v3070
        %v3072 = vrot.slane %v3071, 2
        %v3073 = vadd.f32 %v3071, %v3072
        %v3074 = vrot.slane %v3073, 1
        %v3075 = vadd.f32 %v3073, %v3074
        %v3076 = vsel %vm2270, %v2075, 0.0
        %v3077 = vrot.slane %v3076, 4
        %v3078 = vadd.f32 %v3076, %v3077
        %v3079 = vrot.slane %v3078, 2
        %v3080 = vadd.f32 %v3078, %v3079
        %v3081 = vrot.slane %v3080, 1
        %v3082 = vadd.f32 %v3080, %v3081
        %v3083 = vsel %vm2270, %v2077, 0.0
        %v3084 = vrot.slane %v3083, 4
        %v3085 = vadd.f32 %v3083, %v3084
        %v3086 = vrot.slane %v3085, 2
        %v3087 = vadd.f32 %v3085, %v3086
        %v3088 = vrot.slane %v3087, 1
        %v3089 = vadd.f32 %v3087, %v3088
        %v3090 = vsel %vm2270, %v2079, 0.0
        %v3091 = vrot.slane %v3090, 4
        %v3092 = vadd.f32 %v3090, %v3091
        %v3093 = vrot.slane %v3092, 2
        %v3094 = vadd.f32 %v3092, %v3093
        %v3095 = vrot.slane %v3094, 1
        %v3096 = vadd.f32 %v3094, %v3095
        %v3097 = vsel %vm2270, %v2081, 0.0
        %v3098 = vrot.slane %v3097, 4
        %v3099 = vadd.f32 %v3097, %v3098
        %v3100 = vrot.slane %v3099, 2
        %v3101 = vadd.f32 %v3099, %v3100
        %v3102 = vrot.slane %v3101, 1
        %v3103 = vadd.f32 %v3101, %v3102
        %v3104 = vsel %vm2270, %v2083, 0.0
        %v3105 = vrot.slane %v3104, 4
        %v3106 = vadd.f32 %v3104, %v3105
        %v3107 = vrot.slane %v3106, 2
        %v3108 = vadd.f32 %v3106, %v3107
        %v3109 = vrot.slane %v3108, 1
        %v3110 = vadd.f32 %v3108, %v3109
        %v3111 = vsel %vm2270, %v2085, 0.0
        %v3112 = vrot.slane %v3111, 4
        %v3113 = vadd.f32 %v3111, %v3112
        %v3114 = vrot.slane %v3113, 2
        %v3115 = vadd.f32 %v3113, %v3114
        %v3116 = vrot.slane %v3115, 1
        %v3117 = vadd.f32 %v3115, %v3116
        %v3118 = vsel %vm2270, %v2087, 0.0
        %v3119 = vrot.slane %v3118, 4
        %v3120 = vadd.f32 %v3118, %v3119
        %v3121 = vrot.slane %v3120, 2
        %v3122 = vadd.f32 %v3120, %v3121
        %v3123 = vrot.slane %v3122, 1
        %v3124 = vadd.f32 %v3122, %v3123
        %v3125 = vsel %vm2270, %v2089, 0.0
        %v3126 = vrot.slane %v3125, 4
        %v3127 = vadd.f32 %v3125, %v3126
        %v3128 = vrot.slane %v3127, 2
        %v3129 = vadd.f32 %v3127, %v3128
        %v3130 = vrot.slane %v3129, 1
        %v3131 = vadd.f32 %v3129, %v3130
        %v3132 = vsel %vm2270, %v2091, 0.0
        %v3133 = vrot.slane %v3132, 4
        %v3134 = vadd.f32 %v3132, %v3133
        %v3135 = vrot.slane %v3134, 2
        %v3136 = vadd.f32 %v3134, %v3135
        %v3137 = vrot.slane %v3136, 1
        %v3138 = vadd.f32 %v3136, %v3137
        %v3139 = vsel %vm2270, %v2093, 0.0
        %v3140 = vrot.slane %v3139, 4
        %v3141 = vadd.f32 %v3139, %v3140
        %v3142 = vrot.slane %v3141, 2
        %v3143 = vadd.f32 %v3141, %v3142
        %v3144 = vrot.slane %v3143, 1
        %v3145 = vadd.f32 %v3143, %v3144
        %v3146 = vsel %vm2270, %v2095, 0.0
        %v3147 = vrot.slane %v3146, 4
        %v3148 = vadd.f32 %v3146, %v3147
        %v3149 = vrot.slane %v3148, 2
        %v3150 = vadd.f32 %v3148, %v3149
        %v3151 = vrot.slane %v3150, 1
        %v3152 = vadd.f32 %v3150, %v3151
        %v3153 = vmul.f32 %v3047, 0.5
        %v3154 = vmul.f32 %v3054, 0.5
        %v3155 = vmul.f32 %v3061, 0.5
        %v3156 = vmul.f32 %v3068, 0.5
        %v3157 = vmul.f32 %v3075, 0.5
        %v3158 = vmul.f32 %v3082, 0.5
        %v3159 = vmul.f32 %v3089, 0.5
        %v3160 = vmul.f32 %v3096, 0.5
        %v3161 = vmul.f32 %v3103, 0.5
        %v3162 = vmul.f32 %v3110, 0.5
        %v3163 = vmul.f32 %v3117, 0.5
        %v3164 = vmul.f32 %v3124, 0.5
        %v3165 = vmul.f32 %v3131, 0.5
        %v3166 = vmul.f32 %v3138, 0.5
        %v3167 = vmul.f32 %v3145, 0.5
        %v3168 = vmul.f32 %v3152, 0.5
        %v3185 = vsel %vm2415, %v3154, %v3153
        %v3186 = vsel %vm2417, %v3155, %v3185
        %v3187 = vsel %vm2419, %v3156, %v3186
        %v3188 = vsel %vm2421, %v3157, %v3187
        %v3189 = vsel %vm2423, %v3158, %v3188
        %v3190 = vsel %vm2425, %v3159, %v3189
        %v3191 = vsel %vm2427, %v3160, %v3190
        %v3192 = vsel %vm2415, %v3162, %v3161
        %v3193 = vsel %vm2417, %v3163, %v3192
        %v3194 = vsel %vm2419, %v3164, %v3193
        %v3195 = vsel %vm2421, %v3165, %v3194
        %v3196 = vsel %vm2423, %v3166, %v3195
        %v3197 = vsel %vm2425, %v3167, %v3196
        %v3198 = vsel %vm2427, %v3168, %v3197
        %s3201 = scalar_lea.vmem [#allocation3], 64
        %3202 = vst.msk [vmem:[%s3201] sm:$0xff] %vm2096, %v3191
        %3203 = vst.msk [vmem:[%s3201 + $0x8] sm:$0xff] %vm2096, %v3198
        %v3220 = vrot.slane %v2065, 2
        %v3221 = vrot.slane %v2067, 2
        %v3222 = vrot.slane %v2069, 2
        %v3223 = vrot.slane %v2071, 2
        %v3224 = vrot.slane %v2073, 2
        %v3225 = vrot.slane %v2075, 2
        %v3226 = vrot.slane %v2077, 2
        %v3227 = vrot.slane %v2079, 2
        %v3228 = vrot.slane %v2081, 2
        %v3229 = vrot.slane %v2083, 2
        %v3230 = vrot.slane %v2085, 2
        %v3231 = vrot.slane %v2087, 2
        %v3232 = vrot.slane %v2089, 2
        %v3233 = vrot.slane %v2091, 2
        %v3234 = vrot.slane %v2093, 2
        %v3235 = vrot.slane %v2095, 2
        %v3252 = vsel %vm2270, %v3220, 0.0
        %v3253 = vrot.slane %v3252, 4
        %v3254 = vadd.f32 %v3252, %v3253
        %v3255 = vrot.slane %v3254, 2
        %v3256 = vadd.f32 %v3254, %v3255
        %v3257 = vrot.slane %v3256, 1
        %v3258 = vadd.f32 %v3256, %v3257
        %v3259 = vsel %vm2270, %v3221, 0.0
        %v3260 = vrot.slane %v3259, 4
        %v3261 = vadd.f32 %v3259, %v3260
        %v3262 = vrot.slane %v3261, 2
        %v3263 = vadd.f32 %v3261, %v3262
        %v3264 = vrot.slane %v3263, 1
        %v3265 = vadd.f32 %v3263, %v3264
        %v3266 = vsel %vm2270, %v3222, 0.0
        %v3267 = vrot.slane %v3266, 4
        %v3268 = vadd.f32 %v3266, %v3267
        %v3269 = vrot.slane %v3268, 2
        %v3270 = vadd.f32 %v3268, %v3269
        %v3271 = vrot.slane %v3270, 1
        %v3272 = vadd.f32 %v3270, %v3271
        %v3273 = vsel %vm2270, %v3223, 0.0
        %v3274 = vrot.slane %v3273, 4
        %v3275 = vadd.f32 %v3273, %v3274
        %v3276 = vrot.slane %v3275, 2
        %v3277 = vadd.f32 %v3275, %v3276
        %v3278 = vrot.slane %v3277, 1
        %v3279 = vadd.f32 %v3277, %v3278
        %v3280 = vsel %vm2270, %v3224, 0.0
        %v3281 = vrot.slane %v3280, 4
        %v3282 = vadd.f32 %v3280, %v3281
        %v3283 = vrot.slane %v3282, 2
        %v3284 = vadd.f32 %v3282, %v3283
        %v3285 = vrot.slane %v3284, 1
        %v3286 = vadd.f32 %v3284, %v3285
        %v3287 = vsel %vm2270, %v3225, 0.0
        %v3288 = vrot.slane %v3287, 4
        %v3289 = vadd.f32 %v3287, %v3288
        %v3290 = vrot.slane %v3289, 2
        %v3291 = vadd.f32 %v3289, %v3290
        %v3292 = vrot.slane %v3291, 1
        %v3293 = vadd.f32 %v3291, %v3292
        %v3294 = vsel %vm2270, %v3226, 0.0
        %v3295 = vrot.slane %v3294, 4
        %v3296 = vadd.f32 %v3294, %v3295
        %v3297 = vrot.slane %v3296, 2
        %v3298 = vadd.f32 %v3296, %v3297
        %v3299 = vrot.slane %v3298, 1
        %v3300 = vadd.f32 %v3298, %v3299
        %v3301 = vsel %vm2270, %v3227, 0.0
        %v3302 = vrot.slane %v3301, 4
        %v3303 = vadd.f32 %v3301, %v3302
        %v3304 = vrot.slane %v3303, 2
        %v3305 = vadd.f32 %v3303, %v3304
        %v3306 = vrot.slane %v3305, 1
        %v3307 = vadd.f32 %v3305, %v3306
        %v3308 = vsel %vm2270, %v3228, 0.0
        %v3309 = vrot.slane %v3308, 4
        %v3310 = vadd.f32 %v3308, %v3309
        %v3311 = vrot.slane %v3310, 2
        %v3312 = vadd.f32 %v3310, %v3311
        %v3313 = vrot.slane %v3312, 1
        %v3314 = vadd.f32 %v3312, %v3313
        %v3315 = vsel %vm2270, %v3229, 0.0
        %v3316 = vrot.slane %v3315, 4
        %v3317 = vadd.f32 %v3315, %v3316
        %v3318 = vrot.slane %v3317, 2
        %v3319 = vadd.f32 %v3317, %v3318
        %v3320 = vrot.slane %v3319, 1
        %v3321 = vadd.f32 %v3319, %v3320
        %v3322 = vsel %vm2270, %v3230, 0.0
        %v3323 = vrot.slane %v3322, 4
        %v3324 = vadd.f32 %v3322, %v3323
        %v3325 = vrot.slane %v3324, 2
        %v3326 = vadd.f32 %v3324, %v3325
        %v3327 = vrot.slane %v3326, 1
        %v3328 = vadd.f32 %v3326, %v3327
        %v3329 = vsel %vm2270, %v3231, 0.0
        %v3330 = vrot.slane %v3329, 4
        %v3331 = vadd.f32 %v3329, %v3330
        %v3332 = vrot.slane %v3331, 2
        %v3333 = vadd.f32 %v3331, %v3332
        %v3334 = vrot.slane %v3333, 1
        %v3335 = vadd.f32 %v3333, %v3334
        %v3336 = vsel %vm2270, %v3232, 0.0
        %v3337 = vrot.slane %v3336, 4
        %v3338 = vadd.f32 %v3336, %v3337
        %v3339 = vrot.slane %v3338, 2
        %v3340 = vadd.f32 %v3338, %v3339
        %v3341 = vrot.slane %v3340, 1
        %v3342 = vadd.f32 %v3340, %v3341
        %v3343 = vsel %vm2270, %v3233, 0.0
        %v3344 = vrot.slane %v3343, 4
        %v3345 = vadd.f32 %v3343, %v3344
        %v3346 = vrot.slane %v3345, 2
        %v3347 = vadd.f32 %v3345, %v3346
        %v3348 = vrot.slane %v3347, 1
        %v3349 = vadd.f32 %v3347, %v3348
        %v3350 = vsel %vm2270, %v3234, 0.0
        %v3351 = vrot.slane %v3350, 4
        %v3352 = vadd.f32 %v3350, %v3351
        %v3353 = vrot.slane %v3352, 2
        %v3354 = vadd.f32 %v3352, %v3353
        %v3355 = vrot.slane %v3354, 1
        %v3356 = vadd.f32 %v3354, %v3355
        %v3357 = vsel %vm2270, %v3235, 0.0
        %v3358 = vrot.slane %v3357, 4
        %v3359 = vadd.f32 %v3357, %v3358
        %v3360 = vrot.slane %v3359, 2
        %v3361 = vadd.f32 %v3359, %v3360
        %v3362 = vrot.slane %v3361, 1
        %v3363 = vadd.f32 %v3361, %v3362
        %v3364 = vmul.f32 %v3258, 0.5
        %v3365 = vmul.f32 %v3265, 0.5
        %v3366 = vmul.f32 %v3272, 0.5
        %v3367 = vmul.f32 %v3279, 0.5
        %v3368 = vmul.f32 %v3286, 0.5
        %v3369 = vmul.f32 %v3293, 0.5
        %v3370 = vmul.f32 %v3300, 0.5
        %v3371 = vmul.f32 %v3307, 0.5
        %v3372 = vmul.f32 %v3314, 0.5
        %v3373 = vmul.f32 %v3321, 0.5
        %v3374 = vmul.f32 %v3328, 0.5
        %v3375 = vmul.f32 %v3335, 0.5
        %v3376 = vmul.f32 %v3342, 0.5
        %v3377 = vmul.f32 %v3349, 0.5
        %v3378 = vmul.f32 %v3356, 0.5
        %v3379 = vmul.f32 %v3363, 0.5
        %v3396 = vsel %vm2415, %v3365, %v3364
        %v3397 = vsel %vm2417, %v3366, %v3396
        %v3398 = vsel %vm2419, %v3367, %v3397
        %v3399 = vsel %vm2421, %v3368, %v3398
        %v3400 = vsel %vm2423, %v3369, %v3399
        %v3401 = vsel %vm2425, %v3370, %v3400
        %v3402 = vsel %vm2427, %v3371, %v3401
        %v3403 = vsel %vm2415, %v3373, %v3372
        %v3404 = vsel %vm2417, %v3374, %v3403
        %v3405 = vsel %vm2419, %v3375, %v3404
        %v3406 = vsel %vm2421, %v3376, %v3405
        %v3407 = vsel %vm2423, %v3377, %v3406
        %v3408 = vsel %vm2425, %v3378, %v3407
        %v3409 = vsel %vm2427, %v3379, %v3408
        %s3412 = scalar_lea.vmem [#allocation3], 80
        %3413 = vst.msk [vmem:[%s3412] sm:$0xff] %vm2096, %v3402
        %3414 = vst.msk [vmem:[%s3412 + $0x8] sm:$0xff] %vm2096, %v3409
        %v3415 = vrot.slane %v2065, 4
        %v3416 = vrot.slane %v2067, 4
        %v3417 = vrot.slane %v2069, 4
        %v3418 = vrot.slane %v2071, 4
        %v3419 = vrot.slane %v2073, 4
        %v3420 = vrot.slane %v2075, 4
        %v3421 = vrot.slane %v2077, 4
        %v3422 = vrot.slane %v2079, 4
        %v3423 = vrot.slane %v2081, 4
        %v3424 = vrot.slane %v2083, 4
        %v3425 = vrot.slane %v2085, 4
        %v3426 = vrot.slane %v2087, 4
        %v3427 = vrot.slane %v2089, 4
        %v3428 = vrot.slane %v2091, 4
        %v3429 = vrot.slane %v2093, 4
        %v3430 = vrot.slane %v2095, 4
        %v3447 = vsel %vm2270, %v3415, 0.0
        %v3448 = vrot.slane %v3447, 4
        %v3449 = vadd.f32 %v3447, %v3448
        %v3450 = vrot.slane %v3449, 2
        %v3451 = vadd.f32 %v3449, %v3450
        %v3452 = vrot.slane %v3451, 1
        %v3453 = vadd.f32 %v3451, %v3452
        %v3454 = vsel %vm2270, %v3416, 0.0
        %v3455 = vrot.slane %v3454, 4
        %v3456 = vadd.f32 %v3454, %v3455
        %v3457 = vrot.slane %v3456, 2
        %v3458 = vadd.f32 %v3456, %v3457
        %v3459 = vrot.slane %v3458, 1
        %v3460 = vadd.f32 %v3458, %v3459
        %v3461 = vsel %vm2270, %v3417, 0.0
        %v3462 = vrot.slane %v3461, 4
        %v3463 = vadd.f32 %v3461, %v3462
        %v3464 = vrot.slane %v3463, 2
        %v3465 = vadd.f32 %v3463, %v3464
        %v3466 = vrot.slane %v3465, 1
        %v3467 = vadd.f32 %v3465, %v3466
        %v3468 = vsel %vm2270, %v3418, 0.0
        %v3469 = vrot.slane %v3468, 4
        %v3470 = vadd.f32 %v3468, %v3469
        %v3471 = vrot.slane %v3470, 2
        %v3472 = vadd.f32 %v3470, %v3471
        %v3473 = vrot.slane %v3472, 1
        %v3474 = vadd.f32 %v3472, %v3473
        %v3475 = vsel %vm2270, %v3419, 0.0
        %v3476 = vrot.slane %v3475, 4
        %v3477 = vadd.f32 %v3475, %v3476
        %v3478 = vrot.slane %v3477, 2
        %v3479 = vadd.f32 %v3477, %v3478
        %v3480 = vrot.slane %v3479, 1
        %v3481 = vadd.f32 %v3479, %v3480
        %v3482 = vsel %vm2270, %v3420, 0.0
        %v3483 = vrot.slane %v3482, 4
        %v3484 = vadd.f32 %v3482, %v3483
        %v3485 = vrot.slane %v3484, 2
        %v3486 = vadd.f32 %v3484, %v3485
        %v3487 = vrot.slane %v3486, 1
        %v3488 = vadd.f32 %v3486, %v3487
        %v3489 = vsel %vm2270, %v3421, 0.0
        %v3490 = vrot.slane %v3489, 4
        %v3491 = vadd.f32 %v3489, %v3490
        %v3492 = vrot.slane %v3491, 2
        %v3493 = vadd.f32 %v3491, %v3492
        %v3494 = vrot.slane %v3493, 1
        %v3495 = vadd.f32 %v3493, %v3494
        %v3496 = vsel %vm2270, %v3422, 0.0
        %v3497 = vrot.slane %v3496, 4
        %v3498 = vadd.f32 %v3496, %v3497
        %v3499 = vrot.slane %v3498, 2
        %v3500 = vadd.f32 %v3498, %v3499
        %v3501 = vrot.slane %v3500, 1
        %v3502 = vadd.f32 %v3500, %v3501
        %v3503 = vsel %vm2270, %v3423, 0.0
        %v3504 = vrot.slane %v3503, 4
        %v3505 = vadd.f32 %v3503, %v3504
        %v3506 = vrot.slane %v3505, 2
        %v3507 = vadd.f32 %v3505, %v3506
        %v3508 = vrot.slane %v3507, 1
        %v3509 = vadd.f32 %v3507, %v3508
        %v3510 = vsel %vm2270, %v3424, 0.0
        %v3511 = vrot.slane %v3510, 4
        %v3512 = vadd.f32 %v3510, %v3511
        %v3513 = vrot.slane %v3512, 2
        %v3514 = vadd.f32 %v3512, %v3513
        %v3515 = vrot.slane %v3514, 1
        %v3516 = vadd.f32 %v3514, %v3515
        %v3517 = vsel %vm2270, %v3425, 0.0
        %v3518 = vrot.slane %v3517, 4
        %v3519 = vadd.f32 %v3517, %v3518
        %v3520 = vrot.slane %v3519, 2
        %v3521 = vadd.f32 %v3519, %v3520
        %v3522 = vrot.slane %v3521, 1
        %v3523 = vadd.f32 %v3521, %v3522
        %v3524 = vsel %vm2270, %v3426, 0.0
        %v3525 = vrot.slane %v3524, 4
        %v3526 = vadd.f32 %v3524, %v3525
        %v3527 = vrot.slane %v3526, 2
        %v3528 = vadd.f32 %v3526, %v3527
        %v3529 = vrot.slane %v3528, 1
        %v3530 = vadd.f32 %v3528, %v3529
        %v3531 = vsel %vm2270, %v3427, 0.0
        %v3532 = vrot.slane %v3531, 4
        %v3533 = vadd.f32 %v3531, %v3532
        %v3534 = vrot.slane %v3533, 2
        %v3535 = vadd.f32 %v3533, %v3534
        %v3536 = vrot.slane %v3535, 1
        %v3537 = vadd.f32 %v3535, %v3536
        %v3538 = vsel %vm2270, %v3428, 0.0
        %v3539 = vrot.slane %v3538, 4
        %v3540 = vadd.f32 %v3538, %v3539
        %v3541 = vrot.slane %v3540, 2
        %v3542 = vadd.f32 %v3540, %v3541
        %v3543 = vrot.slane %v3542, 1
        %v3544 = vadd.f32 %v3542, %v3543
        %v3545 = vsel %vm2270, %v3429, 0.0
        %v3546 = vrot.slane %v3545, 4
        %v3547 = vadd.f32 %v3545, %v3546
        %v3548 = vrot.slane %v3547, 2
        %v3549 = vadd.f32 %v3547, %v3548
        %v3550 = vrot.slane %v3549, 1
        %v3551 = vadd.f32 %v3549, %v3550
        %v3552 = vsel %vm2270, %v3430, 0.0
        %v3553 = vrot.slane %v3552, 4
        %v3554 = vadd.f32 %v3552, %v3553
        %v3555 = vrot.slane %v3554, 2
        %v3556 = vadd.f32 %v3554, %v3555
        %v3557 = vrot.slane %v3556, 1
        %v3558 = vadd.f32 %v3556, %v3557
        %v3559 = vmul.f32 %v3453, 0.5
        %v3560 = vmul.f32 %v3460, 0.5
        %v3561 = vmul.f32 %v3467, 0.5
        %v3562 = vmul.f32 %v3474, 0.5
        %v3563 = vmul.f32 %v3481, 0.5
        %v3564 = vmul.f32 %v3488, 0.5
        %v3565 = vmul.f32 %v3495, 0.5
        %v3566 = vmul.f32 %v3502, 0.5
        %v3567 = vmul.f32 %v3509, 0.5
        %v3568 = vmul.f32 %v3516, 0.5
        %v3569 = vmul.f32 %v3523, 0.5
        %v3570 = vmul.f32 %v3530, 0.5
        %v3571 = vmul.f32 %v3537, 0.5
        %v3572 = vmul.f32 %v3544, 0.5
        %v3573 = vmul.f32 %v3551, 0.5
        %v3574 = vmul.f32 %v3558, 0.5
        %v3591 = vsel %vm2415, %v3560, %v3559
        %v3592 = vsel %vm2417, %v3561, %v3591
        %v3593 = vsel %vm2419, %v3562, %v3592
        %v3594 = vsel %vm2421, %v3563, %v3593
        %v3595 = vsel %vm2423, %v3564, %v3594
        %v3596 = vsel %vm2425, %v3565, %v3595
        %v3597 = vsel %vm2427, %v3566, %v3596
        %v3598 = vsel %vm2415, %v3568, %v3567
        %v3599 = vsel %vm2417, %v3569, %v3598
        %v3600 = vsel %vm2419, %v3570, %v3599
        %v3601 = vsel %vm2421, %v3571, %v3600
        %v3602 = vsel %vm2423, %v3572, %v3601
        %v3603 = vsel %vm2425, %v3573, %v3602
        %v3604 = vsel %vm2427, %v3574, %v3603
        %s3607 = scalar_lea.vmem [#allocation3], 96
        %3608 = vst.msk [vmem:[%s3607] sm:$0xff] %vm2096, %v3597
        %3609 = vst.msk [vmem:[%s3607 + $0x8] sm:$0xff] %vm2096, %v3604
        %v3610 = vrot.slane %v2065, 6
        %v3611 = vrot.slane %v2067, 6
        %v3612 = vrot.slane %v2069, 6
        %v3613 = vrot.slane %v2071, 6
        %v3614 = vrot.slane %v2073, 6
        %v3615 = vrot.slane %v2075, 6
        %v3616 = vrot.slane %v2077, 6
        %v3617 = vrot.slane %v2079, 6
        %v3618 = vrot.slane %v2081, 6
        %v3619 = vrot.slane %v2083, 6
        %v3620 = vrot.slane %v2085, 6
        %v3621 = vrot.slane %v2087, 6
        %v3622 = vrot.slane %v2089, 6
        %v3623 = vrot.slane %v2091, 6
        %v3624 = vrot.slane %v2093, 6
        %v3625 = vrot.slane %v2095, 6
        %v3642 = vsel %vm2270, %v3610, 0.0
        %v3643 = vrot.slane %v3642, 4
        %v3644 = vadd.f32 %v3642, %v3643
        %v3645 = vrot.slane %v3644, 2
        %v3646 = vadd.f32 %v3644, %v3645
        %v3647 = vrot.slane %v3646, 1
        %v3648 = vadd.f32 %v3646, %v3647
        %v3649 = vsel %vm2270, %v3611, 0.0
        %v3650 = vrot.slane %v3649, 4
        %v3651 = vadd.f32 %v3649, %v3650
        %v3652 = vrot.slane %v3651, 2
        %v3653 = vadd.f32 %v3651, %v3652
        %v3654 = vrot.slane %v3653, 1
        %v3655 = vadd.f32 %v3653, %v3654
        %v3656 = vsel %vm2270, %v3612, 0.0
        %v3657 = vrot.slane %v3656, 4
        %v3658 = vadd.f32 %v3656, %v3657
        %v3659 = vrot.slane %v3658, 2
        %v3660 = vadd.f32 %v3658, %v3659
        %v3661 = vrot.slane %v3660, 1
        %v3662 = vadd.f32 %v3660, %v3661
        %v3663 = vsel %vm2270, %v3613, 0.0
        %v3664 = vrot.slane %v3663, 4
        %v3665 = vadd.f32 %v3663, %v3664
        %v3666 = vrot.slane %v3665, 2
        %v3667 = vadd.f32 %v3665, %v3666
        %v3668 = vrot.slane %v3667, 1
        %v3669 = vadd.f32 %v3667, %v3668
        %v3670 = vsel %vm2270, %v3614, 0.0
        %v3671 = vrot.slane %v3670, 4
        %v3672 = vadd.f32 %v3670, %v3671
        %v3673 = vrot.slane %v3672, 2
        %v3674 = vadd.f32 %v3672, %v3673
        %v3675 = vrot.slane %v3674, 1
        %v3676 = vadd.f32 %v3674, %v3675
        %v3677 = vsel %vm2270, %v3615, 0.0
        %v3678 = vrot.slane %v3677, 4
        %v3679 = vadd.f32 %v3677, %v3678
        %v3680 = vrot.slane %v3679, 2
        %v3681 = vadd.f32 %v3679, %v3680
        %v3682 = vrot.slane %v3681, 1
        %v3683 = vadd.f32 %v3681, %v3682
        %v3684 = vsel %vm2270, %v3616, 0.0
        %v3685 = vrot.slane %v3684, 4
        %v3686 = vadd.f32 %v3684, %v3685
        %v3687 = vrot.slane %v3686, 2
        %v3688 = vadd.f32 %v3686, %v3687
        %v3689 = vrot.slane %v3688, 1
        %v3690 = vadd.f32 %v3688, %v3689
        %v3691 = vsel %vm2270, %v3617, 0.0
        %v3692 = vrot.slane %v3691, 4
        %v3693 = vadd.f32 %v3691, %v3692
        %v3694 = vrot.slane %v3693, 2
        %v3695 = vadd.f32 %v3693, %v3694
        %v3696 = vrot.slane %v3695, 1
        %v3697 = vadd.f32 %v3695, %v3696
        %v3698 = vsel %vm2270, %v3618, 0.0
        %v3699 = vrot.slane %v3698, 4
        %v3700 = vadd.f32 %v3698, %v3699
        %v3701 = vrot.slane %v3700, 2
        %v3702 = vadd.f32 %v3700, %v3701
        %v3703 = vrot.slane %v3702, 1
        %v3704 = vadd.f32 %v3702, %v3703
        %v3705 = vsel %vm2270, %v3619, 0.0
        %v3706 = vrot.slane %v3705, 4
        %v3707 = vadd.f32 %v3705, %v3706
        %v3708 = vrot.slane %v3707, 2
        %v3709 = vadd.f32 %v3707, %v3708
        %v3710 = vrot.slane %v3709, 1
        %v3711 = vadd.f32 %v3709, %v3710
        %v3712 = vsel %vm2270, %v3620, 0.0
        %v3713 = vrot.slane %v3712, 4
        %v3714 = vadd.f32 %v3712, %v3713
        %v3715 = vrot.slane %v3714, 2
        %v3716 = vadd.f32 %v3714, %v3715
        %v3717 = vrot.slane %v3716, 1
        %v3718 = vadd.f32 %v3716, %v3717
        %v3719 = vsel %vm2270, %v3621, 0.0
        %v3720 = vrot.slane %v3719, 4
        %v3721 = vadd.f32 %v3719, %v3720
        %v3722 = vrot.slane %v3721, 2
        %v3723 = vadd.f32 %v3721, %v3722
        %v3724 = vrot.slane %v3723, 1
        %v3725 = vadd.f32 %v3723, %v3724
        %v3726 = vsel %vm2270, %v3622, 0.0
        %v3727 = vrot.slane %v3726, 4
        %v3728 = vadd.f32 %v3726, %v3727
        %v3729 = vrot.slane %v3728, 2
        %v3730 = vadd.f32 %v3728, %v3729
        %v3731 = vrot.slane %v3730, 1
        %v3732 = vadd.f32 %v3730, %v3731
        %v3733 = vsel %vm2270, %v3623, 0.0
        %v3734 = vrot.slane %v3733, 4
        %v3735 = vadd.f32 %v3733, %v3734
        %v3736 = vrot.slane %v3735, 2
        %v3737 = vadd.f32 %v3735, %v3736
        %v3738 = vrot.slane %v3737, 1
        %v3739 = vadd.f32 %v3737, %v3738
        %v3740 = vsel %vm2270, %v3624, 0.0
        %v3741 = vrot.slane %v3740, 4
        %v3742 = vadd.f32 %v3740, %v3741
        %v3743 = vrot.slane %v3742, 2
        %v3744 = vadd.f32 %v3742, %v3743
        %v3745 = vrot.slane %v3744, 1
        %v3746 = vadd.f32 %v3744, %v3745
        %v3747 = vsel %vm2270, %v3625, 0.0
        %v3748 = vrot.slane %v3747, 4
        %v3749 = vadd.f32 %v3747, %v3748
        %v3750 = vrot.slane %v3749, 2
        %v3751 = vadd.f32 %v3749, %v3750
        %v3752 = vrot.slane %v3751, 1
        %v3753 = vadd.f32 %v3751, %v3752
        %v3754 = vmul.f32 %v3648, 0.5
        %v3755 = vmul.f32 %v3655, 0.5
        %v3756 = vmul.f32 %v3662, 0.5
        %v3757 = vmul.f32 %v3669, 0.5
        %v3758 = vmul.f32 %v3676, 0.5
        %v3759 = vmul.f32 %v3683, 0.5
        %v3760 = vmul.f32 %v3690, 0.5
        %v3761 = vmul.f32 %v3697, 0.5
        %v3762 = vmul.f32 %v3704, 0.5
        %v3763 = vmul.f32 %v3711, 0.5
        %v3764 = vmul.f32 %v3718, 0.5
        %v3765 = vmul.f32 %v3725, 0.5
        %v3766 = vmul.f32 %v3732, 0.5
        %v3767 = vmul.f32 %v3739, 0.5
        %v3768 = vmul.f32 %v3746, 0.5
        %v3769 = vmul.f32 %v3753, 0.5
        %v3786 = vsel %vm2415, %v3755, %v3754
        %v3787 = vsel %vm2417, %v3756, %v3786
        %v3788 = vsel %vm2419, %v3757, %v3787
        %v3789 = vsel %vm2421, %v3758, %v3788
        %v3790 = vsel %vm2423, %v3759, %v3789
        %v3791 = vsel %vm2425, %v3760, %v3790
        %v3792 = vsel %vm2427, %v3761, %v3791
        %v3793 = vsel %vm2415, %v3763, %v3762
        %v3794 = vsel %vm2417, %v3764, %v3793
        %v3795 = vsel %vm2419, %v3765, %v3794
        %v3796 = vsel %vm2421, %v3766, %v3795
        %v3797 = vsel %vm2423, %v3767, %v3796
        %v3798 = vsel %vm2425, %v3768, %v3797
        %v3799 = vsel %vm2427, %v3769, %v3798
        %s3802 = scalar_lea.vmem [#allocation3], 112
        %3803 = vst.msk [vmem:[%s3802] sm:$0xff] %vm2096, %v3792
        %3804 = vst.msk [vmem:[%s3802 + $0x8] sm:$0xff] %vm2096, %v3799
        %v3805 = vld [vmem:[#allocation3] sm:$0x3]
        %v3806 = vld [vmem:[#allocation3 + $0x10] sm:$0x3]
        %v3807 = vld [vmem:[#allocation3 + $0x20] sm:$0x3]
        %v3808 = vld [vmem:[#allocation3 + $0x30] sm:$0x3]
        %v3809 = vld [vmem:[#allocation3 + $0x40] sm:$0x3]
        %v3810 = vld [vmem:[#allocation3 + $0x50] sm:$0x3]
        %v3811 = vld [vmem:[#allocation3 + $0x60] sm:$0x3]
        %v3812 = vld [vmem:[#allocation3 + $0x70] sm:$0x3]
        %v3813 = vsel %vm2270, %v3805, 0.0
        %v3814 = vrot.slane %v3813, 4
        %v3815 = vadd.f32 %v3813, %v3814
        %v3816 = vrot.slane %v3815, 2
        %v3817 = vadd.f32 %v3815, %v3816
        %v3818 = vrot.slane %v3817, 1
        %v3819 = vadd.f32 %v3817, %v3818
        %v3820 = vsel %vm2270, %v3806, 0.0
        %v3821 = vrot.slane %v3820, 4
        %v3822 = vadd.f32 %v3820, %v3821
        %v3823 = vrot.slane %v3822, 2
        %v3824 = vadd.f32 %v3822, %v3823
        %v3825 = vrot.slane %v3824, 1
        %v3826 = vadd.f32 %v3824, %v3825
        %v3827 = vsel %vm2270, %v3807, 0.0
        %v3828 = vrot.slane %v3827, 4
        %v3829 = vadd.f32 %v3827, %v3828
        %v3830 = vrot.slane %v3829, 2
        %v3831 = vadd.f32 %v3829, %v3830
        %v3832 = vrot.slane %v3831, 1
        %v3833 = vadd.f32 %v3831, %v3832
        %v3834 = vsel %vm2270, %v3808, 0.0
        %v3835 = vrot.slane %v3834, 4
        %v3836 = vadd.f32 %v3834, %v3835
        %v3837 = vrot.slane %v3836, 2
        %v3838 = vadd.f32 %v3836, %v3837
        %v3839 = vrot.slane %v3838, 1
        %v3840 = vadd.f32 %v3838, %v3839
        %v3841 = vsel %vm2270, %v3809, 0.0
        %v3842 = vrot.slane %v3841, 4
        %v3843 = vadd.f32 %v3841, %v3842
        %v3844 = vrot.slane %v3843, 2
        %v3845 = vadd.f32 %v3843, %v3844
        %v3846 = vrot.slane %v3845, 1
        %v3847 = vadd.f32 %v3845, %v3846
        %v3848 = vsel %vm2270, %v3810, 0.0
        %v3849 = vrot.slane %v3848, 4
        %v3850 = vadd.f32 %v3848, %v3849
        %v3851 = vrot.slane %v3850, 2
        %v3852 = vadd.f32 %v3850, %v3851
        %v3853 = vrot.slane %v3852, 1
        %v3854 = vadd.f32 %v3852, %v3853
        %v3855 = vsel %vm2270, %v3811, 0.0
        %v3856 = vrot.slane %v3855, 4
        %v3857 = vadd.f32 %v3855, %v3856
        %v3858 = vrot.slane %v3857, 2
        %v3859 = vadd.f32 %v3857, %v3858
        %v3860 = vrot.slane %v3859, 1
        %v3861 = vadd.f32 %v3859, %v3860
        %v3862 = vsel %vm2270, %v3812, 0.0
        %v3863 = vrot.slane %v3862, 4
        %v3864 = vadd.f32 %v3862, %v3863
        %v3865 = vrot.slane %v3864, 2
        %v3866 = vadd.f32 %v3864, %v3865
        %v3867 = vrot.slane %v3866, 1
        %v3868 = vadd.f32 %v3866, %v3867
        %v3869 = vmul.f32 %v3819, 0.5
        %v3870 = vmul.f32 %v3826, 0.5
        %v3871 = vmul.f32 %v3833, 0.5
        %v3872 = vmul.f32 %v3840, 0.5
        %v3873 = vmul.f32 %v3847, 0.5
        %v3874 = vmul.f32 %v3854, 0.5
        %v3875 = vmul.f32 %v3861, 0.5
        %v3876 = vmul.f32 %v3868, 0.5
        %v3885 = vsel %vm2415, %v3870, %v3869
        %v3886 = vsel %vm2417, %v3871, %v3885
        %v3887 = vsel %vm2419, %v3872, %v3886
        %v3888 = vsel %vm2421, %v3873, %v3887
        %v3889 = vsel %vm2423, %v3874, %v3888
        %v3890 = vsel %vm2425, %v3875, %v3889
        %v3891 = vsel %vm2427, %v3876, %v3890
        %3893 = vst.msk [vmem:[%s221] sm:$0xff] %vm2096, %v3891
        %v3894 = vld [vmem:[#allocation3 + $0x2] sm:$0x3]
        %v3895 = vld [vmem:[#allocation3 + $0x12] sm:$0x3]
        %v3896 = vld [vmem:[#allocation3 + $0x22] sm:$0x3]
        %v3897 = vld [vmem:[#allocation3 + $0x32] sm:$0x3]
        %v3898 = vld [vmem:[#allocation3 + $0x42] sm:$0x3]
        %v3899 = vld [vmem:[#allocation3 + $0x52] sm:$0x3]
        %v3900 = vld [vmem:[#allocation3 + $0x62] sm:$0x3]
        %v3901 = vld [vmem:[#allocation3 + $0x72] sm:$0x3]
        %v3902 = vsel %vm2270, %v3894, 0.0
        %v3903 = vrot.slane %v3902, 4
        %v3904 = vadd.f32 %v3902, %v3903
        %v3905 = vrot.slane %v3904, 2
        %v3906 = vadd.f32 %v3904, %v3905
        %v3907 = vrot.slane %v3906, 1
        %v3908 = vadd.f32 %v3906, %v3907
        %v3909 = vsel %vm2270, %v3895, 0.0
        %v3910 = vrot.slane %v3909, 4
        %v3911 = vadd.f32 %v3909, %v3910
        %v3912 = vrot.slane %v3911, 2
        %v3913 = vadd.f32 %v3911, %v3912
        %v3914 = vrot.slane %v3913, 1
        %v3915 = vadd.f32 %v3913, %v3914
        %v3916 = vsel %vm2270, %v3896, 0.0
        %v3917 = vrot.slane %v3916, 4
        %v3918 = vadd.f32 %v3916, %v3917
        %v3919 = vrot.slane %v3918, 2
        %v3920 = vadd.f32 %v3918, %v3919
        %v3921 = vrot.slane %v3920, 1
        %v3922 = vadd.f32 %v3920, %v3921
        %v3923 = vsel %vm2270, %v3897, 0.0
        %v3924 = vrot.slane %v3923, 4
        %v3925 = vadd.f32 %v3923, %v3924
        %v3926 = vrot.slane %v3925, 2
        %v3927 = vadd.f32 %v3925, %v3926
        %v3928 = vrot.slane %v3927, 1
        %v3929 = vadd.f32 %v3927, %v3928
        %v3930 = vsel %vm2270, %v3898, 0.0
        %v3931 = vrot.slane %v3930, 4
        %v3932 = vadd.f32 %v3930, %v3931
        %v3933 = vrot.slane %v3932, 2
        %v3934 = vadd.f32 %v3932, %v3933
        %v3935 = vrot.slane %v3934, 1
        %v3936 = vadd.f32 %v3934, %v3935
        %v3937 = vsel %vm2270, %v3899, 0.0
        %v3938 = vrot.slane %v3937, 4
        %v3939 = vadd.f32 %v3937, %v3938
        %v3940 = vrot.slane %v3939, 2
        %v3941 = vadd.f32 %v3939, %v3940
        %v3942 = vrot.slane %v3941, 1
        %v3943 = vadd.f32 %v3941, %v3942
        %v3944 = vsel %vm2270, %v3900, 0.0
        %v3945 = vrot.slane %v3944, 4
        %v3946 = vadd.f32 %v3944, %v3945
        %v3947 = vrot.slane %v3946, 2
        %v3948 = vadd.f32 %v3946, %v3947
        %v3949 = vrot.slane %v3948, 1
        %v3950 = vadd.f32 %v3948, %v3949
        %v3951 = vsel %vm2270, %v3901, 0.0
        %v3952 = vrot.slane %v3951, 4
        %v3953 = vadd.f32 %v3951, %v3952
        %v3954 = vrot.slane %v3953, 2
        %v3955 = vadd.f32 %v3953, %v3954
        %v3956 = vrot.slane %v3955, 1
        %v3957 = vadd.f32 %v3955, %v3956
        %v3958 = vmul.f32 %v3908, 0.5
        %v3959 = vmul.f32 %v3915, 0.5
        %v3960 = vmul.f32 %v3922, 0.5
        %v3961 = vmul.f32 %v3929, 0.5
        %v3962 = vmul.f32 %v3936, 0.5
        %v3963 = vmul.f32 %v3943, 0.5
        %v3964 = vmul.f32 %v3950, 0.5
        %v3965 = vmul.f32 %v3957, 0.5
        %v3974 = vsel %vm2415, %v3959, %v3958
        %v3975 = vsel %vm2417, %v3960, %v3974
        %v3976 = vsel %vm2419, %v3961, %v3975
        %v3977 = vsel %vm2421, %v3962, %v3976
        %v3978 = vsel %vm2423, %v3963, %v3977
        %v3979 = vsel %vm2425, %v3964, %v3978
        %v3980 = vsel %vm2427, %v3965, %v3979
        %s3982 = scalar_lea.vmem %s221, 8 [#allocation4]
        %3983 = vst.msk [vmem:[%s3982] sm:$0xff] %vm2096, %v3980
        %v3984 = vld [vmem:[#allocation3 + $0x4] sm:$0x3]
        %v3985 = vld [vmem:[#allocation3 + $0x14] sm:$0x3]
        %v3986 = vld [vmem:[#allocation3 + $0x24] sm:$0x3]
        %v3987 = vld [vmem:[#allocation3 + $0x34] sm:$0x3]
        %v3988 = vld [vmem:[#allocation3 + $0x44] sm:$0x3]
        %v3989 = vld [vmem:[#allocation3 + $0x54] sm:$0x3]
        %v3990 = vld [vmem:[#allocation3 + $0x64] sm:$0x3]
        %v3991 = vld [vmem:[#allocation3 + $0x74] sm:$0x3]
        %v3992 = vsel %vm2270, %v3984, 0.0
        %v3993 = vrot.slane %v3992, 4
        %v3994 = vadd.f32 %v3992, %v3993
        %v3995 = vrot.slane %v3994, 2
        %v3996 = vadd.f32 %v3994, %v3995
        %v3997 = vrot.slane %v3996, 1
        %v3998 = vadd.f32 %v3996, %v3997
        %v3999 = vsel %vm2270, %v3985, 0.0
        %v4000 = vrot.slane %v3999, 4
        %v4001 = vadd.f32 %v3999, %v4000
        %v4002 = vrot.slane %v4001, 2
        %v4003 = vadd.f32 %v4001, %v4002
        %v4004 = vrot.slane %v4003, 1
        %v4005 = vadd.f32 %v4003, %v4004
        %v4006 = vsel %vm2270, %v3986, 0.0
        %v4007 = vrot.slane %v4006, 4
        %v4008 = vadd.f32 %v4006, %v4007
        %v4009 = vrot.slane %v4008, 2
        %v4010 = vadd.f32 %v4008, %v4009
        %v4011 = vrot.slane %v4010, 1
        %v4012 = vadd.f32 %v4010, %v4011
        %v4013 = vsel %vm2270, %v3987, 0.0
        %v4014 = vrot.slane %v4013, 4
        %v4015 = vadd.f32 %v4013, %v4014
        %v4016 = vrot.slane %v4015, 2
        %v4017 = vadd.f32 %v4015, %v4016
        %v4018 = vrot.slane %v4017, 1
        %v4019 = vadd.f32 %v4017, %v4018
        %v4020 = vsel %vm2270, %v3988, 0.0
        %v4021 = vrot.slane %v4020, 4
        %v4022 = vadd.f32 %v4020, %v4021
        %v4023 = vrot.slane %v4022, 2
        %v4024 = vadd.f32 %v4022, %v4023
        %v4025 = vrot.slane %v4024, 1
        %v4026 = vadd.f32 %v4024, %v4025
        %v4027 = vsel %vm2270, %v3989, 0.0
        %v4028 = vrot.slane %v4027, 4
        %v4029 = vadd.f32 %v4027, %v4028
        %v4030 = vrot.slane %v4029, 2
        %v4031 = vadd.f32 %v4029, %v4030
        %v4032 = vrot.slane %v4031, 1
        %v4033 = vadd.f32 %v4031, %v4032
        %v4034 = vsel %vm2270, %v3990, 0.0
        %v4035 = vrot.slane %v4034, 4
        %v4036 = vadd.f32 %v4034, %v4035
        %v4037 = vrot.slane %v4036, 2
        %v4038 = vadd.f32 %v4036, %v4037
        %v4039 = vrot.slane %v4038, 1
        %v4040 = vadd.f32 %v4038, %v4039
        %v4041 = vsel %vm2270, %v3991, 0.0
        %v4042 = vrot.slane %v4041, 4
        %v4043 = vadd.f32 %v4041, %v4042
        %v4044 = vrot.slane %v4043, 2
        %v4045 = vadd.f32 %v4043, %v4044
        %v4046 = vrot.slane %v4045, 1
        %v4047 = vadd.f32 %v4045, %v4046
        %v4048 = vmul.f32 %v3998, 0.5
        %v4049 = vmul.f32 %v4005, 0.5
        %v4050 = vmul.f32 %v4012, 0.5
        %v4051 = vmul.f32 %v4019, 0.5
        %v4052 = vmul.f32 %v4026, 0.5
        %v4053 = vmul.f32 %v4033, 0.5
        %v4054 = vmul.f32 %v4040, 0.5
        %v4055 = vmul.f32 %v4047, 0.5
        %v4064 = vsel %vm2415, %v4049, %v4048
        %v4065 = vsel %vm2417, %v4050, %v4064
        %v4066 = vsel %vm2419, %v4051, %v4065
        %v4067 = vsel %vm2421, %v4052, %v4066
        %v4068 = vsel %vm2423, %v4053, %v4067
        %v4069 = vsel %vm2425, %v4054, %v4068
        %v4070 = vsel %vm2427, %v4055, %v4069
        %s4072 = scalar_lea.vmem %s221, 16 [#allocation4]
        %4073 = vst.msk [vmem:[%s4072] sm:$0xff] %vm2096, %v4070
        %v4074 = vld [vmem:[#allocation3 + $0x6] sm:$0x3]
        %v4075 = vld [vmem:[#allocation3 + $0x16] sm:$0x3]
        %v4076 = vld [vmem:[#allocation3 + $0x26] sm:$0x3]
        %v4077 = vld [vmem:[#allocation3 + $0x36] sm:$0x3]
        %v4078 = vld [vmem:[#allocation3 + $0x46] sm:$0x3]
        %v4079 = vld [vmem:[#allocation3 + $0x56] sm:$0x3]
        %v4080 = vld [vmem:[#allocation3 + $0x66] sm:$0x3]
        %v4081 = vld [vmem:[#allocation3 + $0x76] sm:$0x3]
        %v4082 = vsel %vm2270, %v4074, 0.0
        %v4083 = vrot.slane %v4082, 4
        %v4084 = vadd.f32 %v4082, %v4083
        %v4085 = vrot.slane %v4084, 2
        %v4086 = vadd.f32 %v4084, %v4085
        %v4087 = vrot.slane %v4086, 1
        %v4088 = vadd.f32 %v4086, %v4087
        %v4089 = vsel %vm2270, %v4075, 0.0
        %v4090 = vrot.slane %v4089, 4
        %v4091 = vadd.f32 %v4089, %v4090
        %v4092 = vrot.slane %v4091, 2
        %v4093 = vadd.f32 %v4091, %v4092
        %v4094 = vrot.slane %v4093, 1
        %v4095 = vadd.f32 %v4093, %v4094
        %v4096 = vsel %vm2270, %v4076, 0.0
        %v4097 = vrot.slane %v4096, 4
        %v4098 = vadd.f32 %v4096, %v4097
        %v4099 = vrot.slane %v4098, 2
        %v4100 = vadd.f32 %v4098, %v4099
        %v4101 = vrot.slane %v4100, 1
        %v4102 = vadd.f32 %v4100, %v4101
        %v4103 = vsel %vm2270, %v4077, 0.0
        %v4104 = vrot.slane %v4103, 4
        %v4105 = vadd.f32 %v4103, %v4104
        %v4106 = vrot.slane %v4105, 2
        %v4107 = vadd.f32 %v4105, %v4106
        %v4108 = vrot.slane %v4107, 1
        %v4109 = vadd.f32 %v4107, %v4108
        %v4110 = vsel %vm2270, %v4078, 0.0
        %v4111 = vrot.slane %v4110, 4
        %v4112 = vadd.f32 %v4110, %v4111
        %v4113 = vrot.slane %v4112, 2
        %v4114 = vadd.f32 %v4112, %v4113
        %v4115 = vrot.slane %v4114, 1
        %v4116 = vadd.f32 %v4114, %v4115
        %v4117 = vsel %vm2270, %v4079, 0.0
        %v4118 = vrot.slane %v4117, 4
        %v4119 = vadd.f32 %v4117, %v4118
        %v4120 = vrot.slane %v4119, 2
        %v4121 = vadd.f32 %v4119, %v4120
        %v4122 = vrot.slane %v4121, 1
        %v4123 = vadd.f32 %v4121, %v4122
        %v4124 = vsel %vm2270, %v4080, 0.0
        %v4125 = vrot.slane %v4124, 4
        %v4126 = vadd.f32 %v4124, %v4125
        %v4127 = vrot.slane %v4126, 2
        %v4128 = vadd.f32 %v4126, %v4127
        %v4129 = vrot.slane %v4128, 1
        %v4130 = vadd.f32 %v4128, %v4129
        %v4131 = vsel %vm2270, %v4081, 0.0
        %v4132 = vrot.slane %v4131, 4
        %v4133 = vadd.f32 %v4131, %v4132
        %v4134 = vrot.slane %v4133, 2
        %v4135 = vadd.f32 %v4133, %v4134
        %v4136 = vrot.slane %v4135, 1
        %v4137 = vadd.f32 %v4135, %v4136
        %v4138 = vmul.f32 %v4088, 0.5
        %v4139 = vmul.f32 %v4095, 0.5
        %v4140 = vmul.f32 %v4102, 0.5
        %v4141 = vmul.f32 %v4109, 0.5
        %v4142 = vmul.f32 %v4116, 0.5
        %v4143 = vmul.f32 %v4123, 0.5
        %v4144 = vmul.f32 %v4130, 0.5
        %v4145 = vmul.f32 %v4137, 0.5
        %v4154 = vsel %vm2415, %v4139, %v4138
        %v4155 = vsel %vm2417, %v4140, %v4154
        %v4156 = vsel %vm2419, %v4141, %v4155
        %v4157 = vsel %vm2421, %v4142, %v4156
        %v4158 = vsel %vm2423, %v4143, %v4157
        %v4159 = vsel %vm2425, %v4144, %v4158
        %v4160 = vsel %vm2427, %v4145, %v4159
        %s4162 = scalar_lea.vmem %s221, 24 [#allocation4]
        %4163 = vst.msk [vmem:[%s4162] sm:$0xff] %vm2096, %v4160
        %v4164 = vld [vmem:[#allocation3 + $0x8] sm:$0x3]
        %v4165 = vld [vmem:[#allocation3 + $0x18] sm:$0x3]
        %v4166 = vld [vmem:[#allocation3 + $0x28] sm:$0x3]
        %v4167 = vld [vmem:[#allocation3 + $0x38] sm:$0x3]
        %v4168 = vld [vmem:[#allocation3 + $0x48] sm:$0x3]
        %v4169 = vld [vmem:[#allocation3 + $0x58] sm:$0x3]
        %v4170 = vld [vmem:[#allocation3 + $0x68] sm:$0x3]
        %v4171 = vld [vmem:[#allocation3 + $0x78] sm:$0x3]
        %v4172 = vsel %vm2270, %v4164, 0.0
        %v4173 = vrot.slane %v4172, 4
        %v4174 = vadd.f32 %v4172, %v4173
        %v4175 = vrot.slane %v4174, 2
        %v4176 = vadd.f32 %v4174, %v4175
        %v4177 = vrot.slane %v4176, 1
        %v4178 = vadd.f32 %v4176, %v4177
        %v4179 = vsel %vm2270, %v4165, 0.0
        %v4180 = vrot.slane %v4179, 4
        %v4181 = vadd.f32 %v4179, %v4180
        %v4182 = vrot.slane %v4181, 2
        %v4183 = vadd.f32 %v4181, %v4182
        %v4184 = vrot.slane %v4183, 1
        %v4185 = vadd.f32 %v4183, %v4184
        %v4186 = vsel %vm2270, %v4166, 0.0
        %v4187 = vrot.slane %v4186, 4
        %v4188 = vadd.f32 %v4186, %v4187
        %v4189 = vrot.slane %v4188, 2
        %v4190 = vadd.f32 %v4188, %v4189
        %v4191 = vrot.slane %v4190, 1
        %v4192 = vadd.f32 %v4190, %v4191
        %v4193 = vsel %vm2270, %v4167, 0.0
        %v4194 = vrot.slane %v4193, 4
        %v4195 = vadd.f32 %v4193, %v4194
        %v4196 = vrot.slane %v4195, 2
        %v4197 = vadd.f32 %v4195, %v4196
        %v4198 = vrot.slane %v4197, 1
        %v4199 = vadd.f32 %v4197, %v4198
        %v4200 = vsel %vm2270, %v4168, 0.0
        %v4201 = vrot.slane %v4200, 4
        %v4202 = vadd.f32 %v4200, %v4201
        %v4203 = vrot.slane %v4202, 2
        %v4204 = vadd.f32 %v4202, %v4203
        %v4205 = vrot.slane %v4204, 1
        %v4206 = vadd.f32 %v4204, %v4205
        %v4207 = vsel %vm2270, %v4169, 0.0
        %v4208 = vrot.slane %v4207, 4
        %v4209 = vadd.f32 %v4207, %v4208
        %v4210 = vrot.slane %v4209, 2
        %v4211 = vadd.f32 %v4209, %v4210
        %v4212 = vrot.slane %v4211, 1
        %v4213 = vadd.f32 %v4211, %v4212
        %v4214 = vsel %vm2270, %v4170, 0.0
        %v4215 = vrot.slane %v4214, 4
        %v4216 = vadd.f32 %v4214, %v4215
        %v4217 = vrot.slane %v4216, 2
        %v4218 = vadd.f32 %v4216, %v4217
        %v4219 = vrot.slane %v4218, 1
        %v4220 = vadd.f32 %v4218, %v4219
        %v4221 = vsel %vm2270, %v4171, 0.0
        %v4222 = vrot.slane %v4221, 4
        %v4223 = vadd.f32 %v4221, %v4222
        %v4224 = vrot.slane %v4223, 2
        %v4225 = vadd.f32 %v4223, %v4224
        %v4226 = vrot.slane %v4225, 1
        %v4227 = vadd.f32 %v4225, %v4226
        %v4228 = vmul.f32 %v4178, 0.5
        %v4229 = vmul.f32 %v4185, 0.5
        %v4230 = vmul.f32 %v4192, 0.5
        %v4231 = vmul.f32 %v4199, 0.5
        %v4232 = vmul.f32 %v4206, 0.5
        %v4233 = vmul.f32 %v4213, 0.5
        %v4234 = vmul.f32 %v4220, 0.5
        %v4235 = vmul.f32 %v4227, 0.5
        %v4244 = vsel %vm2415, %v4229, %v4228
        %v4245 = vsel %vm2417, %v4230, %v4244
        %v4246 = vsel %vm2419, %v4231, %v4245
        %v4247 = vsel %vm2421, %v4232, %v4246
        %v4248 = vsel %vm2423, %v4233, %v4247
        %v4249 = vsel %vm2425, %v4234, %v4248
        %v4250 = vsel %vm2427, %v4235, %v4249
        %s4252 = scalar_lea.vmem %s221, 32 [#allocation4]
        %4253 = vst.msk [vmem:[%s4252] sm:$0xff] %vm2096, %v4250
        %v4254 = vld [vmem:[#allocation3 + $0xa] sm:$0x3]
        %v4255 = vld [vmem:[#allocation3 + $0x1a] sm:$0x3]
        %v4256 = vld [vmem:[#allocation3 + $0x2a] sm:$0x3]
        %v4257 = vld [vmem:[#allocation3 + $0x3a] sm:$0x3]
        %v4258 = vld [vmem:[#allocation3 + $0x4a] sm:$0x3]
        %v4259 = vld [vmem:[#allocation3 + $0x5a] sm:$0x3]
        %v4260 = vld [vmem:[#allocation3 + $0x6a] sm:$0x3]
        %v4261 = vld [vmem:[#allocation3 + $0x7a] sm:$0x3]
        %v4262 = vsel %vm2270, %v4254, 0.0
        %v4263 = vrot.slane %v4262, 4
        %v4264 = vadd.f32 %v4262, %v4263
        %v4265 = vrot.slane %v4264, 2
        %v4266 = vadd.f32 %v4264, %v4265
        %v4267 = vrot.slane %v4266, 1
        %v4268 = vadd.f32 %v4266, %v4267
        %v4269 = vsel %vm2270, %v4255, 0.0
        %v4270 = vrot.slane %v4269, 4
        %v4271 = vadd.f32 %v4269, %v4270
        %v4272 = vrot.slane %v4271, 2
        %v4273 = vadd.f32 %v4271, %v4272
        %v4274 = vrot.slane %v4273, 1
        %v4275 = vadd.f32 %v4273, %v4274
        %v4276 = vsel %vm2270, %v4256, 0.0
        %v4277 = vrot.slane %v4276, 4
        %v4278 = vadd.f32 %v4276, %v4277
        %v4279 = vrot.slane %v4278, 2
        %v4280 = vadd.f32 %v4278, %v4279
        %v4281 = vrot.slane %v4280, 1
        %v4282 = vadd.f32 %v4280, %v4281
        %v4283 = vsel %vm2270, %v4257, 0.0
        %v4284 = vrot.slane %v4283, 4
        %v4285 = vadd.f32 %v4283, %v4284
        %v4286 = vrot.slane %v4285, 2
        %v4287 = vadd.f32 %v4285, %v4286
        %v4288 = vrot.slane %v4287, 1
        %v4289 = vadd.f32 %v4287, %v4288
        %v4290 = vsel %vm2270, %v4258, 0.0
        %v4291 = vrot.slane %v4290, 4
        %v4292 = vadd.f32 %v4290, %v4291
        %v4293 = vrot.slane %v4292, 2
        %v4294 = vadd.f32 %v4292, %v4293
        %v4295 = vrot.slane %v4294, 1
        %v4296 = vadd.f32 %v4294, %v4295
        %v4297 = vsel %vm2270, %v4259, 0.0
        %v4298 = vrot.slane %v4297, 4
        %v4299 = vadd.f32 %v4297, %v4298
        %v4300 = vrot.slane %v4299, 2
        %v4301 = vadd.f32 %v4299, %v4300
        %v4302 = vrot.slane %v4301, 1
        %v4303 = vadd.f32 %v4301, %v4302
        %v4304 = vsel %vm2270, %v4260, 0.0
        %v4305 = vrot.slane %v4304, 4
        %v4306 = vadd.f32 %v4304, %v4305
        %v4307 = vrot.slane %v4306, 2
        %v4308 = vadd.f32 %v4306, %v4307
        %v4309 = vrot.slane %v4308, 1
        %v4310 = vadd.f32 %v4308, %v4309
        %v4311 = vsel %vm2270, %v4261, 0.0
        %v4312 = vrot.slane %v4311, 4
        %v4313 = vadd.f32 %v4311, %v4312
        %v4314 = vrot.slane %v4313, 2
        %v4315 = vadd.f32 %v4313, %v4314
        %v4316 = vrot.slane %v4315, 1
        %v4317 = vadd.f32 %v4315, %v4316
        %v4318 = vmul.f32 %v4268, 0.5
        %v4319 = vmul.f32 %v4275, 0.5
        %v4320 = vmul.f32 %v4282, 0.5
        %v4321 = vmul.f32 %v4289, 0.5
        %v4322 = vmul.f32 %v4296, 0.5
        %v4323 = vmul.f32 %v4303, 0.5
        %v4324 = vmul.f32 %v4310, 0.5
        %v4325 = vmul.f32 %v4317, 0.5
        %v4334 = vsel %vm2415, %v4319, %v4318
        %v4335 = vsel %vm2417, %v4320, %v4334
        %v4336 = vsel %vm2419, %v4321, %v4335
        %v4337 = vsel %vm2421, %v4322, %v4336
        %v4338 = vsel %vm2423, %v4323, %v4337
        %v4339 = vsel %vm2425, %v4324, %v4338
        %v4340 = vsel %vm2427, %v4325, %v4339
        %s4342 = scalar_lea.vmem %s221, 40 [#allocation4]
        %4343 = vst.msk [vmem:[%s4342] sm:$0xff] %vm2096, %v4340
        %v4344 = vld [vmem:[#allocation3 + $0xc] sm:$0x3]
        %v4345 = vld [vmem:[#allocation3 + $0x1c] sm:$0x3]
        %v4346 = vld [vmem:[#allocation3 + $0x2c] sm:$0x3]
        %v4347 = vld [vmem:[#allocation3 + $0x3c] sm:$0x3]
        %v4348 = vld [vmem:[#allocation3 + $0x4c] sm:$0x3]
        %v4349 = vld [vmem:[#allocation3 + $0x5c] sm:$0x3]
        %v4350 = vld [vmem:[#allocation3 + $0x6c] sm:$0x3]
        %v4351 = vld [vmem:[#allocation3 + $0x7c] sm:$0x3]
        %v4352 = vsel %vm2270, %v4344, 0.0
        %v4353 = vrot.slane %v4352, 4
        %v4354 = vadd.f32 %v4352, %v4353
        %v4355 = vrot.slane %v4354, 2
        %v4356 = vadd.f32 %v4354, %v4355
        %v4357 = vrot.slane %v4356, 1
        %v4358 = vadd.f32 %v4356, %v4357
        %v4359 = vsel %vm2270, %v4345, 0.0
        %v4360 = vrot.slane %v4359, 4
        %v4361 = vadd.f32 %v4359, %v4360
        %v4362 = vrot.slane %v4361, 2
        %v4363 = vadd.f32 %v4361, %v4362
        %v4364 = vrot.slane %v4363, 1
        %v4365 = vadd.f32 %v4363, %v4364
        %v4366 = vsel %vm2270, %v4346, 0.0
        %v4367 = vrot.slane %v4366, 4
        %v4368 = vadd.f32 %v4366, %v4367
        %v4369 = vrot.slane %v4368, 2
        %v4370 = vadd.f32 %v4368, %v4369
        %v4371 = vrot.slane %v4370, 1
        %v4372 = vadd.f32 %v4370, %v4371
        %v4373 = vsel %vm2270, %v4347, 0.0
        %v4374 = vrot.slane %v4373, 4
        %v4375 = vadd.f32 %v4373, %v4374
        %v4376 = vrot.slane %v4375, 2
        %v4377 = vadd.f32 %v4375, %v4376
        %v4378 = vrot.slane %v4377, 1
        %v4379 = vadd.f32 %v4377, %v4378
        %v4380 = vsel %vm2270, %v4348, 0.0
        %v4381 = vrot.slane %v4380, 4
        %v4382 = vadd.f32 %v4380, %v4381
        %v4383 = vrot.slane %v4382, 2
        %v4384 = vadd.f32 %v4382, %v4383
        %v4385 = vrot.slane %v4384, 1
        %v4386 = vadd.f32 %v4384, %v4385
        %v4387 = vsel %vm2270, %v4349, 0.0
        %v4388 = vrot.slane %v4387, 4
        %v4389 = vadd.f32 %v4387, %v4388
        %v4390 = vrot.slane %v4389, 2
        %v4391 = vadd.f32 %v4389, %v4390
        %v4392 = vrot.slane %v4391, 1
        %v4393 = vadd.f32 %v4391, %v4392
        %v4394 = vsel %vm2270, %v4350, 0.0
        %v4395 = vrot.slane %v4394, 4
        %v4396 = vadd.f32 %v4394, %v4395
        %v4397 = vrot.slane %v4396, 2
        %v4398 = vadd.f32 %v4396, %v4397
        %v4399 = vrot.slane %v4398, 1
        %v4400 = vadd.f32 %v4398, %v4399
        %v4401 = vsel %vm2270, %v4351, 0.0
        %v4402 = vrot.slane %v4401, 4
        %v4403 = vadd.f32 %v4401, %v4402
        %v4404 = vrot.slane %v4403, 2
        %v4405 = vadd.f32 %v4403, %v4404
        %v4406 = vrot.slane %v4405, 1
        %v4407 = vadd.f32 %v4405, %v4406
        %v4408 = vmul.f32 %v4358, 0.5
        %v4409 = vmul.f32 %v4365, 0.5
        %v4410 = vmul.f32 %v4372, 0.5
        %v4411 = vmul.f32 %v4379, 0.5
        %v4412 = vmul.f32 %v4386, 0.5
        %v4413 = vmul.f32 %v4393, 0.5
        %v4414 = vmul.f32 %v4400, 0.5
        %v4415 = vmul.f32 %v4407, 0.5
        %v4424 = vsel %vm2415, %v4409, %v4408
        %v4425 = vsel %vm2417, %v4410, %v4424
        %v4426 = vsel %vm2419, %v4411, %v4425
        %v4427 = vsel %vm2421, %v4412, %v4426
        %v4428 = vsel %vm2423, %v4413, %v4427
        %v4429 = vsel %vm2425, %v4414, %v4428
        %v4430 = vsel %vm2427, %v4415, %v4429
        %s4432 = scalar_lea.vmem %s221, 48 [#allocation4]
        %4433 = vst.msk [vmem:[%s4432] sm:$0xff] %vm2096, %v4430
        %v4434 = vld [vmem:[#allocation3 + $0xe] sm:$0x3]
        %v4435 = vld [vmem:[#allocation3 + $0x1e] sm:$0x3]
        %v4436 = vld [vmem:[#allocation3 + $0x2e] sm:$0x3]
        %v4437 = vld [vmem:[#allocation3 + $0x3e] sm:$0x3]
        %v4438 = vld [vmem:[#allocation3 + $0x4e] sm:$0x3]
        %v4439 = vld [vmem:[#allocation3 + $0x5e] sm:$0x3]
        %v4440 = vld [vmem:[#allocation3 + $0x6e] sm:$0x3]
        %v4441 = vld [vmem:[#allocation3 + $0x7e] sm:$0x3]
        %v4442 = vsel %vm2270, %v4434, 0.0
        %v4443 = vrot.slane %v4442, 4
        %v4444 = vadd.f32 %v4442, %v4443
        %v4445 = vrot.slane %v4444, 2
        %v4446 = vadd.f32 %v4444, %v4445
        %v4447 = vrot.slane %v4446, 1
        %v4448 = vadd.f32 %v4446, %v4447
        %v4449 = vsel %vm2270, %v4435, 0.0
        %v4450 = vrot.slane %v4449, 4
        %v4451 = vadd.f32 %v4449, %v4450
        %v4452 = vrot.slane %v4451, 2
        %v4453 = vadd.f32 %v4451, %v4452
        %v4454 = vrot.slane %v4453, 1
        %v4455 = vadd.f32 %v4453, %v4454
        %v4456 = vsel %vm2270, %v4436, 0.0
        %v4457 = vrot.slane %v4456, 4
        %v4458 = vadd.f32 %v4456, %v4457
        %v4459 = vrot.slane %v4458, 2
        %v4460 = vadd.f32 %v4458, %v4459
        %v4461 = vrot.slane %v4460, 1
        %v4462 = vadd.f32 %v4460, %v4461
        %v4463 = vsel %vm2270, %v4437, 0.0
        %v4464 = vrot.slane %v4463, 4
        %v4465 = vadd.f32 %v4463, %v4464
        %v4466 = vrot.slane %v4465, 2
        %v4467 = vadd.f32 %v4465, %v4466
        %v4468 = vrot.slane %v4467, 1
        %v4469 = vadd.f32 %v4467, %v4468
        %v4470 = vsel %vm2270, %v4438, 0.0
        %v4471 = vrot.slane %v4470, 4
        %v4472 = vadd.f32 %v4470, %v4471
        %v4473 = vrot.slane %v4472, 2
        %v4474 = vadd.f32 %v4472, %v4473
        %v4475 = vrot.slane %v4474, 1
        %v4476 = vadd.f32 %v4474, %v4475
        %v4477 = vsel %vm2270, %v4439, 0.0
        %v4478 = vrot.slane %v4477, 4
        %v4479 = vadd.f32 %v4477, %v4478
        %v4480 = vrot.slane %v4479, 2
        %v4481 = vadd.f32 %v4479, %v4480
        %v4482 = vrot.slane %v4481, 1
        %v4483 = vadd.f32 %v4481, %v4482
        %v4484 = vsel %vm2270, %v4440, 0.0
        %v4485 = vrot.slane %v4484, 4
        %v4486 = vadd.f32 %v4484, %v4485
        %v4487 = vrot.slane %v4486, 2
        %v4488 = vadd.f32 %v4486, %v4487
        %v4489 = vrot.slane %v4488, 1
        %v4490 = vadd.f32 %v4488, %v4489
        %v4491 = vsel %vm2270, %v4441, 0.0
        %v4492 = vrot.slane %v4491, 4
        %v4493 = vadd.f32 %v4491, %v4492
        %v4494 = vrot.slane %v4493, 2
        %v4495 = vadd.f32 %v4493, %v4494
        %v4496 = vrot.slane %v4495, 1
        %v4497 = vadd.f32 %v4495, %v4496
        %v4498 = vmul.f32 %v4448, 0.5
        %v4499 = vmul.f32 %v4455, 0.5
        %v4500 = vmul.f32 %v4462, 0.5
        %v4501 = vmul.f32 %v4469, 0.5
        %v4502 = vmul.f32 %v4476, 0.5
        %v4503 = vmul.f32 %v4483, 0.5
        %v4504 = vmul.f32 %v4490, 0.5
        %v4505 = vmul.f32 %v4497, 0.5
        %v4514 = vsel %vm2415, %v4499, %v4498
        %v4515 = vsel %vm2417, %v4500, %v4514
        %v4516 = vsel %vm2419, %v4501, %v4515
        %v4517 = vsel %vm2421, %v4502, %v4516
        %v4518 = vsel %vm2423, %v4503, %v4517
        %v4519 = vsel %vm2425, %v4504, %v4518
        %v4520 = vsel %vm2427, %v4505, %v4519
        %s4522 = scalar_lea.vmem %s221, 56 [#allocation4]
        %4523 = vst.msk [vmem:[%s4522] sm:$0xff] %vm2096, %v4520
        %s4524 = sand.u32 %s99, 1
        %s4525 = scalar_lea.sflag [#allocation5], %s4524
        %s4526 = sand.u32 %s99, 1
        %s4527 = smul.addr %s4526, 64
        %s4528 = scalar_lea.vmem [#allocation4], %s4527
        %s4529 = sand.u32 %s23, 1
        %s4530 = scalar_lea.sflag [#allocation7], %s4529
        %s4531 = sand.u32 %s125, 1
        %s4532 = scalar_lea.vmem [#allocation6], %s4531
        %s4533 = sand.u32 %s23, 1
        %s4534 = scalar_lea.sflag [#allocation7], %s4533
        %s4535 = sand.u32 %s151, 1
        %s4536 = scalar_lea.vmem [#allocation8], %s4535
        // Predicated region
        $region33: #{tpu_custom_call.1} parent=31 // pred_check
          %p4537 = pneg %p109
        $region34: #{tpu_custom_call.1} parent=31 // pred_check_branch
          %4539 = sbr.rel (%p4537) target = $region36
        $region35: #{tpu_custom_call.1} parent=31 // pred_region
          %4541 = vsyncadd %s4525, 0
          %s4542 = smul.addr %s23, 8
          %s4543 = smul.addr %s4542, 8
          %s4544 = scalar_lea.hbm %s3, %s4543
          %s4545 = sshll.u32 %s4528, 4
          %s4546 = int_to_ptr.vmem [resolvable:$true] %s4545
          %s4547 = sshll.u32 %s4544, 4
          %s4548 = int_to_ptr.hbm [resolvable:$true] %s4547
          %4553 = dma.vmem_to_hbm [thread:$0]  %s4546, 1024, %s4548, %s4525, 128, 128, 8
        $region36: #{tpu_custom_call.1} parent=31 // pred_fallthru
          _
        // Predicated region
        $region37: #{tpu_custom_call.1} parent=31 // pred_check
          %p4554 = pneg %p135
        $region38: #{tpu_custom_call.1} parent=31 // pred_check_branch
          %4556 = sbr.rel (%p4554) target = $region40
        $region39: #{tpu_custom_call.1} parent=31 // pred_region
          %4558 = vsyncadd %s4530, 0
          %s4559 = scalar_lea.hbm %s4, %s23
          %s4561 = sshll.u32 %s4532, 4
          %s4562 = int_to_ptr.vmem [resolvable:$true] %s4561
          %s4563 = sshll.u32 %s4559, 4
          %s4564 = int_to_ptr.hbm [resolvable:$true] %s4563
          %4566 = dma.vmem_to_hbm [thread:$0]  %s4562, 16, %s4564, %s4530
        $region40: #{tpu_custom_call.1} parent=31 // pred_fallthru
          _
        // Predicated region
        $region41: #{tpu_custom_call.1} parent=31 // pred_check
          %p4567 = pneg %p161
        $region42: #{tpu_custom_call.1} parent=31 // pred_check_branch
          %4569 = sbr.rel (%p4567) target = $region44
        $region43: #{tpu_custom_call.1} parent=31 // pred_region
          %4571 = vsyncadd %s4534, 0
          %s4572 = scalar_lea.hbm %s5, %s23
          %s4574 = sshll.u32 %s4536, 4
          %s4575 = int_to_ptr.vmem [resolvable:$true] %s4574
          %s4576 = sshll.u32 %s4572, 4
          %s4577 = int_to_ptr.hbm [resolvable:$true] %s4576
          %4579 = dma.vmem_to_hbm [thread:$0]  %s4575, 16, %s4577, %s4534
        $region44: #{tpu_custom_call.1} parent=31 // pred_fallthru
          _
      $region32: #{tpu_custom_call.1} parent=5 // pred_fallthru
        _
      %p4580 = scmp.le.s32.totalorder 2, %s18
      // Predicated region
      $region45: #{tpu_custom_call.1} parent=5 // pred_check
        %p4581 = pneg %p4580
      $region46: #{tpu_custom_call.1} parent=5 // pred_check_branch
        %4583 = sbr.rel (%p4581) target = $region48
      $region47: #{tpu_custom_call.1} parent=5 // pred_region
        %s4584 = ssub.s32 %s18, 2
        // Predicated region
        $region49: #{tpu_custom_call.1} parent=47 // pred_check
          %p4585 = pneg %p115
        $region50: #{tpu_custom_call.1} parent=47 // pred_check_branch
          %4587 = sbr.rel (%p4585) target = $region52
        $region51: #{tpu_custom_call.1} parent=47 // pred_region
          %s4588 = sand.u32 %s100, 1
          %s4589 = scalar_lea.sflag [#allocation5], %s4588
          %s4590 = sand.u32 %s100, 1
          %s4591 = smul.addr %s4590, 64
          %s4592 = scalar_lea.vmem [#allocation4], %s4591
          %4594 = dma.done %s4589, 1024
        $region52: #{tpu_custom_call.1} parent=47 // pred_fallthru
          _
        // Predicated region
        $region53: #{tpu_custom_call.1} parent=47 // pred_check
          %p4595 = pneg %p141
        $region54: #{tpu_custom_call.1} parent=47 // pred_check_branch
          %4597 = sbr.rel (%p4595) target = $region56
        $region55: #{tpu_custom_call.1} parent=47 // pred_region
          %s4598 = sand.u32 %s24, 1
          %s4599 = scalar_lea.sflag [#allocation7], %s4598
          %s4600 = sand.u32 %s126, 1
          %s4601 = scalar_lea.vmem [#allocation6], %s4600
          %4603 = dma.done %s4599, 16
        $region56: #{tpu_custom_call.1} parent=47 // pred_fallthru
          _
        // Predicated region
        $region57: #{tpu_custom_call.1} parent=47 // pred_check
          %p4604 = pneg %p167
        $region58: #{tpu_custom_call.1} parent=47 // pred_check_branch
          %4606 = sbr.rel (%p4604) target = $region60
        $region59: #{tpu_custom_call.1} parent=47 // pred_region
          %s4607 = sand.u32 %s24, 1
          %s4608 = scalar_lea.sflag [#allocation7], %s4607
          %s4609 = sand.u32 %s152, 1
          %s4610 = scalar_lea.vmem [#allocation8], %s4609
          %4612 = dma.done %s4608, 16
        $region60: #{tpu_custom_call.1} parent=47 // pred_fallthru
          _
      $region48: #{tpu_custom_call.1} parent=5 // pred_fallthru
        _
    $region6: #{tpu_custom_call.1} parent=1 // loop_footer
      %s22 = sadd.s32 1, %s18
    $region7: #{tpu_custom_call.1} parent=1 // loop_footer_branch
      %17 = sbr.rel target = $region3
    $region8: #{tpu_custom_call.1} parent=1 // loop_exit
      _
    %4613 = vsyncpa [#allocation5], 1
    %s4614 = scalar_lea.sflag [#allocation5], 1
    %4615 = vsyncpa %s4614, 1
    %4616 = vsyncpa [#allocation7], 1
    %s4617 = scalar_lea.sflag [#allocation7], 1
    %4618 = vsyncpa %s4617, 1

</llo_original>
